<compile_context>
chip_gen: v5e
topology: v5e:2x2
jax: 0.10.0
libtpu: 0.0.40
codegen_flags: <defaults>
</compile_context>

<pallas_src>
import jax
import jax.numpy as jnp
from jax import lax
from jax.experimental import pallas as pl
from jax.experimental.pallas import tpu as pltpu

IN_FEATURES = 6000
H1, H2, H3, OUT = 512, 128, 128, 3
TK = 3072                                            # layer-1 K tile (2 steps)
K_PAD = ((IN_FEATURES + TK - 1) // TK) * TK          # 6144
OUT_PAD = 128                                        # lane-dense output width


def mlp_kernel(x_ref, w1_ref, b1_ref, w2_ref, b2_ref,
               w3_ref, b3_ref, w4_ref, b4_ref, o_ref, xb_ref, acc_ref):
    """Fused MLP; grid axis 0 walks the layer-1 contraction dim (reduction)."""
    k = pl.program_id(0)

    @pl.when(k == 0)
    def _():
        acc_ref[...] = jnp.zeros_like(acc_ref)
        # Build the zero-padded bf16 copy of x once.  Zero the whole scratch
        # first so the pad columns (6000:6144) are exactly 0 (never garbage),
        # then fill the valid columns with the cast input.
        xb_ref[...] = jnp.zeros_like(xb_ref)
        xb_ref[:, :IN_FEATURES] = x_ref[...].astype(jnp.bfloat16)

    # Layer-1 partial product: (B, TK) bf16 @ (TK, 512) bf16 -> f32 accumulate.
    off = pl.multiple_of(k * TK, TK)
    acc_ref[...] += jnp.dot(xb_ref[:, pl.ds(off, TK)], w1_ref[...],
                            preferred_element_type=jnp.float32)

    @pl.when(k == pl.num_programs(0) - 1)
    def _():
        h = jnp.maximum(acc_ref[...] + b1_ref[...], 0.0)
        h = jnp.maximum(
            jnp.dot(h.astype(jnp.bfloat16), w2_ref[...],
                    preferred_element_type=jnp.float32) + b2_ref[...], 0.0)
        h = jnp.maximum(
            jnp.dot(h.astype(jnp.bfloat16), w3_ref[...],
                    preferred_element_type=jnp.float32) + b3_ref[...], 0.0)
        o_ref[...] = (jnp.dot(h.astype(jnp.bfloat16), w4_ref[...],
                              preferred_element_type=jnp.float32)
                      + b4_ref[...])


def prepare_params(params):
    """One-time weight preprocessing (amortized across calls):
    zero-pad W1's K dim to K_PAD, pad W4/b4 to 128 lanes, cast weights bf16."""
    (w1, b1), (w2, b2), (w3, b3), (w4, b4) = params
    w1_p = jnp.pad(w1, ((0, K_PAD - w1.shape[0]), (0, 0))).astype(jnp.bfloat16)
    w4_p = jnp.pad(w4, ((0, 0), (0, OUT_PAD - w4.shape[1]))).astype(jnp.bfloat16)
    b4_p = jnp.pad(b4, ((0, 0), (0, OUT_PAD - b4.shape[1])))
    return (w1_p, b1,
            w2.astype(jnp.bfloat16), b2,
            w3.astype(jnp.bfloat16), b3,
            w4_p, b4_p)


@jax.jit
def network_forward(x, prepped):
    w1, b1, w2, b2, w3, b3, w4, b4 = prepped
    B, K = x.shape
    assert K == IN_FEATURES

    n_k = K_PAD // TK
    out = pl.pallas_call(
        mlp_kernel,
        out_shape=jax.ShapeDtypeStruct((B, OUT_PAD), jnp.float32),
        grid_spec=pltpu.PrefetchScalarGridSpec(
            num_scalar_prefetch=0,
            grid=(n_k,),
            in_specs=[
                pl.BlockSpec((B, IN_FEATURES), lambda k: (0, 0)),  # x f32 (resident)
                pl.BlockSpec((TK, H1), lambda k: (k, 0)),          # W1 tile (bf16)
                pl.BlockSpec((1, H1), lambda k: (0, 0)),           # b1  (resident)
                pl.BlockSpec((H1, H2), lambda k: (0, 0)),          # W2  (bf16)
                pl.BlockSpec((1, H2), lambda k: (0, 0)),           # b2
                pl.BlockSpec((H2, H3), lambda k: (0, 0)),          # W3  (bf16)
                pl.BlockSpec((1, H3), lambda k: (0, 0)),           # b3
                pl.BlockSpec((H3, OUT_PAD), lambda k: (0, 0)),     # W4 (bf16, padded)
                pl.BlockSpec((1, OUT_PAD), lambda k: (0, 0)),      # b4 (padded)
            ],
            out_specs=pl.BlockSpec((B, OUT_PAD), lambda k: (0, 0)),
            scratch_shapes=[
                pltpu.VMEM((B, K_PAD), jnp.bfloat16),  # zero-padded bf16 x
                pltpu.VMEM((B, H1), jnp.float32),      # layer-1 accumulator
            ],
        ),
        compiler_params=pltpu.CompilerParams(
            dimension_semantics=("arbitrary",),   # K is a reduction axis
            vmem_limit_bytes=32 << 20,            # ~6.6 MiB actual footprint
        ),
    )(x, w1, b1, w2, b2, w3, b3, w4, b4)
    return out[:, :OUT]


def init_linear(key, fan_in, fan_out):
    """Mimics nn.Linear init: U(-1/sqrt(fan_in), 1/sqrt(fan_in)).
    Weight stored as (fan_in, fan_out) (transposed vs. PyTorch)."""
    k_w, k_b = jax.random.split(key)
    bound = 1.0 / jnp.sqrt(jnp.float32(fan_in))
    w = jax.random.uniform(k_w, (fan_in, fan_out), jnp.float32, -bound, bound)
    b = jax.random.uniform(k_b, (1, fan_out), jnp.float32, -bound, bound)
    return w, b


def reference_forward(x, params):
    """Pure-JAX reference with the same bf16 operand rounding / f32
    accumulation as the kernel."""
    (w1, b1), (w2, b2), (w3, b3), (w4, b4) = params
    hp = lax.Precision.HIGHEST
    bf = lambda a: a.astype(jnp.bfloat16).astype(jnp.float32)
    h = jnp.maximum(jnp.dot(bf(x), bf(w1), precision=hp) + b1, 0.0)
    h = jnp.maximum(jnp.dot(bf(h), bf(w2), precision=hp) + b2, 0.0)
    h = jnp.maximum(jnp.dot(bf(h), bf(w3), precision=hp) + b3, 0.0)
    return jnp.dot(bf(h), bf(w4), precision=hp) + b4


if __name__ == "__main__":
    key = jax.random.PRNGKey(0)
    k_x, k1, k2, k3, k4 = jax.random.split(key, 5)

    B = 8  # small batch (multiple of 8 keeps sublane tiles clean)
    x = jax.random.normal(k_x, (B, IN_FEATURES), jnp.float32)
    params = (
        init_linear(k1, IN_FEATURES, H1),
        init_linear(k2, H1, H2),
        init_linear(k3, H2, H3),
        init_linear(k4, H3, OUT),
    )

    prepped = prepare_params(params)
    out = jax.block_until_ready(network_forward(x, prepped))

    ref = reference_forward(x, params)
    assert out.shape == (B, OUT)
    max_err = float(jnp.max(jnp.abs(out - ref)))
    assert jnp.allclose(out, ref, atol=1e-2, rtol=1e-2), (
        f"mismatch vs. JAX reference, max abs err {max_err}")

    print("KERNEL_OK")
</pallas_src>

<mosaic_0001>
module attributes {stable_mosaic.version = 11 : i64} {
  func.func @mlp_kernel(%arg0: i32, %arg1: memref<8x6000xf32, #tpu.memory_space<vmem>>, %arg2: memref<3072x512xbf16, #tpu.memory_space<vmem>>, %arg3: memref<1x512xf32, #tpu.memory_space<vmem>>, %arg4: memref<512x128xbf16, #tpu.memory_space<vmem>>, %arg5: memref<1x128xf32, #tpu.memory_space<vmem>>, %arg6: memref<128x128xbf16, #tpu.memory_space<vmem>>, %arg7: memref<1x128xf32, #tpu.memory_space<vmem>>, %arg8: memref<128x128xbf16, #tpu.memory_space<vmem>>, %arg9: memref<1x128xf32, #tpu.memory_space<vmem>>, %arg10: memref<8x128xf32, #tpu.memory_space<vmem>>, %arg11: memref<8x6144xbf16, #tpu.memory_space<vmem>>, %arg12: memref<8x512xf32, #tpu.memory_space<vmem>>) attributes {dimension_semantics = [#tpu.dimension_semantics<arbitrary>], iteration_bounds = array<i64: 2>, scalar_prefetch = 0 : i64, scratch_operands = 2 : i64, tpu.core_type = #tpu.core_type<tc>, window_params = [{pipeline_mode = #tpu.pipeline_mode<synchronous>, transform_indices = @transform_0, window_bounds = array<i64: 8, 6000>}, {transform_indices = @transform_1, window_bounds = array<i64: 3072, 512>}, {pipeline_mode = #tpu.pipeline_mode<synchronous>, transform_indices = @transform_2, window_bounds = array<i64: 1, 512>}, {pipeline_mode = #tpu.pipeline_mode<synchronous>, transform_indices = @transform_3, window_bounds = array<i64: 512, 128>}, {pipeline_mode = #tpu.pipeline_mode<synchronous>, transform_indices = @transform_4, window_bounds = array<i64: 1, 128>}, {pipeline_mode = #tpu.pipeline_mode<synchronous>, transform_indices = @transform_5, window_bounds = array<i64: 128, 128>}, {pipeline_mode = #tpu.pipeline_mode<synchronous>, transform_indices = @transform_6, window_bounds = array<i64: 1, 128>}, {pipeline_mode = #tpu.pipeline_mode<synchronous>, transform_indices = @transform_7, window_bounds = array<i64: 128, 128>}, {pipeline_mode = #tpu.pipeline_mode<synchronous>, transform_indices = @transform_8, window_bounds = array<i64: 1, 128>}, {pipeline_mode = #tpu.pipeline_mode<synchronous>, transform_indices = @transform_9, window_bounds = array<i64: 8, 128>}]} {
    %c0_i32 = arith.constant 0 : i32
    %0 = arith.cmpi eq, %arg0, %c0_i32 : i32
    %1 = arith.extui %0 : i1 to i32
    %c0_i32_0 = arith.constant 0 : i32
    %2 = arith.cmpi ne, %1, %c0_i32_0 : i32
    scf.if %2 {
      %cst_8 = arith.constant 0.000000e+00 : f32
      %15 = vector.broadcast %cst_8 : f32 to vector<8x512xf32>
      %c0_9 = arith.constant 0 : index
      %c0_10 = arith.constant 0 : index
      %16 = vector.load %arg12[%c0_9, %c0_10] : memref<8x512xf32, #tpu.memory_space<vmem>>, vector<8x512xf32>
      tpu.vector_store %arg12[%c0_9, %c0_10], %15 {strides = array<i32>} : memref<8x512xf32, #tpu.memory_space<vmem>>, vector<8x512xf32>,
      %cst_11 = arith.constant 0.000000e+00 : bf16
      %17 = vector.broadcast %cst_11 : bf16 to vector<8x6144xbf16>
      %c0_12 = arith.constant 0 : index
      %c0_13 = arith.constant 0 : index
      %18 = vector.load %arg11[%c0_12, %c0_13] : memref<8x6144xbf16, #tpu.memory_space<vmem>>, vector<8x6144xbf16>
      tpu.vector_store %arg11[%c0_12, %c0_13], %17 {strides = array<i32>} : memref<8x6144xbf16, #tpu.memory_space<vmem>>, vector<8x6144xbf16>,
      %c0_14 = arith.constant 0 : index
      %c0_15 = arith.constant 0 : index
      %19 = vector.load %arg1[%c0_14, %c0_15] : memref<8x6000xf32, #tpu.memory_space<vmem>>, vector<8x6000xf32>
      %20 = arith.truncf %19 : vector<8x6000xf32> to vector<8x6000xbf16>
      %c0_16 = arith.constant 0 : index
      %c0_17 = arith.constant 0 : index
      %21 = vector.load %arg11[%c0_16, %c0_17] : memref<8x6144xbf16, #tpu.memory_space<vmem>>, vector<8x6000xbf16>
      tpu.vector_store %arg11[%c0_16, %c0_17], %20 {strides = array<i32>} : memref<8x6144xbf16, #tpu.memory_space<vmem>>, vector<8x6000xbf16>,
    } else {
    }
    %c3072_i32 = arith.constant 3072 : i32
    %3 = arith.muli %arg0, %c3072_i32 : i32
    %4 = tpu.assume_multiple %3, 3072 : i32
    %c0 = arith.constant 0 : index
    %c0_1 = arith.constant 0 : index
    %5 = vector.load %arg12[%c0, %c0_1] : memref<8x512xf32, #tpu.memory_space<vmem>>, vector<8x512xf32>
    %c0_2 = arith.constant 0 : index
    %6 = arith.index_cast %4 : i32 to index
    %7 = vector.load %arg11[%c0_2, %6] : memref<8x6144xbf16, #tpu.memory_space<vmem>>, vector<8x3072xbf16>
    %c0_3 = arith.constant 0 : index
    %c0_4 = arith.constant 0 : index
    %8 = vector.load %arg2[%c0_3, %c0_4] : memref<3072x512xbf16, #tpu.memory_space<vmem>>, vector<3072x512xbf16>
    %cst = arith.constant dense<0.000000e+00> : vector<8x512xf32>
    %9 = tpu.matmul %7, %8, %cst {dimension_numbers = #tpu.dot_dimension_numbers<[1], [0], [0], [1], [0, 0, 1, 1], [], []>} : vector<8x3072xbf16>, vector<3072x512xbf16>, vector<8x512xf32> -> vector<8x512xf32>
    %10 = arith.addf %5, %9 : vector<8x512xf32>
    %c0_5 = arith.constant 0 : index
    %c0_6 = arith.constant 0 : index
    %11 = vector.load %arg12[%c0_5, %c0_6] : memref<8x512xf32, #tpu.memory_space<vmem>>, vector<8x512xf32>
    tpu.vector_store %arg12[%c0_5, %c0_6], %10 {strides = array<i32>} : memref<8x512xf32, #tpu.memory_space<vmem>>, vector<8x512xf32>,
    %c1_i32 = arith.constant 1 : i32
    %12 = arith.cmpi eq, %arg0, %c1_i32 : i32
    %13 = arith.extui %12 : i1 to i32
    %c0_i32_7 = arith.constant 0 : i32
    %14 = arith.cmpi ne, %13, %c0_i32_7 : i32
    scf.if %14 {
      %c0_8 = arith.constant 0 : index
      %c0_9 = arith.constant 0 : index
      %15 = vector.load %arg12[%c0_8, %c0_9] : memref<8x512xf32, #tpu.memory_space<vmem>>, vector<8x512xf32>
      %c0_10 = arith.constant 0 : index
      %c0_11 = arith.constant 0 : index
      %16 = vector.load %arg3[%c0_10, %c0_11] : memref<1x512xf32, #tpu.memory_space<vmem>>, vector<1x512xf32>
      %17 = vector.broadcast %16 : vector<1x512xf32> to vector<8x512xf32>
      %18 = arith.addf %15, %17 : vector<8x512xf32>
      %cst_12 = arith.constant 0.000000e+00 : f32
      %19 = vector.broadcast %cst_12 : f32 to vector<8x512xf32>
      %20 = arith.maximumf %18, %19 : vector<8x512xf32>
      %21 = arith.truncf %20 : vector<8x512xf32> to vector<8x512xbf16>
      %c0_13 = arith.constant 0 : index
      %c0_14 = arith.constant 0 : index
      %22 = vector.load %arg4[%c0_13, %c0_14] : memref<512x128xbf16, #tpu.memory_space<vmem>>, vector<512x128xbf16>
      %cst_15 = arith.constant dense<0.000000e+00> : vector<8x128xf32>
      %23 = tpu.matmul %21, %22, %cst_15 {dimension_numbers = #tpu.dot_dimension_numbers<[1], [0], [0], [1], [0, 0, 1, 1], [], []>} : vector<8x512xbf16>, vector<512x128xbf16>, vector<8x128xf32> -> vector<8x128xf32>
      %c0_16 = arith.constant 0 : index
      %c0_17 = arith.constant 0 : index
      %24 = vector.load %arg5[%c0_16, %c0_17] : memref<1x128xf32, #tpu.memory_space<vmem>>, vector<1x128xf32>
      %25 = vector.broadcast %24 : vector<1x128xf32> to vector<8x128xf32>
      %26 = arith.addf %23, %25 : vector<8x128xf32>
      %cst_18 = arith.constant 0.000000e+00 : f32
      %27 = vector.broadcast %cst_18 : f32 to vector<8x128xf32>
      %28 = arith.maximumf %26, %27 : vector<8x128xf32>
      %29 = arith.truncf %28 : vector<8x128xf32> to vector<8x128xbf16>
      %c0_19 = arith.constant 0 : index
      %c0_20 = arith.constant 0 : index
      %30 = vector.load %arg6[%c0_19, %c0_20] : memref<128x128xbf16, #tpu.memory_space<vmem>>, vector<128x128xbf16>
      %cst_21 = arith.constant dense<0.000000e+00> : vector<8x128xf32>
      %31 = tpu.matmul %29, %30, %cst_21 {dimension_numbers = #tpu.dot_dimension_numbers<[1], [0], [0], [1], [0, 0, 1, 1], [], []>} : vector<8x128xbf16>, vector<128x128xbf16>, vector<8x128xf32> -> vector<8x128xf32>
      %c0_22 = arith.constant 0 : index
      %c0_23 = arith.constant 0 : index
      %32 = vector.load %arg7[%c0_22, %c0_23] : memref<1x128xf32, #tpu.memory_space<vmem>>, vector<1x128xf32>
      %33 = vector.broadcast %32 : vector<1x128xf32> to vector<8x128xf32>
      %34 = arith.addf %31, %33 : vector<8x128xf32>
      %cst_24 = arith.constant 0.000000e+00 : f32
      %35 = vector.broadcast %cst_24 : f32 to vector<8x128xf32>
      %36 = arith.maximumf %34, %35 : vector<8x128xf32>
      %37 = arith.truncf %36 : vector<8x128xf32> to vector<8x128xbf16>
      %c0_25 = arith.constant 0 : index
      %c0_26 = arith.constant 0 : index
      %38 = vector.load %arg8[%c0_25, %c0_26] : memref<128x128xbf16, #tpu.memory_space<vmem>>, vector<128x128xbf16>
      %cst_27 = arith.constant dense<0.000000e+00> : vector<8x128xf32>
      %39 = tpu.matmul %37, %38, %cst_27 {dimension_numbers = #tpu.dot_dimension_numbers<[1], [0], [0], [1], [0, 0, 1, 1], [], []>} : vector<8x128xbf16>, vector<128x128xbf16>, vector<8x128xf32> -> vector<8x128xf32>
      %c0_28 = arith.constant 0 : index
      %c0_29 = arith.constant 0 : index
      %40 = vector.load %arg9[%c0_28, %c0_29] : memref<1x128xf32, #tpu.memory_space<vmem>>, vector<1x128xf32>
      %41 = vector.broadcast %40 : vector<1x128xf32> to vector<8x128xf32>
      %42 = arith.addf %39, %41 : vector<8x128xf32>
      %c0_30 = arith.constant 0 : index
      %c0_31 = arith.constant 0 : index
      %43 = vector.load %arg10[%c0_30, %c0_31] : memref<8x128xf32, #tpu.memory_space<vmem>>, vector<8x128xf32>
      tpu.vector_store %arg10[%c0_30, %c0_31], %42 {strides = array<i32>} : memref<8x128xf32, #tpu.memory_space<vmem>>, vector<8x128xf32>,
    } else {
    }
    return
  }
  func.func @transform_0(%arg0: i32) -> (i32, i32) {
    %c0_i32 = arith.constant 0 : i32
    %c0_i32_0 = arith.constant 0 : i32
    %c0_i32_1 = arith.constant 0 : i32
    return %c0_i32, %c0_i32_0 : i32, i32
  }
  func.func @transform_1(%arg0: i32) -> (i32, i32) {
    %c0_i32 = arith.constant 0 : i32
    %c0_i32_0 = arith.constant 0 : i32
    return %arg0, %c0_i32 : i32, i32
  }
  func.func @transform_2(%arg0: i32) -> (i32, i32) {
    %c0_i32 = arith.constant 0 : i32
    %c0_i32_0 = arith.constant 0 : i32
    %c0_i32_1 = arith.constant 0 : i32
    return %c0_i32, %c0_i32_0 : i32, i32
  }
  func.func @transform_3(%arg0: i32) -> (i32, i32) {
    %c0_i32 = arith.constant 0 : i32
    %c0_i32_0 = arith.constant 0 : i32
    %c0_i32_1 = arith.constant 0 : i32
    return %c0_i32, %c0_i32_0 : i32, i32
  }
  func.func @transform_4(%arg0: i32) -> (i32, i32) {
    %c0_i32 = arith.constant 0 : i32
    %c0_i32_0 = arith.constant 0 : i32
    %c0_i32_1 = arith.constant 0 : i32
    return %c0_i32, %c0_i32_0 : i32, i32
  }
  func.func @transform_5(%arg0: i32) -> (i32, i32) {
    %c0_i32 = arith.constant 0 : i32
    %c0_i32_0 = arith.constant 0 : i32
    %c0_i32_1 = arith.constant 0 : i32
    return %c0_i32, %c0_i32_0 : i32, i32
  }
  func.func @transform_6(%arg0: i32) -> (i32, i32) {
    %c0_i32 = arith.constant 0 : i32
    %c0_i32_0 = arith.constant 0 : i32
    %c0_i32_1 = arith.constant 0 : i32
    return %c0_i32, %c0_i32_0 : i32, i32
  }
  func.func @transform_7(%arg0: i32) -> (i32, i32) {
    %c0_i32 = arith.constant 0 : i32
    %c0_i32_0 = arith.constant 0 : i32
    %c0_i32_1 = arith.constant 0 : i32
    return %c0_i32, %c0_i32_0 : i32, i32
  }
  func.func @transform_8(%arg0: i32) -> (i32, i32) {
    %c0_i32 = arith.constant 0 : i32
    %c0_i32_0 = arith.constant 0 : i32
    %c0_i32_1 = arith.constant 0 : i32
    return %c0_i32, %c0_i32_0 : i32, i32
  }
  func.func @transform_9(%arg0: i32) -> (i32, i32) {
    %c0_i32 = arith.constant 0 : i32
    %c0_i32_0 = arith.constant 0 : i32
    %c0_i32_1 = arith.constant 0 : i32
    return %c0_i32, %c0_i32_0 : i32, i32
  }
}

</mosaic_0001>

<llo_original>
// kernel: network_forward.1
$region0: #{network_forward.1}
  #allocation0 [shape = 'u32[]', space=smem, size = 0x4, offset = 0x4, fixed_abs, tag = 'smem constant byte address 0x4 - core index']
  #allocation1 [shape = 'u32[72,128]{1,0:T(1,128)}', space=vmem, size = 0x9000, scoped, tag = 'internal scratch']
  #allocation2 [shape = 'bf16[8,6144]{1,0:T(8,128)(2,1)}', space=vmem, size = 0x18000, scoped, tag = 'scratch operand']
  #allocation3 [shape = 'f32[8,512]{1,0:T(8,128)}', space=vmem, size = 0x4000, scoped, tag = 'scratch operand']
  %s0 = inlined_call_operand.hbm [shape: f32[8,6000], index: 0, kind: input, shape index: {}]
  %s1 = inlined_call_operand.hbm [shape: bf16[6144,512], index: 1, kind: input, shape index: {}]
  %s2 = inlined_call_operand.hbm [shape: f32[1,512], index: 2, kind: input, shape index: {}]
  %s3 = inlined_call_operand.hbm [shape: bf16[512,128], index: 3, kind: input, shape index: {}]
  %s4 = inlined_call_operand.hbm [shape: f32[1,128], index: 4, kind: input, shape index: {}]
  %s5 = inlined_call_operand.hbm [shape: bf16[128,128], index: 5, kind: input, shape index: {}]
  %s6 = inlined_call_operand.hbm [shape: f32[1,128], index: 6, kind: input, shape index: {}]
  %s7 = inlined_call_operand.hbm [shape: bf16[128,128], index: 7, kind: input, shape index: {}]
  %s8 = inlined_call_operand.hbm [shape: f32[1,128], index: 8, kind: input, shape index: {}]
  %s9 = inlined_call_operand.vmem [shape: f32[8,128], index: 9, kind: output, shape index: {}]
  %s10 = sld [smem:[#allocation0]]
  $region113: #{network_forward.1} parent=0
    _
  %s12 = ssub.s32 1, %s10
  %s13 = scalar_select 0, %s12, %s10
  $region1: #{network_forward.1} parent=0
    #allocation4 [shape = 'u8[192512]{0}', space=vmem, size = 0x2f000, scoped, tag = 'input window, operand 0, single buffered']
    #allocation5 [shape = 's32[2]{0}', space=sflag, size = 0x8, scoped, tag = 'scoped memory for network_forward.1']
    #allocation6 [shape = 'u8[6291456]{0}', space=vmem, size = 0x600000, scoped, tag = 'input window, operand 1']
    #allocation7 [shape = 's32[2]{0}', space=sflag, size = 0x8, scoped, tag = 'scoped memory for network_forward.1']
    #allocation8 [shape = 'u8[2048]{0}', space=vmem, size = 0x800, scoped, tag = 'input window, operand 2, single buffered']
    #allocation9 [shape = 'u8[131072]{0}', space=vmem, size = 0x20000, scoped, tag = 'input window, operand 3, single buffered']
    #allocation10 [shape = 's32[1]{0}', space=sflag, size = 0x4, scoped, tag = 'scoped memory for network_forward.1']
    #allocation11 [shape = 'u8[512]{0}', space=vmem, size = 0x400, scoped, tag = 'input window, operand 4, single buffered']
    #allocation12 [shape = 'u8[32768]{0}', space=vmem, size = 0x8000, scoped, tag = 'input window, operand 5, single buffered']
    #allocation13 [shape = 's32[1]{0}', space=sflag, size = 0x4, scoped, tag = 'scoped memory for network_forward.1']
    #allocation14 [shape = 'u8[512]{0}', space=vmem, size = 0x400, scoped, tag = 'input window, operand 6, single buffered']
    #allocation15 [shape = 'u8[32768]{0}', space=vmem, size = 0x8000, scoped, tag = 'input window, operand 7, single buffered']
    #allocation16 [shape = 's32[1]{0}', space=sflag, size = 0x4, scoped, tag = 'scoped memory for network_forward.1']
    #allocation17 [shape = 'u8[512]{0}', space=vmem, size = 0x400, scoped, tag = 'input window, operand 8, single buffered']
    %14 = vsyncpa [#allocation5], 0
    %15 = vsyncpa [#allocation7], 0
    %s16 = scalar_lea.sflag [#allocation7], 1
    %17 = vsyncpa %s16, 0
    %18 = vsyncpa [#allocation10], 0
    %19 = vsyncpa [#allocation13], 0
    %20 = vsyncpa [#allocation16], 0
    loop: start=0, step=1, limit=4
    $region2: #{network_forward.1} parent=1 // loop_pre_header
      _
    $region3: #{network_forward.1} parent=1 // loop_header
      %s22 = sphi 0, %s26
      %p23 = scmp.ge.s32.totalorder %s22, 4
      %s30 = sphi 0, %s30
      %s32 = sphi 0, %s30
      %s33 = sphi 0, %s32
      %s47 = sphi 0, %s33
      %s53 = sphi 0, %s55
      %s56 = sphi 0, %s53
      %s57 = sphi 0, %s56
      %s73 = sphi 0, %s57
      %s77 = sphi 0, %s77
      %s79 = sphi 0, %s77
      %s80 = sphi 0, %s79
      %s94 = sphi 0, %s80
      %s98 = sphi 0, %s98
      %s100 = sphi 0, %s98
      %s101 = sphi 0, %s100
      %s115 = sphi 0, %s101
      %s119 = sphi 0, %s119
      %s121 = sphi 0, %s119
      %s122 = sphi 0, %s121
      %s136 = sphi 0, %s122
      %s140 = sphi 0, %s140
      %s142 = sphi 0, %s140
      %s143 = sphi 0, %s142
      %s157 = sphi 0, %s143
      %s161 = sphi 0, %s161
      %s163 = sphi 0, %s161
      %s164 = sphi 0, %s163
      %s178 = sphi 0, %s164
      %s182 = sphi 0, %s182
      %s184 = sphi 0, %s182
      %s185 = sphi 0, %s184
      %s199 = sphi 0, %s185
      %s203 = sphi 0, %s203
      %s205 = sphi 0, %s203
      %s206 = sphi 0, %s205
      %s220 = sphi 0, %s206
      %s224 = sphi 0, %s224
      %s226 = sphi 0, %s224
      %s227 = sphi 0, %s226
      %s241 = sphi 0, %s227
    $region4: #{network_forward.1} parent=1 // loop_header_branch
      %25 = sbr.rel (%p23) target = $region8
    $region5: #{network_forward.1} parent=1 // loop_body
      %s27 = ssub.s32 %s22, 1
      %s28 = ssub.s32 %s22, 2
      %s29 = sadd.s32 %s22, 1
      %s31 = sadd.s32 %s30, 1
      %p34 = scmp.eq.s32.totalorder %s22, 1
      %p35 = scmp.ne.s32.totalorder %s30, %s32
      %p36 = scmp.eq.s32.totalorder %s22, 0
      %p37 = por %p35, %p36
      %p38 = scmp.ne.s32.totalorder %s30, %s32
      %p39 = scmp.eq.s32.totalorder %s27, 1
      %p40 = por %p38, %p39
      %p41 = scmp.ne.s32.totalorder %s32, %s33
      %p42 = scmp.eq.s32.totalorder %s27, 0
      %p43 = por %p41, %p42
      %p44 = scmp.ne.s32.totalorder %s32, %s33
      %p45 = scmp.eq.s32.totalorder %s28, 1
      %p46 = por %p44, %p45
      %p48 = scmp.ne.s32.totalorder %s33, %s47
      %p49 = scmp.eq.s32.totalorder %s28, 0
      %p50 = por %p48, %p49
      %s51 = ssub.s32 %s22, %s29
      %p52 = scmp.eq.s32.totalorder %s51, 0
      %s54 = sadd.s32 %s53, 1
      %s55 = scalar_select %p52, %s53, %s54
      %p58 = pneg %p52
      %p59 = scmp.eq.s32.totalorder %s22, 1
      %p60 = por %p58, %p59
      %p61 = scmp.ne.s32.totalorder %s53, %s56
      %p62 = scmp.eq.s32.totalorder %s22, 0
      %p63 = por %p61, %p62
      %p64 = scmp.ne.s32.totalorder %s53, %s56
      %p65 = scmp.eq.s32.totalorder %s27, 1
      %p66 = por %p64, %p65
      %p67 = scmp.ne.s32.totalorder %s56, %s57
      %p68 = scmp.eq.s32.totalorder %s27, 0
      %p69 = por %p67, %p68
      %p70 = scmp.ne.s32.totalorder %s56, %s57
      %p71 = scmp.eq.s32.totalorder %s28, 1
      %p72 = por %p70, %p71
      %p74 = scmp.ne.s32.totalorder %s57, %s73
      %p75 = scmp.eq.s32.totalorder %s28, 0
      %p76 = por %p74, %p75
      %s78 = sadd.s32 %s77, 1
      %p81 = scmp.eq.s32.totalorder %s22, 1
      %p82 = scmp.ne.s32.totalorder %s77, %s79
      %p83 = scmp.eq.s32.totalorder %s22, 0
      %p84 = por %p82, %p83
      %p85 = scmp.ne.s32.totalorder %s77, %s79
      %p86 = scmp.eq.s32.totalorder %s27, 1
      %p87 = por %p85, %p86
      %p88 = scmp.ne.s32.totalorder %s79, %s80
      %p89 = scmp.eq.s32.totalorder %s27, 0
      %p90 = por %p88, %p89
      %p91 = scmp.ne.s32.totalorder %s79, %s80
      %p92 = scmp.eq.s32.totalorder %s28, 1
      %p93 = por %p91, %p92
      %p95 = scmp.ne.s32.totalorder %s80, %s94
      %p96 = scmp.eq.s32.totalorder %s28, 0
      %p97 = por %p95, %p96
      %s99 = sadd.s32 %s98, 1
      %p102 = scmp.eq.s32.totalorder %s22, 1
      %p103 = scmp.ne.s32.totalorder %s98, %s100
      %p104 = scmp.eq.s32.totalorder %s22, 0
      %p105 = por %p103, %p104
      %p106 = scmp.ne.s32.totalorder %s98, %s100
      %p107 = scmp.eq.s32.totalorder %s27, 1
      %p108 = por %p106, %p107
      %p109 = scmp.ne.s32.totalorder %s100, %s101
      %p110 = scmp.eq.s32.totalorder %s27, 0
      %p111 = por %p109, %p110
      %p112 = scmp.ne.s32.totalorder %s100, %s101
      %p113 = scmp.eq.s32.totalorder %s28, 1
      %p114 = por %p112, %p113
      %p116 = scmp.ne.s32.totalorder %s101, %s115
      %p117 = scmp.eq.s32.totalorder %s28, 0
      %p118 = por %p116, %p117
      %s120 = sadd.s32 %s119, 1
      %p123 = scmp.eq.s32.totalorder %s22, 1
      %p124 = scmp.ne.s32.totalorder %s119, %s121
      %p125 = scmp.eq.s32.totalorder %s22, 0
      %p126 = por %p124, %p125
      %p127 = scmp.ne.s32.totalorder %s119, %s121
      %p128 = scmp.eq.s32.totalorder %s27, 1
      %p129 = por %p127, %p128
      %p130 = scmp.ne.s32.totalorder %s121, %s122
      %p131 = scmp.eq.s32.totalorder %s27, 0
      %p132 = por %p130, %p131
      %p133 = scmp.ne.s32.totalorder %s121, %s122
      %p134 = scmp.eq.s32.totalorder %s28, 1
      %p135 = por %p133, %p134
      %p137 = scmp.ne.s32.totalorder %s122, %s136
      %p138 = scmp.eq.s32.totalorder %s28, 0
      %p139 = por %p137, %p138
      %s141 = sadd.s32 %s140, 1
      %p144 = scmp.eq.s32.totalorder %s22, 1
      %p145 = scmp.ne.s32.totalorder %s140, %s142
      %p146 = scmp.eq.s32.totalorder %s22, 0
      %p147 = por %p145, %p146
      %p148 = scmp.ne.s32.totalorder %s140, %s142
      %p149 = scmp.eq.s32.totalorder %s27, 1
      %p150 = por %p148, %p149
      %p151 = scmp.ne.s32.totalorder %s142, %s143
      %p152 = scmp.eq.s32.totalorder %s27, 0
      %p153 = por %p151, %p152
      %p154 = scmp.ne.s32.totalorder %s142, %s143
      %p155 = scmp.eq.s32.totalorder %s28, 1
      %p156 = por %p154, %p155
      %p158 = scmp.ne.s32.totalorder %s143, %s157
      %p159 = scmp.eq.s32.totalorder %s28, 0
      %p160 = por %p158, %p159
      %s162 = sadd.s32 %s161, 1
      %p165 = scmp.eq.s32.totalorder %s22, 1
      %p166 = scmp.ne.s32.totalorder %s161, %s163
      %p167 = scmp.eq.s32.totalorder %s22, 0
      %p168 = por %p166, %p167
      %p169 = scmp.ne.s32.totalorder %s161, %s163
      %p170 = scmp.eq.s32.totalorder %s27, 1
      %p171 = por %p169, %p170
      %p172 = scmp.ne.s32.totalorder %s163, %s164
      %p173 = scmp.eq.s32.totalorder %s27, 0
      %p174 = por %p172, %p173
      %p175 = scmp.ne.s32.totalorder %s163, %s164
      %p176 = scmp.eq.s32.totalorder %s28, 1
      %p177 = por %p175, %p176
      %p179 = scmp.ne.s32.totalorder %s164, %s178
      %p180 = scmp.eq.s32.totalorder %s28, 0
      %p181 = por %p179, %p180
      %s183 = sadd.s32 %s182, 1
      %p186 = scmp.eq.s32.totalorder %s22, 1
      %p187 = scmp.ne.s32.totalorder %s182, %s184
      %p188 = scmp.eq.s32.totalorder %s22, 0
      %p189 = por %p187, %p188
      %p190 = scmp.ne.s32.totalorder %s182, %s184
      %p191 = scmp.eq.s32.totalorder %s27, 1
      %p192 = por %p190, %p191
      %p193 = scmp.ne.s32.totalorder %s184, %s185
      %p194 = scmp.eq.s32.totalorder %s27, 0
      %p195 = por %p193, %p194
      %p196 = scmp.ne.s32.totalorder %s184, %s185
      %p197 = scmp.eq.s32.totalorder %s28, 1
      %p198 = por %p196, %p197
      %p200 = scmp.ne.s32.totalorder %s185, %s199
      %p201 = scmp.eq.s32.totalorder %s28, 0
      %p202 = por %p200, %p201
      %s204 = sadd.s32 %s203, 1
      %p207 = scmp.eq.s32.totalorder %s22, 1
      %p208 = scmp.ne.s32.totalorder %s203, %s205
      %p209 = scmp.eq.s32.totalorder %s22, 0
      %p210 = por %p208, %p209
      %p211 = scmp.ne.s32.totalorder %s203, %s205
      %p212 = scmp.eq.s32.totalorder %s27, 1
      %p213 = por %p211, %p212
      %p214 = scmp.ne.s32.totalorder %s205, %s206
      %p215 = scmp.eq.s32.totalorder %s27, 0
      %p216 = por %p214, %p215
      %p217 = scmp.ne.s32.totalorder %s205, %s206
      %p218 = scmp.eq.s32.totalorder %s28, 1
      %p219 = por %p217, %p218
      %p221 = scmp.ne.s32.totalorder %s206, %s220
      %p222 = scmp.eq.s32.totalorder %s28, 0
      %p223 = por %p221, %p222
      %s225 = sadd.s32 %s224, 1
      %p228 = scmp.eq.s32.totalorder %s22, 1
      %p229 = scmp.ne.s32.totalorder %s224, %s226
      %p230 = scmp.eq.s32.totalorder %s22, 0
      %p231 = por %p229, %p230
      %p232 = scmp.ne.s32.totalorder %s224, %s226
      %p233 = scmp.eq.s32.totalorder %s27, 1
      %p234 = por %p232, %p233
      %p235 = scmp.ne.s32.totalorder %s226, %s227
      %p236 = scmp.eq.s32.totalorder %s27, 0
      %p237 = por %p235, %p236
      %p238 = scmp.ne.s32.totalorder %s226, %s227
      %p239 = scmp.eq.s32.totalorder %s28, 1
      %p240 = por %p238, %p239
      %p242 = scmp.ne.s32.totalorder %s227, %s241
      %p243 = scmp.eq.s32.totalorder %s28, 0
      %p244 = por %p242, %p243
      %p245 = scmp.le.s32.totalorder 1, %s22
      %p246 = scmp.lt.s32.totalorder %s22, 3
      %p247 = pnand %p245, %p246
      %p248 = pneg %p247
      // Predicated region
      $region9: #{network_forward.1} parent=5 // pred_check
        _
      $region10: #{network_forward.1} parent=5 // pred_check_branch
        %250 = sbr.rel (%p247) target = $region12
      $region11: #{network_forward.1} parent=5 // pred_region
        %s251 = ssub.s32 %s22, 1
        // Predicated region
        $region13: #{network_forward.1} parent=11 // pred_check
          %p252 = pneg %p43
        $region14: #{network_forward.1} parent=11 // pred_check_branch
          %254 = sbr.rel (%p252) target = $region16
        $region15: #{network_forward.1} parent=11 // pred_region
          %256 = vsyncadd [#allocation5], 0
          %s258 = sshll.u32 %s0, 4
          %s259 = int_to_ptr.hbm [resolvable:$true] %s258
          %s260 = sshll.u32 [#allocation4], 4
          %s261 = int_to_ptr.vmem [resolvable:$true] %s260
          %263 = dma.hbm_to_vmem [thread:$0]  %s259, 6016, %s261, [#allocation5]
        $region16: #{network_forward.1} parent=11 // pred_fallthru
          _
        // Predicated region
        $region17: #{network_forward.1} parent=11 // pred_check
          %p264 = pneg %p90
        $region18: #{network_forward.1} parent=11 // pred_check_branch
          %266 = sbr.rel (%p264) target = $region20
        $region19: #{network_forward.1} parent=11 // pred_region
          %268 = vsyncadd [#allocation7], 0
          %s270 = sshll.u32 %s2, 4
          %s271 = int_to_ptr.hbm [resolvable:$true] %s270
          %s272 = sshll.u32 [#allocation8], 4
          %s273 = int_to_ptr.vmem [resolvable:$true] %s272
          %275 = dma.hbm_to_vmem [thread:$0]  %s271, 64, %s273, [#allocation7]
        $region20: #{network_forward.1} parent=11 // pred_fallthru
          _
        // Predicated region
        $region21: #{network_forward.1} parent=11 // pred_check
          %p276 = pneg %p111
        $region22: #{network_forward.1} parent=11 // pred_check_branch
          %278 = sbr.rel (%p276) target = $region24
        $region23: #{network_forward.1} parent=11 // pred_region
          %280 = vsyncadd [#allocation10], 0
          %s281 = sshll.u32 %s3, 4
          %s282 = int_to_ptr.hbm [resolvable:$true] %s281
          %s283 = sshll.u32 [#allocation9], 4
          %s284 = int_to_ptr.vmem [resolvable:$true] %s283
          %289 = dma.hbm_to_vmem [thread:$0]  %s282, 4096, %s284, [#allocation10], 64, 64, 4
        $region24: #{network_forward.1} parent=11 // pred_fallthru
          _
        // Predicated region
        $region25: #{network_forward.1} parent=11 // pred_check
          %p290 = pneg %p132
        $region26: #{network_forward.1} parent=11 // pred_check_branch
          %292 = sbr.rel (%p290) target = $region28
        $region27: #{network_forward.1} parent=11 // pred_region
          %294 = vsyncadd [#allocation10], 0
          %s296 = sshll.u32 %s4, 4
          %s297 = int_to_ptr.hbm [resolvable:$true] %s296
          %s298 = sshll.u32 [#allocation11], 4
          %s299 = int_to_ptr.vmem [resolvable:$true] %s298
          %301 = dma.hbm_to_vmem [thread:$0]  %s297, 16, %s299, [#allocation10]
        $region28: #{network_forward.1} parent=11 // pred_fallthru
          _
        // Predicated region
        $region29: #{network_forward.1} parent=11 // pred_check
          %p302 = pneg %p153
        $region30: #{network_forward.1} parent=11 // pred_check_branch
          %304 = sbr.rel (%p302) target = $region32
        $region31: #{network_forward.1} parent=11 // pred_region
          %306 = vsyncadd [#allocation13], 0
          %s307 = sshll.u32 %s5, 4
          %s308 = int_to_ptr.hbm [resolvable:$true] %s307
          %s309 = sshll.u32 [#allocation12], 4
          %s310 = int_to_ptr.vmem [resolvable:$true] %s309
          %315 = dma.hbm_to_vmem [thread:$0]  %s308, 1024, %s310, [#allocation13], 64, 64, 4
        $region32: #{network_forward.1} parent=11 // pred_fallthru
          _
        // Predicated region
        $region33: #{network_forward.1} parent=11 // pred_check
          %p316 = pneg %p174
        $region34: #{network_forward.1} parent=11 // pred_check_branch
          %318 = sbr.rel (%p316) target = $region36
        $region35: #{network_forward.1} parent=11 // pred_region
          %320 = vsyncadd [#allocation13], 0
          %s322 = sshll.u32 %s6, 4
          %s323 = int_to_ptr.hbm [resolvable:$true] %s322
          %s324 = sshll.u32 [#allocation14], 4
          %s325 = int_to_ptr.vmem [resolvable:$true] %s324
          %327 = dma.hbm_to_vmem [thread:$0]  %s323, 16, %s325, [#allocation13]
        $region36: #{network_forward.1} parent=11 // pred_fallthru
          _
        // Predicated region
        $region37: #{network_forward.1} parent=11 // pred_check
          %p328 = pneg %p195
        $region38: #{network_forward.1} parent=11 // pred_check_branch
          %330 = sbr.rel (%p328) target = $region40
        $region39: #{network_forward.1} parent=11 // pred_region
          %332 = vsyncadd [#allocation16], 0
          %s333 = sshll.u32 %s7, 4
          %s334 = int_to_ptr.hbm [resolvable:$true] %s333
          %s335 = sshll.u32 [#allocation15], 4
          %s336 = int_to_ptr.vmem [resolvable:$true] %s335
          %341 = dma.hbm_to_vmem [thread:$0]  %s334, 1024, %s336, [#allocation16], 64, 64, 4
        $region40: #{network_forward.1} parent=11 // pred_fallthru
          _
        // Predicated region
        $region41: #{network_forward.1} parent=11 // pred_check
          %p342 = pneg %p216
        $region42: #{network_forward.1} parent=11 // pred_check_branch
          %344 = sbr.rel (%p342) target = $region44
        $region43: #{network_forward.1} parent=11 // pred_region
          %346 = vsyncadd [#allocation16], 0
          %s348 = sshll.u32 %s8, 4
          %s349 = int_to_ptr.hbm [resolvable:$true] %s348
          %s350 = sshll.u32 [#allocation17], 4
          %s351 = int_to_ptr.vmem [resolvable:$true] %s350
          %353 = dma.hbm_to_vmem [thread:$0]  %s349, 16, %s351, [#allocation16]
        $region44: #{network_forward.1} parent=11 // pred_fallthru
          _
      $region12: #{network_forward.1} parent=5 // pred_fallthru
        _
      %p354 = scmp.lt.s32.totalorder %s22, 2
      // Predicated region
      $region45: #{network_forward.1} parent=5 // pred_check
        %p355 = pneg %p354
      $region46: #{network_forward.1} parent=5 // pred_check_branch
        %357 = sbr.rel (%p355) target = $region48
      $region47: #{network_forward.1} parent=5 // pred_region
        // Predicated region
        $region49: #{network_forward.1} parent=47 // pred_check
          %p358 = pneg %p63
        $region50: #{network_forward.1} parent=47 // pred_check_branch
          %360 = sbr.rel (%p358) target = $region52
        $region51: #{network_forward.1} parent=47 // pred_region
          %s361 = sand.u32 %s22, 1
          %s362 = scalar_lea.sflag [#allocation7], %s361
          %s363 = sand.u32 %s53, 1
          %s364 = smul.addr %s363, 6144
          %s365 = scalar_lea.vmem [#allocation6], %s364
          %s366 = smul.u32 384, %s22
          %368 = vsyncadd %s362, 0
          %s369 = smul.addr %s366, 4
          %s370 = smul.addr %s369, 4
          %s371 = scalar_lea.hbm %s1, %s370
          %s372 = sshll.u32 %s371, 4
          %s373 = int_to_ptr.hbm [resolvable:$true] %s372
          %s374 = sshll.u32 %s365, 4
          %s375 = int_to_ptr.vmem [resolvable:$true] %s374
          %380 = dma.hbm_to_vmem [thread:$0]  %s373, 98304, %s375, %s362, 256, 256, 16
        $region52: #{network_forward.1} parent=47 // pred_fallthru
          _
      $region48: #{network_forward.1} parent=5 // pred_fallthru
        _
      %p381 = scmp.le.s32.totalorder 1, %s22
      %p382 = scmp.lt.s32.totalorder %s22, 3
      %p383 = pnand %p381, %p382
      %p384 = pneg %p383
      // Predicated region
      $region53: #{network_forward.1} parent=5 // pred_check
        _
      $region54: #{network_forward.1} parent=5 // pred_check_branch
        %386 = sbr.rel (%p383) target = $region56
      $region55: #{network_forward.1} parent=5 // pred_region
        %s387 = ssub.s32 %s22, 1
        // Predicated region
        $region57: #{network_forward.1} parent=55 // pred_check
          %p388 = pneg %p43
        $region58: #{network_forward.1} parent=55 // pred_check_branch
          %390 = sbr.rel (%p388) target = $region60
        $region59: #{network_forward.1} parent=55 // pred_region
          %392 = dma.done [#allocation5], 6016
        $region60: #{network_forward.1} parent=55 // pred_fallthru
          _
        %s393 = sand.u32 %s27, 1
        %s394 = scalar_lea.sflag [#allocation7], %s393
        %s395 = sand.u32 %s56, 1
        %s396 = smul.addr %s395, 6144
        %s397 = scalar_lea.vmem [#allocation6], %s396
        // Predicated region
        $region61: #{network_forward.1} parent=55 // pred_check
          %p398 = pneg %p69
        $region62: #{network_forward.1} parent=55 // pred_check_branch
          %400 = sbr.rel (%p398) target = $region64
        $region63: #{network_forward.1} parent=55 // pred_region
          %402 = dma.done %s394, 98304
        $region64: #{network_forward.1} parent=55 // pred_fallthru
          _
        // Predicated region
        $region65: #{network_forward.1} parent=55 // pred_check
          %p403 = pneg %p90
        $region66: #{network_forward.1} parent=55 // pred_check_branch
          %405 = sbr.rel (%p403) target = $region68
        $region67: #{network_forward.1} parent=55 // pred_region
          %407 = dma.done [#allocation7], 64
        $region68: #{network_forward.1} parent=55 // pred_fallthru
          _
        // Predicated region
        $region69: #{network_forward.1} parent=55 // pred_check
          %p408 = pneg %p111
        $region70: #{network_forward.1} parent=55 // pred_check_branch
          %410 = sbr.rel (%p408) target = $region72
        $region71: #{network_forward.1} parent=55 // pred_region
          %412 = dma.done [#allocation10], 4096
        $region72: #{network_forward.1} parent=55 // pred_fallthru
          _
        // Predicated region
        $region73: #{network_forward.1} parent=55 // pred_check
          %p413 = pneg %p132
        $region74: #{network_forward.1} parent=55 // pred_check_branch
          %415 = sbr.rel (%p413) target = $region76
        $region75: #{network_forward.1} parent=55 // pred_region
          %417 = dma.done [#allocation10], 16
        $region76: #{network_forward.1} parent=55 // pred_fallthru
          _
        // Predicated region
        $region77: #{network_forward.1} parent=55 // pred_check
          %p418 = pneg %p153
        $region78: #{network_forward.1} parent=55 // pred_check_branch
          %420 = sbr.rel (%p418) target = $region80
        $region79: #{network_forward.1} parent=55 // pred_region
          %422 = dma.done [#allocation13], 1024
        $region80: #{network_forward.1} parent=55 // pred_fallthru
          _
        // Predicated region
        $region81: #{network_forward.1} parent=55 // pred_check
          %p423 = pneg %p174
        $region82: #{network_forward.1} parent=55 // pred_check_branch
          %425 = sbr.rel (%p423) target = $region84
        $region83: #{network_forward.1} parent=55 // pred_region
          %427 = dma.done [#allocation13], 16
        $region84: #{network_forward.1} parent=55 // pred_fallthru
          _
        // Predicated region
        $region85: #{network_forward.1} parent=55 // pred_check
          %p428 = pneg %p195
        $region86: #{network_forward.1} parent=55 // pred_check_branch
          %430 = sbr.rel (%p428) target = $region88
        $region87: #{network_forward.1} parent=55 // pred_region
          %432 = dma.done [#allocation16], 1024
        $region88: #{network_forward.1} parent=55 // pred_fallthru
          _
        // Predicated region
        $region89: #{network_forward.1} parent=55 // pred_check
          %p433 = pneg %p216
        $region90: #{network_forward.1} parent=55 // pred_check_branch
          %435 = sbr.rel (%p433) target = $region92
        $region91: #{network_forward.1} parent=55 // pred_region
          %437 = dma.done [#allocation16], 16
        $region92: #{network_forward.1} parent=55 // pred_fallthru
          _
        %p438 = pneg %p43
        %p439 = pneg %p40
        %s440 = sand.u32 %s27, 1
        %s441 = scalar_lea.sflag [#allocation7], %s440
        %s442 = sand.u32 %s56, 1
        %s443 = smul.addr %s442, 6144
        %s444 = scalar_lea.vmem [#allocation6], %s443
        %p445 = pneg %p69
        %p446 = pneg %p66
        %p447 = pneg %p90
        %p448 = pneg %p87
        %p449 = pneg %p111
        %p450 = pneg %p108
        %p451 = pneg %p132
        %p452 = pneg %p129
        %p453 = pneg %p153
        %p454 = pneg %p150
        %p455 = pneg %p174
        %p456 = pneg %p171
        %p457 = pneg %p195
        %p458 = pneg %p192
        %p459 = pneg %p216
        %p460 = pneg %p213
        %p461 = pneg %p237
        %p462 = pneg %p234
        %s463 = smul.u32 384, %s27
        %p465 = scmp.eq.s32.totalorder %s27, 0
        // Predicated region
        $region93: #{network_forward.1} parent=55 // pred_check
          %p466 = pneg %p465
        $region94: #{network_forward.1} parent=55 // pred_check_branch
          %468 = sbr.rel (%p466) target = $region96
        $region95: #{network_forward.1} parent=55 // pred_region
          %469 = vst [vmem:[#allocation3] sm:$0xff] 0.0
          %470 = vst [vmem:[#allocation3 + $0x8] sm:$0xff] 0.0
          %471 = vst [vmem:[#allocation3 + $0x10] sm:$0xff] 0.0
          %472 = vst [vmem:[#allocation3 + $0x18] sm:$0xff] 0.0
          %473 = vst [vmem:[#allocation2] sm:$0xff] 0
          %474 = vst [vmem:[#allocation2 + $0x8] sm:$0xff] 0
          %475 = vst [vmem:[#allocation2 + $0x10] sm:$0xff] 0
          %476 = vst [vmem:[#allocation2 + $0x18] sm:$0xff] 0
          %477 = vst [vmem:[#allocation2 + $0x20] sm:$0xff] 0
          %478 = vst [vmem:[#allocation2 + $0x28] sm:$0xff] 0
          %479 = vst [vmem:[#allocation2 + $0x30] sm:$0xff] 0
          %480 = vst [vmem:[#allocation2 + $0x38] sm:$0xff] 0
          %481 = vst [vmem:[#allocation2 + $0x40] sm:$0xff] 0
          %482 = vst [vmem:[#allocation2 + $0x48] sm:$0xff] 0
          %483 = vst [vmem:[#allocation2 + $0x50] sm:$0xff] 0
          %484 = vst [vmem:[#allocation2 + $0x58] sm:$0xff] 0
          %485 = vst [vmem:[#allocation2 + $0x60] sm:$0xff] 0
          %486 = vst [vmem:[#allocation2 + $0x68] sm:$0xff] 0
          %487 = vst [vmem:[#allocation2 + $0x70] sm:$0xff] 0
          %488 = vst [vmem:[#allocation2 + $0x78] sm:$0xff] 0
          %489 = vst [vmem:[#allocation2 + $0x80] sm:$0xff] 0
          %490 = vst [vmem:[#allocation2 + $0x88] sm:$0xff] 0
          %491 = vst [vmem:[#allocation2 + $0x90] sm:$0xff] 0
          %492 = vst [vmem:[#allocation2 + $0x98] sm:$0xff] 0
          %493 = vst [vmem:[#allocation2 + $0xa0] sm:$0xff] 0
          %494 = vst [vmem:[#allocation2 + $0xa8] sm:$0xff] 0
          %495 = vst [vmem:[#allocation2 + $0xb0] sm:$0xff] 0
          %496 = vst [vmem:[#allocation2 + $0xb8] sm:$0xff] 0
          %v497 = vld [vmem:[#allocation4] sm:$0xff]
          %v498 = vld [vmem:[#allocation4 + $0x8] sm:$0xff]
          %v499 = vld [vmem:[#allocation4 + $0x10] sm:$0xff]
          %v500 = vld [vmem:[#allocation4 + $0x18] sm:$0xff]
          %v501 = vld [vmem:[#allocation4 + $0x20] sm:$0xff]
          %v502 = vld [vmem:[#allocation4 + $0x28] sm:$0xff]
          %v503 = vld [vmem:[#allocation4 + $0x30] sm:$0xff]
          %v504 = vld [vmem:[#allocation4 + $0x38] sm:$0xff]
          %v505 = vld [vmem:[#allocation4 + $0x40] sm:$0xff]
          %v506 = vld [vmem:[#allocation4 + $0x48] sm:$0xff]
          %v507 = vld [vmem:[#allocation4 + $0x50] sm:$0xff]
          %v508 = vld [vmem:[#allocation4 + $0x58] sm:$0xff]
          %v509 = vld [vmem:[#allocation4 + $0x60] sm:$0xff]
          %v510 = vld [vmem:[#allocation4 + $0x68] sm:$0xff]
          %v511 = vld [vmem:[#allocation4 + $0x70] sm:$0xff]
          %v512 = vld [vmem:[#allocation4 + $0x78] sm:$0xff]
          %v513 = vld [vmem:[#allocation4 + $0x80] sm:$0xff]
          %v514 = vld [vmem:[#allocation4 + $0x88] sm:$0xff]
          %v515 = vld [vmem:[#allocation4 + $0x90] sm:$0xff]
          %v516 = vld [vmem:[#allocation4 + $0x98] sm:$0xff]
          %v517 = vld [vmem:[#allocation4 + $0xa0] sm:$0xff]
          %v518 = vld [vmem:[#allocation4 + $0xa8] sm:$0xff]
          %v519 = vld [vmem:[#allocation4 + $0xb0] sm:$0xff]
          %v520 = vld [vmem:[#allocation4 + $0xb8] sm:$0xff]
          %v521 = vld [vmem:[#allocation4 + $0xc0] sm:$0xff]
          %v522 = vld [vmem:[#allocation4 + $0xc8] sm:$0xff]
          %v523 = vld [vmem:[#allocation4 + $0xd0] sm:$0xff]
          %v524 = vld [vmem:[#allocation4 + $0xd8] sm:$0xff]
          %v525 = vld [vmem:[#allocation4 + $0xe0] sm:$0xff]
          %v526 = vld [vmem:[#allocation4 + $0xe8] sm:$0xff]
          %v527 = vld [vmem:[#allocation4 + $0xf0] sm:$0xff]
          %v528 = vld [vmem:[#allocation4 + $0xf8] sm:$0xff]
          %v529 = vld [vmem:[#allocation4 + $0x100] sm:$0xff]
          %v530 = vld [vmem:[#allocation4 + $0x108] sm:$0xff]
          %v531 = vld [vmem:[#allocation4 + $0x110] sm:$0xff]
          %v532 = vld [vmem:[#allocation4 + $0x118] sm:$0xff]
          %v533 = vld [vmem:[#allocation4 + $0x120] sm:$0xff]
          %v534 = vld [vmem:[#allocation4 + $0x128] sm:$0xff]
          %v535 = vld [vmem:[#allocation4 + $0x130] sm:$0xff]
          %v536 = vld [vmem:[#allocation4 + $0x138] sm:$0xff]
          %v537 = vld [vmem:[#allocation4 + $0x140] sm:$0xff]
          %v538 = vld [vmem:[#allocation4 + $0x148] sm:$0xff]
          %v539 = vld [vmem:[#allocation4 + $0x150] sm:$0xff]
          %v540 = vld [vmem:[#allocation4 + $0x158] sm:$0xff]
          %v541 = vld [vmem:[#allocation4 + $0x160] sm:$0xff]
          %v542 = vld [vmem:[#allocation4 + $0x168] sm:$0xff]
          %v543 = vld [vmem:[#allocation4 + $0x170] sm:$0xff]
          %v544 = vpack.c.bf16 %v498, %v497
          %v545 = vpack.c.bf16 %v500, %v499
          %v546 = vpack.c.bf16 %v502, %v501
          %v547 = vpack.c.bf16 %v504, %v503
          %v548 = vpack.c.bf16 %v506, %v505
          %v549 = vpack.c.bf16 %v508, %v507
          %v550 = vpack.c.bf16 %v510, %v509
          %v551 = vpack.c.bf16 %v512, %v511
          %v552 = vpack.c.bf16 %v514, %v513
          %v553 = vpack.c.bf16 %v516, %v515
          %v554 = vpack.c.bf16 %v518, %v517
          %v555 = vpack.c.bf16 %v520, %v519
          %v556 = vpack.c.bf16 %v522, %v521
          %v557 = vpack.c.bf16 %v524, %v523
          %v558 = vpack.c.bf16 %v526, %v525
          %v559 = vpack.c.bf16 %v528, %v527
          %v560 = vpack.c.bf16 %v530, %v529
          %v561 = vpack.c.bf16 %v532, %v531
          %v562 = vpack.c.bf16 %v534, %v533
          %v563 = vpack.c.bf16 %v536, %v535
          %v564 = vpack.c.bf16 %v538, %v537
          %v565 = vpack.c.bf16 %v540, %v539
          %v566 = vpack.c.bf16 %v542, %v541
          %v567 = vpack.c.bf16 %v543, %v543
          %568 = vst [vmem:[#allocation2] sm:$0xff] %v544
          %569 = vst [vmem:[#allocation2 + $0x8] sm:$0xff] %v545
          %570 = vst [vmem:[#allocation2 + $0x10] sm:$0xff] %v546
          %571 = vst [vmem:[#allocation2 + $0x18] sm:$0xff] %v547
          %572 = vst [vmem:[#allocation2 + $0x20] sm:$0xff] %v548
          %573 = vst [vmem:[#allocation2 + $0x28] sm:$0xff] %v549
          %574 = vst [vmem:[#allocation2 + $0x30] sm:$0xff] %v550
          %575 = vst [vmem:[#allocation2 + $0x38] sm:$0xff] %v551
          %576 = vst [vmem:[#allocation2 + $0x40] sm:$0xff] %v552
          %577 = vst [vmem:[#allocation2 + $0x48] sm:$0xff] %v553
          %578 = vst [vmem:[#allocation2 + $0x50] sm:$0xff] %v554
          %579 = vst [vmem:[#allocation2 + $0x58] sm:$0xff] %v555
          %580 = vst [vmem:[#allocation2 + $0x60] sm:$0xff] %v556
          %581 = vst [vmem:[#allocation2 + $0x68] sm:$0xff] %v557
          %582 = vst [vmem:[#allocation2 + $0x70] sm:$0xff] %v558
          %583 = vst [vmem:[#allocation2 + $0x78] sm:$0xff] %v559
          %584 = vst [vmem:[#allocation2 + $0x80] sm:$0xff] %v560
          %585 = vst [vmem:[#allocation2 + $0x88] sm:$0xff] %v561
          %586 = vst [vmem:[#allocation2 + $0x90] sm:$0xff] %v562
          %587 = vst [vmem:[#allocation2 + $0x98] sm:$0xff] %v563
          %588 = vst [vmem:[#allocation2 + $0xa0] sm:$0xff] %v564
          %589 = vst [vmem:[#allocation2 + $0xa8] sm:$0xff] %v565
          %590 = vst [vmem:[#allocation2 + $0xb0] sm:$0xff] %v566
          %vm591 = vcmask 912384
          %592 = vst.msk [vmem:[#allocation2 + $0xb8] sm:$0xf] %vm591, %v567
        $region96: #{network_forward.1} parent=55 // pred_fallthru
          _
        %s593 = smul.u32 %s27, 3072
        %v594 = vld [vmem:[#allocation3] sm:$0xff]
        %v595 = vld [vmem:[#allocation3 + $0x8] sm:$0xff]
        %v596 = vld [vmem:[#allocation3 + $0x10] sm:$0xff]
        %v597 = vld [vmem:[#allocation3 + $0x18] sm:$0xff]
        %s598 = sshra.s32 %s593, 7
        %s599 = sand.u32 %s593, 127
        %s600 = smul.addr %s598, 4
        %s601 = scalar_lea.vmem [#allocation2], %s600
        %v602 = vld [vmem:[%s601] sm:$0xff]
        %v603 = vld [vmem:[%s601 + $0x8] sm:$0xff]
        %v604 = vld [vmem:[%s601 + $0x10] sm:$0xff]
        %v605 = vld [vmem:[%s601 + $0x18] sm:$0xff]
        %v606 = vld [vmem:[%s601 + $0x20] sm:$0xff]
        %v607 = vld [vmem:[%s601 + $0x28] sm:$0xff]
        %v608 = vld [vmem:[%s601 + $0x30] sm:$0xff]
        %v609 = vld [vmem:[%s601 + $0x38] sm:$0xff]
        %v610 = vld [vmem:[%s601 + $0x40] sm:$0xff]
        %v611 = vld [vmem:[%s601 + $0x48] sm:$0xff]
        %v612 = vld [vmem:[%s601 + $0x50] sm:$0xff]
        %v613 = vld [vmem:[%s601 + $0x58] sm:$0xff]
        %v614 = vld [vmem:[%s397] sm:$0xff]
        %v615 = vld [vmem:[%s397 + $0x8] sm:$0xff]
        %v616 = vld [vmem:[%s397 + $0x10] sm:$0xff]
        %v617 = vld [vmem:[%s397 + $0x18] sm:$0xff]
        %v618 = vld [vmem:[%s397 + $0x20] sm:$0xff]
        %v619 = vld [vmem:[%s397 + $0x28] sm:$0xff]
        %v620 = vld [vmem:[%s397 + $0x30] sm:$0xff]
        %v621 = vld [vmem:[%s397 + $0x38] sm:$0xff]
        %v622 = vld [vmem:[%s397 + $0x40] sm:$0xff]
        %v623 = vld [vmem:[%s397 + $0x48] sm:$0xff]
        %v624 = vld [vmem:[%s397 + $0x50] sm:$0xff]
        %v625 = vld [vmem:[%s397 + $0x58] sm:$0xff]
        %v626 = vld [vmem:[%s397 + $0x60] sm:$0xff]
        %v627 = vld [vmem:[%s397 + $0x68] sm:$0xff]
        %v628 = vld [vmem:[%s397 + $0x70] sm:$0xff]
        %v629 = vld [vmem:[%s397 + $0x78] sm:$0xff]
        %v630 = vld [vmem:[%s397 + $0x80] sm:$0xff]
        %v631 = vld [vmem:[%s397 + $0x88] sm:$0xff]
        %v632 = vld [vmem:[%s397 + $0x90] sm:$0xff]
        %v633 = vld [vmem:[%s397 + $0x98] sm:$0xff]
        %v634 = vld [vmem:[%s397 + $0xa0] sm:$0xff]
        %v635 = vld [vmem:[%s397 + $0xa8] sm:$0xff]
        %v636 = vld [vmem:[%s397 + $0xb0] sm:$0xff]
        %v637 = vld [vmem:[%s397 + $0xb8] sm:$0xff]
        %v638 = vld [vmem:[%s397 + $0xc0] sm:$0xff]
        %v639 = vld [vmem:[%s397 + $0xc8] sm:$0xff]
        %v640 = vld [vmem:[%s397 + $0xd0] sm:$0xff]
        %v641 = vld [vmem:[%s397 + $0xd8] sm:$0xff]
        %v642 = vld [vmem:[%s397 + $0xe0] sm:$0xff]
        %v643 = vld [vmem:[%s397 + $0xe8] sm:$0xff]
        %v644 = vld [vmem:[%s397 + $0xf0] sm:$0xff]
        %v645 = vld [vmem:[%s397 + $0xf8] sm:$0xff]
        %v646 = vld [vmem:[%s397 + $0x100] sm:$0xff]
        %v647 = vld [vmem:[%s397 + $0x108] sm:$0xff]
        %v648 = vld [vmem:[%s397 + $0x110] sm:$0xff]
        %v649 = vld [vmem:[%s397 + $0x118] sm:$0xff]
        %v650 = vld [vmem:[%s397 + $0x120] sm:$0xff]
        %v651 = vld [vmem:[%s397 + $0x128] sm:$0xff]
        %v652 = vld [vmem:[%s397 + $0x130] sm:$0xff]
        %v653 = vld [vmem:[%s397 + $0x138] sm:$0xff]
        %v654 = vld [vmem:[%s397 + $0x140] sm:$0xff]
        %v655 = vld [vmem:[%s397 + $0x148] sm:$0xff]
        %v656 = vld [vmem:[%s397 + $0x150] sm:$0xff]
        %v657 = vld [vmem:[%s397 + $0x158] sm:$0xff]
        %v658 = vld [vmem:[%s397 + $0x160] sm:$0xff]
        %v659 = vld [vmem:[%s397 + $0x168] sm:$0xff]
        %v660 = vld [vmem:[%s397 + $0x170] sm:$0xff]
        %v661 = vld [vmem:[%s397 + $0x178] sm:$0xff]
        %v662 = vld [vmem:[%s397 + $0x180] sm:$0xff]
        %v663 = vld [vmem:[%s397 + $0x188] sm:$0xff]
        %v664 = vld [vmem:[%s397 + $0x190] sm:$0xff]
        %v665 = vld [vmem:[%s397 + $0x198] sm:$0xff]
        %v666 = vld [vmem:[%s397 + $0x1a0] sm:$0xff]
        %v667 = vld [vmem:[%s397 + $0x1a8] sm:$0xff]
        %v668 = vld [vmem:[%s397 + $0x1b0] sm:$0xff]
        %v669 = vld [vmem:[%s397 + $0x1b8] sm:$0xff]
        %v670 = vld [vmem:[%s397 + $0x1c0] sm:$0xff]
        %v671 = vld [vmem:[%s397 + $0x1c8] sm:$0xff]
        %v672 = vld [vmem:[%s397 + $0x1d0] sm:$0xff]
        %v673 = vld [vmem:[%s397 + $0x1d8] sm:$0xff]
        %v674 = vld [vmem:[%s397 + $0x1e0] sm:$0xff]
        %v675 = vld [vmem:[%s397 + $0x1e8] sm:$0xff]
        %v676 = vld [vmem:[%s397 + $0x1f0] sm:$0xff]
        %v677 = vld [vmem:[%s397 + $0x1f8] sm:$0xff]
        %v678 = vld [vmem:[%s397 + $0x200] sm:$0xff]
        %v679 = vld [vmem:[%s397 + $0x208] sm:$0xff]
        %v680 = vld [vmem:[%s397 + $0x210] sm:$0xff]
        %v681 = vld [vmem:[%s397 + $0x218] sm:$0xff]
        %v682 = vld [vmem:[%s397 + $0x220] sm:$0xff]
        %v683 = vld [vmem:[%s397 + $0x228] sm:$0xff]
        %v684 = vld [vmem:[%s397 + $0x230] sm:$0xff]
        %v685 = vld [vmem:[%s397 + $0x238] sm:$0xff]
        %v686 = vld [vmem:[%s397 + $0x240] sm:$0xff]
        %v687 = vld [vmem:[%s397 + $0x248] sm:$0xff]
        %v688 = vld [vmem:[%s397 + $0x250] sm:$0xff]
        %v689 = vld [vmem:[%s397 + $0x258] sm:$0xff]
        %v690 = vld [vmem:[%s397 + $0x260] sm:$0xff]
        %v691 = vld [vmem:[%s397 + $0x268] sm:$0xff]
        %v692 = vld [vmem:[%s397 + $0x270] sm:$0xff]
        %v693 = vld [vmem:[%s397 + $0x278] sm:$0xff]
        %v694 = vld [vmem:[%s397 + $0x280] sm:$0xff]
        %v695 = vld [vmem:[%s397 + $0x288] sm:$0xff]
        %v696 = vld [vmem:[%s397 + $0x290] sm:$0xff]
        %v697 = vld [vmem:[%s397 + $0x298] sm:$0xff]
        %v698 = vld [vmem:[%s397 + $0x2a0] sm:$0xff]
        %v699 = vld [vmem:[%s397 + $0x2a8] sm:$0xff]
        %v700 = vld [vmem:[%s397 + $0x2b0] sm:$0xff]
        %v701 = vld [vmem:[%s397 + $0x2b8] sm:$0xff]
        %v702 = vld [vmem:[%s397 + $0x2c0] sm:$0xff]
        %v703 = vld [vmem:[%s397 + $0x2c8] sm:$0xff]
        %v704 = vld [vmem:[%s397 + $0x2d0] sm:$0xff]
        %v705 = vld [vmem:[%s397 + $0x2d8] sm:$0xff]
        %v706 = vld [vmem:[%s397 + $0x2e0] sm:$0xff]
        %v707 = vld [vmem:[%s397 + $0x2e8] sm:$0xff]
        %v708 = vld [vmem:[%s397 + $0x2f0] sm:$0xff]
        %v709 = vld [vmem:[%s397 + $0x2f8] sm:$0xff]
        %v710 = vld [vmem:[%s397 + $0x300] sm:$0xff]
        %v711 = vld [vmem:[%s397 + $0x308] sm:$0xff]
        %v712 = vld [vmem:[%s397 + $0x310] sm:$0xff]
        %v713 = vld [vmem:[%s397 + $0x318] sm:$0xff]
        %v714 = vld [vmem:[%s397 + $0x320] sm:$0xff]
        %v715 = vld [vmem:[%s397 + $0x328] sm:$0xff]
        %v716 = vld [vmem:[%s397 + $0x330] sm:$0xff]
        %v717 = vld [vmem:[%s397 + $0x338] sm:$0xff]
        %v718 = vld [vmem:[%s397 + $0x340] sm:$0xff]
        %v719 = vld [vmem:[%s397 + $0x348] sm:$0xff]
        %v720 = vld [vmem:[%s397 + $0x350] sm:$0xff]
        %v721 = vld [vmem:[%s397 + $0x358] sm:$0xff]
        %v722 = vld [vmem:[%s397 + $0x360] sm:$0xff]
        %v723 = vld [vmem:[%s397 + $0x368] sm:$0xff]
        %v724 = vld [vmem:[%s397 + $0x370] sm:$0xff]
        %v725 = vld [vmem:[%s397 + $0x378] sm:$0xff]
        %v726 = vld [vmem:[%s397 + $0x380] sm:$0xff]
        %v727 = vld [vmem:[%s397 + $0x388] sm:$0xff]
        %v728 = vld [vmem:[%s397 + $0x390] sm:$0xff]
        %v729 = vld [vmem:[%s397 + $0x398] sm:$0xff]
        %v730 = vld [vmem:[%s397 + $0x3a0] sm:$0xff]
        %v731 = vld [vmem:[%s397 + $0x3a8] sm:$0xff]
        %v732 = vld [vmem:[%s397 + $0x3b0] sm:$0xff]
        %v733 = vld [vmem:[%s397 + $0x3b8] sm:$0xff]
        %v734 = vld [vmem:[%s397 + $0x3c0] sm:$0xff]
        %v735 = vld [vmem:[%s397 + $0x3c8] sm:$0xff]
        %v736 = vld [vmem:[%s397 + $0x3d0] sm:$0xff]
        %v737 = vld [vmem:[%s397 + $0x3d8] sm:$0xff]
        %v738 = vld [vmem:[%s397 + $0x3e0] sm:$0xff]
        %v739 = vld [vmem:[%s397 + $0x3e8] sm:$0xff]
        %v740 = vld [vmem:[%s397 + $0x3f0] sm:$0xff]
        %v741 = vld [vmem:[%s397 + $0x3f8] sm:$0xff]
        %v742 = vld [vmem:[%s397 + $0x400] sm:$0xff]
        %v743 = vld [vmem:[%s397 + $0x408] sm:$0xff]
        %v744 = vld [vmem:[%s397 + $0x410] sm:$0xff]
        %v745 = vld [vmem:[%s397 + $0x418] sm:$0xff]
        %v746 = vld [vmem:[%s397 + $0x420] sm:$0xff]
        %v747 = vld [vmem:[%s397 + $0x428] sm:$0xff]
        %v748 = vld [vmem:[%s397 + $0x430] sm:$0xff]
        %v749 = vld [vmem:[%s397 + $0x438] sm:$0xff]
        %v750 = vld [vmem:[%s397 + $0x440] sm:$0xff]
        %v751 = vld [vmem:[%s397 + $0x448] sm:$0xff]
        %v752 = vld [vmem:[%s397 + $0x450] sm:$0xff]
        %v753 = vld [vmem:[%s397 + $0x458] sm:$0xff]
        %v754 = vld [vmem:[%s397 + $0x460] sm:$0xff]
        %v755 = vld [vmem:[%s397 + $0x468] sm:$0xff]
        %v756 = vld [vmem:[%s397 + $0x470] sm:$0xff]
        %v757 = vld [vmem:[%s397 + $0x478] sm:$0xff]
        %v758 = vld [vmem:[%s397 + $0x480] sm:$0xff]
        %v759 = vld [vmem:[%s397 + $0x488] sm:$0xff]
        %v760 = vld [vmem:[%s397 + $0x490] sm:$0xff]
        %v761 = vld [vmem:[%s397 + $0x498] sm:$0xff]
        %v762 = vld [vmem:[%s397 + $0x4a0] sm:$0xff]
        %v763 = vld [vmem:[%s397 + $0x4a8] sm:$0xff]
        %v764 = vld [vmem:[%s397 + $0x4b0] sm:$0xff]
        %v765 = vld [vmem:[%s397 + $0x4b8] sm:$0xff]
        %v766 = vld [vmem:[%s397 + $0x4c0] sm:$0xff]
        %v767 = vld [vmem:[%s397 + $0x4c8] sm:$0xff]
        %v768 = vld [vmem:[%s397 + $0x4d0] sm:$0xff]
        %v769 = vld [vmem:[%s397 + $0x4d8] sm:$0xff]
        %v770 = vld [vmem:[%s397 + $0x4e0] sm:$0xff]
        %v771 = vld [vmem:[%s397 + $0x4e8] sm:$0xff]
        %v772 = vld [vmem:[%s397 + $0x4f0] sm:$0xff]
        %v773 = vld [vmem:[%s397 + $0x4f8] sm:$0xff]
        %v774 = vld [vmem:[%s397 + $0x500] sm:$0xff]
        %v775 = vld [vmem:[%s397 + $0x508] sm:$0xff]
        %v776 = vld [vmem:[%s397 + $0x510] sm:$0xff]
        %v777 = vld [vmem:[%s397 + $0x518] sm:$0xff]
        %v778 = vld [vmem:[%s397 + $0x520] sm:$0xff]
        %v779 = vld [vmem:[%s397 + $0x528] sm:$0xff]
        %v780 = vld [vmem:[%s397 + $0x530] sm:$0xff]
        %v781 = vld [vmem:[%s397 + $0x538] sm:$0xff]
        %v782 = vld [vmem:[%s397 + $0x540] sm:$0xff]
        %v783 = vld [vmem:[%s397 + $0x548] sm:$0xff]
        %v784 = vld [vmem:[%s397 + $0x550] sm:$0xff]
        %v785 = vld [vmem:[%s397 + $0x558] sm:$0xff]
        %v786 = vld [vmem:[%s397 + $0x560] sm:$0xff]
        %v787 = vld [vmem:[%s397 + $0x568] sm:$0xff]
        %v788 = vld [vmem:[%s397 + $0x570] sm:$0xff]
        %v789 = vld [vmem:[%s397 + $0x578] sm:$0xff]
        %v790 = vld [vmem:[%s397 + $0x580] sm:$0xff]
        %v791 = vld [vmem:[%s397 + $0x588] sm:$0xff]
        %v792 = vld [vmem:[%s397 + $0x590] sm:$0xff]
        %v793 = vld [vmem:[%s397 + $0x598] sm:$0xff]
        %v794 = vld [vmem:[%s397 + $0x5a0] sm:$0xff]
        %v795 = vld [vmem:[%s397 + $0x5a8] sm:$0xff]
        %v796 = vld [vmem:[%s397 + $0x5b0] sm:$0xff]
        %v797 = vld [vmem:[%s397 + $0x5b8] sm:$0xff]
        %v798 = vld [vmem:[%s397 + $0x5c0] sm:$0xff]
        %v799 = vld [vmem:[%s397 + $0x5c8] sm:$0xff]
        %v800 = vld [vmem:[%s397 + $0x5d0] sm:$0xff]
        %v801 = vld [vmem:[%s397 + $0x5d8] sm:$0xff]
        %v802 = vld [vmem:[%s397 + $0x5e0] sm:$0xff]
        %v803 = vld [vmem:[%s397 + $0x5e8] sm:$0xff]
        %v804 = vld [vmem:[%s397 + $0x5f0] sm:$0xff]
        %v805 = vld [vmem:[%s397 + $0x5f8] sm:$0xff]
        %v806 = vld [vmem:[%s397 + $0x600] sm:$0xff]
        %v807 = vld [vmem:[%s397 + $0x608] sm:$0xff]
        %v808 = vld [vmem:[%s397 + $0x610] sm:$0xff]
        %v809 = vld [vmem:[%s397 + $0x618] sm:$0xff]
        %v810 = vld [vmem:[%s397 + $0x620] sm:$0xff]
        %v811 = vld [vmem:[%s397 + $0x628] sm:$0xff]
        %v812 = vld [vmem:[%s397 + $0x630] sm:$0xff]
        %v813 = vld [vmem:[%s397 + $0x638] sm:$0xff]
        %v814 = vld [vmem:[%s397 + $0x640] sm:$0xff]
        %v815 = vld [vmem:[%s397 + $0x648] sm:$0xff]
        %v816 = vld [vmem:[%s397 + $0x650] sm:$0xff]
        %v817 = vld [vmem:[%s397 + $0x658] sm:$0xff]
        %v818 = vld [vmem:[%s397 + $0x660] sm:$0xff]
        %v819 = vld [vmem:[%s397 + $0x668] sm:$0xff]
        %v820 = vld [vmem:[%s397 + $0x670] sm:$0xff]
        %v821 = vld [vmem:[%s397 + $0x678] sm:$0xff]
        %v822 = vld [vmem:[%s397 + $0x680] sm:$0xff]
        %v823 = vld [vmem:[%s397 + $0x688] sm:$0xff]
        %v824 = vld [vmem:[%s397 + $0x690] sm:$0xff]
        %v825 = vld [vmem:[%s397 + $0x698] sm:$0xff]
        %v826 = vld [vmem:[%s397 + $0x6a0] sm:$0xff]
        %v827 = vld [vmem:[%s397 + $0x6a8] sm:$0xff]
        %v828 = vld [vmem:[%s397 + $0x6b0] sm:$0xff]
        %v829 = vld [vmem:[%s397 + $0x6b8] sm:$0xff]
        %v830 = vld [vmem:[%s397 + $0x6c0] sm:$0xff]
        %v831 = vld [vmem:[%s397 + $0x6c8] sm:$0xff]
        %v832 = vld [vmem:[%s397 + $0x6d0] sm:$0xff]
        %v833 = vld [vmem:[%s397 + $0x6d8] sm:$0xff]
        %v834 = vld [vmem:[%s397 + $0x6e0] sm:$0xff]
        %v835 = vld [vmem:[%s397 + $0x6e8] sm:$0xff]
        %v836 = vld [vmem:[%s397 + $0x6f0] sm:$0xff]
        %v837 = vld [vmem:[%s397 + $0x6f8] sm:$0xff]
        %v838 = vld [vmem:[%s397 + $0x700] sm:$0xff]
        %v839 = vld [vmem:[%s397 + $0x708] sm:$0xff]
        %v840 = vld [vmem:[%s397 + $0x710] sm:$0xff]
        %v841 = vld [vmem:[%s397 + $0x718] sm:$0xff]
        %v842 = vld [vmem:[%s397 + $0x720] sm:$0xff]
        %v843 = vld [vmem:[%s397 + $0x728] sm:$0xff]
        %v844 = vld [vmem:[%s397 + $0x730] sm:$0xff]
        %v845 = vld [vmem:[%s397 + $0x738] sm:$0xff]
        %v846 = vld [vmem:[%s397 + $0x740] sm:$0xff]
        %v847 = vld [vmem:[%s397 + $0x748] sm:$0xff]
        %v848 = vld [vmem:[%s397 + $0x750] sm:$0xff]
        %v849 = vld [vmem:[%s397 + $0x758] sm:$0xff]
        %v850 = vld [vmem:[%s397 + $0x760] sm:$0xff]
        %v851 = vld [vmem:[%s397 + $0x768] sm:$0xff]
        %v852 = vld [vmem:[%s397 + $0x770] sm:$0xff]
        %v853 = vld [vmem:[%s397 + $0x778] sm:$0xff]
        %v854 = vld [vmem:[%s397 + $0x780] sm:$0xff]
        %v855 = vld [vmem:[%s397 + $0x788] sm:$0xff]
        %v856 = vld [vmem:[%s397 + $0x790] sm:$0xff]
        %v857 = vld [vmem:[%s397 + $0x798] sm:$0xff]
        %v858 = vld [vmem:[%s397 + $0x7a0] sm:$0xff]
        %v859 = vld [vmem:[%s397 + $0x7a8] sm:$0xff]
        %v860 = vld [vmem:[%s397 + $0x7b0] sm:$0xff]
        %v861 = vld [vmem:[%s397 + $0x7b8] sm:$0xff]
        %v862 = vld [vmem:[%s397 + $0x7c0] sm:$0xff]
        %v863 = vld [vmem:[%s397 + $0x7c8] sm:$0xff]
        %v864 = vld [vmem:[%s397 + $0x7d0] sm:$0xff]
        %v865 = vld [vmem:[%s397 + $0x7d8] sm:$0xff]
        %v866 = vld [vmem:[%s397 + $0x7e0] sm:$0xff]
        %v867 = vld [vmem:[%s397 + $0x7e8] sm:$0xff]
        %v868 = vld [vmem:[%s397 + $0x7f0] sm:$0xff]
        %v869 = vld [vmem:[%s397 + $0x7f8] sm:$0xff]
        %v870 = vld [vmem:[%s397 + $0x800] sm:$0xff]
        %v871 = vld [vmem:[%s397 + $0x808] sm:$0xff]
        %v872 = vld [vmem:[%s397 + $0x810] sm:$0xff]
        %v873 = vld [vmem:[%s397 + $0x818] sm:$0xff]
        %v874 = vld [vmem:[%s397 + $0x820] sm:$0xff]
        %v875 = vld [vmem:[%s397 + $0x828] sm:$0xff]
        %v876 = vld [vmem:[%s397 + $0x830] sm:$0xff]
        %v877 = vld [vmem:[%s397 + $0x838] sm:$0xff]
        %v878 = vld [vmem:[%s397 + $0x840] sm:$0xff]
        %v879 = vld [vmem:[%s397 + $0x848] sm:$0xff]
        %v880 = vld [vmem:[%s397 + $0x850] sm:$0xff]
        %v881 = vld [vmem:[%s397 + $0x858] sm:$0xff]
        %v882 = vld [vmem:[%s397 + $0x860] sm:$0xff]
        %v883 = vld [vmem:[%s397 + $0x868] sm:$0xff]
        %v884 = vld [vmem:[%s397 + $0x870] sm:$0xff]
        %v885 = vld [vmem:[%s397 + $0x878] sm:$0xff]
        %v886 = vld [vmem:[%s397 + $0x880] sm:$0xff]
        %v887 = vld [vmem:[%s397 + $0x888] sm:$0xff]
        %v888 = vld [vmem:[%s397 + $0x890] sm:$0xff]
        %v889 = vld [vmem:[%s397 + $0x898] sm:$0xff]
        %v890 = vld [vmem:[%s397 + $0x8a0] sm:$0xff]
        %v891 = vld [vmem:[%s397 + $0x8a8] sm:$0xff]
        %v892 = vld [vmem:[%s397 + $0x8b0] sm:$0xff]
        %v893 = vld [vmem:[%s397 + $0x8b8] sm:$0xff]
        %v894 = vld [vmem:[%s397 + $0x8c0] sm:$0xff]
        %v895 = vld [vmem:[%s397 + $0x8c8] sm:$0xff]
        %v896 = vld [vmem:[%s397 + $0x8d0] sm:$0xff]
        %v897 = vld [vmem:[%s397 + $0x8d8] sm:$0xff]
        %v898 = vld [vmem:[%s397 + $0x8e0] sm:$0xff]
        %v899 = vld [vmem:[%s397 + $0x8e8] sm:$0xff]
        %v900 = vld [vmem:[%s397 + $0x8f0] sm:$0xff]
        %v901 = vld [vmem:[%s397 + $0x8f8] sm:$0xff]
        %v902 = vld [vmem:[%s397 + $0x900] sm:$0xff]
        %v903 = vld [vmem:[%s397 + $0x908] sm:$0xff]
        %v904 = vld [vmem:[%s397 + $0x910] sm:$0xff]
        %v905 = vld [vmem:[%s397 + $0x918] sm:$0xff]
        %v906 = vld [vmem:[%s397 + $0x920] sm:$0xff]
        %v907 = vld [vmem:[%s397 + $0x928] sm:$0xff]
        %v908 = vld [vmem:[%s397 + $0x930] sm:$0xff]
        %v909 = vld [vmem:[%s397 + $0x938] sm:$0xff]
        %v910 = vld [vmem:[%s397 + $0x940] sm:$0xff]
        %v911 = vld [vmem:[%s397 + $0x948] sm:$0xff]
        %v912 = vld [vmem:[%s397 + $0x950] sm:$0xff]
        %v913 = vld [vmem:[%s397 + $0x958] sm:$0xff]
        %v914 = vld [vmem:[%s397 + $0x960] sm:$0xff]
        %v915 = vld [vmem:[%s397 + $0x968] sm:$0xff]
        %v916 = vld [vmem:[%s397 + $0x970] sm:$0xff]
        %v917 = vld [vmem:[%s397 + $0x978] sm:$0xff]
        %v918 = vld [vmem:[%s397 + $0x980] sm:$0xff]
        %v919 = vld [vmem:[%s397 + $0x988] sm:$0xff]
        %v920 = vld [vmem:[%s397 + $0x990] sm:$0xff]
        %v921 = vld [vmem:[%s397 + $0x998] sm:$0xff]
        %v922 = vld [vmem:[%s397 + $0x9a0] sm:$0xff]
        %v923 = vld [vmem:[%s397 + $0x9a8] sm:$0xff]
        %v924 = vld [vmem:[%s397 + $0x9b0] sm:$0xff]
        %v925 = vld [vmem:[%s397 + $0x9b8] sm:$0xff]
        %v926 = vld [vmem:[%s397 + $0x9c0] sm:$0xff]
        %v927 = vld [vmem:[%s397 + $0x9c8] sm:$0xff]
        %v928 = vld [vmem:[%s397 + $0x9d0] sm:$0xff]
        %v929 = vld [vmem:[%s397 + $0x9d8] sm:$0xff]
        %v930 = vld [vmem:[%s397 + $0x9e0] sm:$0xff]
        %v931 = vld [vmem:[%s397 + $0x9e8] sm:$0xff]
        %v932 = vld [vmem:[%s397 + $0x9f0] sm:$0xff]
        %v933 = vld [vmem:[%s397 + $0x9f8] sm:$0xff]
        %v934 = vld [vmem:[%s397 + $0xa00] sm:$0xff]
        %v935 = vld [vmem:[%s397 + $0xa08] sm:$0xff]
        %v936 = vld [vmem:[%s397 + $0xa10] sm:$0xff]
        %v937 = vld [vmem:[%s397 + $0xa18] sm:$0xff]
        %v938 = vld [vmem:[%s397 + $0xa20] sm:$0xff]
        %v939 = vld [vmem:[%s397 + $0xa28] sm:$0xff]
        %v940 = vld [vmem:[%s397 + $0xa30] sm:$0xff]
        %v941 = vld [vmem:[%s397 + $0xa38] sm:$0xff]
        %v942 = vld [vmem:[%s397 + $0xa40] sm:$0xff]
        %v943 = vld [vmem:[%s397 + $0xa48] sm:$0xff]
        %v944 = vld [vmem:[%s397 + $0xa50] sm:$0xff]
        %v945 = vld [vmem:[%s397 + $0xa58] sm:$0xff]
        %v946 = vld [vmem:[%s397 + $0xa60] sm:$0xff]
        %v947 = vld [vmem:[%s397 + $0xa68] sm:$0xff]
        %v948 = vld [vmem:[%s397 + $0xa70] sm:$0xff]
        %v949 = vld [vmem:[%s397 + $0xa78] sm:$0xff]
        %v950 = vld [vmem:[%s397 + $0xa80] sm:$0xff]
        %v951 = vld [vmem:[%s397 + $0xa88] sm:$0xff]
        %v952 = vld [vmem:[%s397 + $0xa90] sm:$0xff]
        %v953 = vld [vmem:[%s397 + $0xa98] sm:$0xff]
        %v954 = vld [vmem:[%s397 + $0xaa0] sm:$0xff]
        %v955 = vld [vmem:[%s397 + $0xaa8] sm:$0xff]
        %v956 = vld [vmem:[%s397 + $0xab0] sm:$0xff]
        %v957 = vld [vmem:[%s397 + $0xab8] sm:$0xff]
        %v958 = vld [vmem:[%s397 + $0xac0] sm:$0xff]
        %v959 = vld [vmem:[%s397 + $0xac8] sm:$0xff]
        %v960 = vld [vmem:[%s397 + $0xad0] sm:$0xff]
        %v961 = vld [vmem:[%s397 + $0xad8] sm:$0xff]
        %v962 = vld [vmem:[%s397 + $0xae0] sm:$0xff]
        %v963 = vld [vmem:[%s397 + $0xae8] sm:$0xff]
        %v964 = vld [vmem:[%s397 + $0xaf0] sm:$0xff]
        %v965 = vld [vmem:[%s397 + $0xaf8] sm:$0xff]
        %v966 = vld [vmem:[%s397 + $0xb00] sm:$0xff]
        %v967 = vld [vmem:[%s397 + $0xb08] sm:$0xff]
        %v968 = vld [vmem:[%s397 + $0xb10] sm:$0xff]
        %v969 = vld [vmem:[%s397 + $0xb18] sm:$0xff]
        %v970 = vld [vmem:[%s397 + $0xb20] sm:$0xff]
        %v971 = vld [vmem:[%s397 + $0xb28] sm:$0xff]
        %v972 = vld [vmem:[%s397 + $0xb30] sm:$0xff]
        %v973 = vld [vmem:[%s397 + $0xb38] sm:$0xff]
        %v974 = vld [vmem:[%s397 + $0xb40] sm:$0xff]
        %v975 = vld [vmem:[%s397 + $0xb48] sm:$0xff]
        %v976 = vld [vmem:[%s397 + $0xb50] sm:$0xff]
        %v977 = vld [vmem:[%s397 + $0xb58] sm:$0xff]
        %v978 = vld [vmem:[%s397 + $0xb60] sm:$0xff]
        %v979 = vld [vmem:[%s397 + $0xb68] sm:$0xff]
        %v980 = vld [vmem:[%s397 + $0xb70] sm:$0xff]
        %v981 = vld [vmem:[%s397 + $0xb78] sm:$0xff]
        %v982 = vld [vmem:[%s397 + $0xb80] sm:$0xff]
        %v983 = vld [vmem:[%s397 + $0xb88] sm:$0xff]
        %v984 = vld [vmem:[%s397 + $0xb90] sm:$0xff]
        %v985 = vld [vmem:[%s397 + $0xb98] sm:$0xff]
        %v986 = vld [vmem:[%s397 + $0xba0] sm:$0xff]
        %v987 = vld [vmem:[%s397 + $0xba8] sm:$0xff]
        %v988 = vld [vmem:[%s397 + $0xbb0] sm:$0xff]
        %v989 = vld [vmem:[%s397 + $0xbb8] sm:$0xff]
        %v990 = vld [vmem:[%s397 + $0xbc0] sm:$0xff]
        %v991 = vld [vmem:[%s397 + $0xbc8] sm:$0xff]
        %v992 = vld [vmem:[%s397 + $0xbd0] sm:$0xff]
        %v993 = vld [vmem:[%s397 + $0xbd8] sm:$0xff]
        %v994 = vld [vmem:[%s397 + $0xbe0] sm:$0xff]
        %v995 = vld [vmem:[%s397 + $0xbe8] sm:$0xff]
        %v996 = vld [vmem:[%s397 + $0xbf0] sm:$0xff]
        %v997 = vld [vmem:[%s397 + $0xbf8] sm:$0xff]
        %v998 = vld [vmem:[%s397 + $0xc00] sm:$0xff]
        %v999 = vld [vmem:[%s397 + $0xc08] sm:$0xff]
        %v1000 = vld [vmem:[%s397 + $0xc10] sm:$0xff]
        %v1001 = vld [vmem:[%s397 + $0xc18] sm:$0xff]
        %v1002 = vld [vmem:[%s397 + $0xc20] sm:$0xff]
        %v1003 = vld [vmem:[%s397 + $0xc28] sm:$0xff]
        %v1004 = vld [vmem:[%s397 + $0xc30] sm:$0xff]
        %v1005 = vld [vmem:[%s397 + $0xc38] sm:$0xff]
        %v1006 = vld [vmem:[%s397 + $0xc40] sm:$0xff]
        %v1007 = vld [vmem:[%s397 + $0xc48] sm:$0xff]
        %v1008 = vld [vmem:[%s397 + $0xc50] sm:$0xff]
        %v1009 = vld [vmem:[%s397 + $0xc58] sm:$0xff]
        %v1010 = vld [vmem:[%s397 + $0xc60] sm:$0xff]
        %v1011 = vld [vmem:[%s397 + $0xc68] sm:$0xff]
        %v1012 = vld [vmem:[%s397 + $0xc70] sm:$0xff]
        %v1013 = vld [vmem:[%s397 + $0xc78] sm:$0xff]
        %v1014 = vld [vmem:[%s397 + $0xc80] sm:$0xff]
        %v1015 = vld [vmem:[%s397 + $0xc88] sm:$0xff]
        %v1016 = vld [vmem:[%s397 + $0xc90] sm:$0xff]
        %v1017 = vld [vmem:[%s397 + $0xc98] sm:$0xff]
        %v1018 = vld [vmem:[%s397 + $0xca0] sm:$0xff]
        %v1019 = vld [vmem:[%s397 + $0xca8] sm:$0xff]
        %v1020 = vld [vmem:[%s397 + $0xcb0] sm:$0xff]
        %v1021 = vld [vmem:[%s397 + $0xcb8] sm:$0xff]
        %v1022 = vld [vmem:[%s397 + $0xcc0] sm:$0xff]
        %v1023 = vld [vmem:[%s397 + $0xcc8] sm:$0xff]
        %v1024 = vld [vmem:[%s397 + $0xcd0] sm:$0xff]
        %v1025 = vld [vmem:[%s397 + $0xcd8] sm:$0xff]
        %v1026 = vld [vmem:[%s397 + $0xce0] sm:$0xff]
        %v1027 = vld [vmem:[%s397 + $0xce8] sm:$0xff]
        %v1028 = vld [vmem:[%s397 + $0xcf0] sm:$0xff]
        %v1029 = vld [vmem:[%s397 + $0xcf8] sm:$0xff]
        %v1030 = vld [vmem:[%s397 + $0xd00] sm:$0xff]
        %v1031 = vld [vmem:[%s397 + $0xd08] sm:$0xff]
        %v1032 = vld [vmem:[%s397 + $0xd10] sm:$0xff]
        %v1033 = vld [vmem:[%s397 + $0xd18] sm:$0xff]
        %v1034 = vld [vmem:[%s397 + $0xd20] sm:$0xff]
        %v1035 = vld [vmem:[%s397 + $0xd28] sm:$0xff]
        %v1036 = vld [vmem:[%s397 + $0xd30] sm:$0xff]
        %v1037 = vld [vmem:[%s397 + $0xd38] sm:$0xff]
        %v1038 = vld [vmem:[%s397 + $0xd40] sm:$0xff]
        %v1039 = vld [vmem:[%s397 + $0xd48] sm:$0xff]
        %v1040 = vld [vmem:[%s397 + $0xd50] sm:$0xff]
        %v1041 = vld [vmem:[%s397 + $0xd58] sm:$0xff]
        %v1042 = vld [vmem:[%s397 + $0xd60] sm:$0xff]
        %v1043 = vld [vmem:[%s397 + $0xd68] sm:$0xff]
        %v1044 = vld [vmem:[%s397 + $0xd70] sm:$0xff]
        %v1045 = vld [vmem:[%s397 + $0xd78] sm:$0xff]
        %v1046 = vld [vmem:[%s397 + $0xd80] sm:$0xff]
        %v1047 = vld [vmem:[%s397 + $0xd88] sm:$0xff]
        %v1048 = vld [vmem:[%s397 + $0xd90] sm:$0xff]
        %v1049 = vld [vmem:[%s397 + $0xd98] sm:$0xff]
        %v1050 = vld [vmem:[%s397 + $0xda0] sm:$0xff]
        %v1051 = vld [vmem:[%s397 + $0xda8] sm:$0xff]
        %v1052 = vld [vmem:[%s397 + $0xdb0] sm:$0xff]
        %v1053 = vld [vmem:[%s397 + $0xdb8] sm:$0xff]
        %v1054 = vld [vmem:[%s397 + $0xdc0] sm:$0xff]
        %v1055 = vld [vmem:[%s397 + $0xdc8] sm:$0xff]
        %v1056 = vld [vmem:[%s397 + $0xdd0] sm:$0xff]
        %v1057 = vld [vmem:[%s397 + $0xdd8] sm:$0xff]
        %v1058 = vld [vmem:[%s397 + $0xde0] sm:$0xff]
        %v1059 = vld [vmem:[%s397 + $0xde8] sm:$0xff]
        %v1060 = vld [vmem:[%s397 + $0xdf0] sm:$0xff]
        %v1061 = vld [vmem:[%s397 + $0xdf8] sm:$0xff]
        %v1062 = vld [vmem:[%s397 + $0xe00] sm:$0xff]
        %v1063 = vld [vmem:[%s397 + $0xe08] sm:$0xff]
        %v1064 = vld [vmem:[%s397 + $0xe10] sm:$0xff]
        %v1065 = vld [vmem:[%s397 + $0xe18] sm:$0xff]
        %v1066 = vld [vmem:[%s397 + $0xe20] sm:$0xff]
        %v1067 = vld [vmem:[%s397 + $0xe28] sm:$0xff]
        %v1068 = vld [vmem:[%s397 + $0xe30] sm:$0xff]
        %v1069 = vld [vmem:[%s397 + $0xe38] sm:$0xff]
        %v1070 = vld [vmem:[%s397 + $0xe40] sm:$0xff]
        %v1071 = vld [vmem:[%s397 + $0xe48] sm:$0xff]
        %v1072 = vld [vmem:[%s397 + $0xe50] sm:$0xff]
        %v1073 = vld [vmem:[%s397 + $0xe58] sm:$0xff]
        %v1074 = vld [vmem:[%s397 + $0xe60] sm:$0xff]
        %v1075 = vld [vmem:[%s397 + $0xe68] sm:$0xff]
        %v1076 = vld [vmem:[%s397 + $0xe70] sm:$0xff]
        %v1077 = vld [vmem:[%s397 + $0xe78] sm:$0xff]
        %v1078 = vld [vmem:[%s397 + $0xe80] sm:$0xff]
        %v1079 = vld [vmem:[%s397 + $0xe88] sm:$0xff]
        %v1080 = vld [vmem:[%s397 + $0xe90] sm:$0xff]
        %v1081 = vld [vmem:[%s397 + $0xe98] sm:$0xff]
        %v1082 = vld [vmem:[%s397 + $0xea0] sm:$0xff]
        %v1083 = vld [vmem:[%s397 + $0xea8] sm:$0xff]
        %v1084 = vld [vmem:[%s397 + $0xeb0] sm:$0xff]
        %v1085 = vld [vmem:[%s397 + $0xeb8] sm:$0xff]
        %v1086 = vld [vmem:[%s397 + $0xec0] sm:$0xff]
        %v1087 = vld [vmem:[%s397 + $0xec8] sm:$0xff]
        %v1088 = vld [vmem:[%s397 + $0xed0] sm:$0xff]
        %v1089 = vld [vmem:[%s397 + $0xed8] sm:$0xff]
        %v1090 = vld [vmem:[%s397 + $0xee0] sm:$0xff]
        %v1091 = vld [vmem:[%s397 + $0xee8] sm:$0xff]
        %v1092 = vld [vmem:[%s397 + $0xef0] sm:$0xff]
        %v1093 = vld [vmem:[%s397 + $0xef8] sm:$0xff]
        %v1094 = vld [vmem:[%s397 + $0xf00] sm:$0xff]
        %v1095 = vld [vmem:[%s397 + $0xf08] sm:$0xff]
        %v1096 = vld [vmem:[%s397 + $0xf10] sm:$0xff]
        %v1097 = vld [vmem:[%s397 + $0xf18] sm:$0xff]
        %v1098 = vld [vmem:[%s397 + $0xf20] sm:$0xff]
        %v1099 = vld [vmem:[%s397 + $0xf28] sm:$0xff]
        %v1100 = vld [vmem:[%s397 + $0xf30] sm:$0xff]
        %v1101 = vld [vmem:[%s397 + $0xf38] sm:$0xff]
        %v1102 = vld [vmem:[%s397 + $0xf40] sm:$0xff]
        %v1103 = vld [vmem:[%s397 + $0xf48] sm:$0xff]
        %v1104 = vld [vmem:[%s397 + $0xf50] sm:$0xff]
        %v1105 = vld [vmem:[%s397 + $0xf58] sm:$0xff]
        %v1106 = vld [vmem:[%s397 + $0xf60] sm:$0xff]
        %v1107 = vld [vmem:[%s397 + $0xf68] sm:$0xff]
        %v1108 = vld [vmem:[%s397 + $0xf70] sm:$0xff]
        %v1109 = vld [vmem:[%s397 + $0xf78] sm:$0xff]
        %v1110 = vld [vmem:[%s397 + $0xf80] sm:$0xff]
        %v1111 = vld [vmem:[%s397 + $0xf88] sm:$0xff]
        %v1112 = vld [vmem:[%s397 + $0xf90] sm:$0xff]
        %v1113 = vld [vmem:[%s397 + $0xf98] sm:$0xff]
        %v1114 = vld [vmem:[%s397 + $0xfa0] sm:$0xff]
        %v1115 = vld [vmem:[%s397 + $0xfa8] sm:$0xff]
        %v1116 = vld [vmem:[%s397 + $0xfb0] sm:$0xff]
        %v1117 = vld [vmem:[%s397 + $0xfb8] sm:$0xff]
        %v1118 = vld [vmem:[%s397 + $0xfc0] sm:$0xff]
        %v1119 = vld [vmem:[%s397 + $0xfc8] sm:$0xff]
        %v1120 = vld [vmem:[%s397 + $0xfd0] sm:$0xff]
        %v1121 = vld [vmem:[%s397 + $0xfd8] sm:$0xff]
        %v1122 = vld [vmem:[%s397 + $0xfe0] sm:$0xff]
        %v1123 = vld [vmem:[%s397 + $0xfe8] sm:$0xff]
        %v1124 = vld [vmem:[%s397 + $0xff0] sm:$0xff]
        %v1125 = vld [vmem:[%s397 + $0xff8] sm:$0xff]
        %v1126 = vld [vmem:[%s397 + $0x1000] sm:$0xff]
        %v1127 = vld [vmem:[%s397 + $0x1008] sm:$0xff]
        %v1128 = vld [vmem:[%s397 + $0x1010] sm:$0xff]
        %v1129 = vld [vmem:[%s397 + $0x1018] sm:$0xff]
        %v1130 = vld [vmem:[%s397 + $0x1020] sm:$0xff]
        %v1131 = vld [vmem:[%s397 + $0x1028] sm:$0xff]
        %v1132 = vld [vmem:[%s397 + $0x1030] sm:$0xff]
        %v1133 = vld [vmem:[%s397 + $0x1038] sm:$0xff]
        %v1134 = vld [vmem:[%s397 + $0x1040] sm:$0xff]
        %v1135 = vld [vmem:[%s397 + $0x1048] sm:$0xff]
        %v1136 = vld [vmem:[%s397 + $0x1050] sm:$0xff]
        %v1137 = vld [vmem:[%s397 + $0x1058] sm:$0xff]
        %v1138 = vld [vmem:[%s397 + $0x1060] sm:$0xff]
        %v1139 = vld [vmem:[%s397 + $0x1068] sm:$0xff]
        %v1140 = vld [vmem:[%s397 + $0x1070] sm:$0xff]
        %v1141 = vld [vmem:[%s397 + $0x1078] sm:$0xff]
        %v1142 = vld [vmem:[%s397 + $0x1080] sm:$0xff]
        %v1143 = vld [vmem:[%s397 + $0x1088] sm:$0xff]
        %v1144 = vld [vmem:[%s397 + $0x1090] sm:$0xff]
        %v1145 = vld [vmem:[%s397 + $0x1098] sm:$0xff]
        %v1146 = vld [vmem:[%s397 + $0x10a0] sm:$0xff]
        %v1147 = vld [vmem:[%s397 + $0x10a8] sm:$0xff]
        %v1148 = vld [vmem:[%s397 + $0x10b0] sm:$0xff]
        %v1149 = vld [vmem:[%s397 + $0x10b8] sm:$0xff]
        %v1150 = vld [vmem:[%s397 + $0x10c0] sm:$0xff]
        %v1151 = vld [vmem:[%s397 + $0x10c8] sm:$0xff]
        %v1152 = vld [vmem:[%s397 + $0x10d0] sm:$0xff]
        %v1153 = vld [vmem:[%s397 + $0x10d8] sm:$0xff]
        %v1154 = vld [vmem:[%s397 + $0x10e0] sm:$0xff]
        %v1155 = vld [vmem:[%s397 + $0x10e8] sm:$0xff]
        %v1156 = vld [vmem:[%s397 + $0x10f0] sm:$0xff]
        %v1157 = vld [vmem:[%s397 + $0x10f8] sm:$0xff]
        %v1158 = vld [vmem:[%s397 + $0x1100] sm:$0xff]
        %v1159 = vld [vmem:[%s397 + $0x1108] sm:$0xff]
        %v1160 = vld [vmem:[%s397 + $0x1110] sm:$0xff]
        %v1161 = vld [vmem:[%s397 + $0x1118] sm:$0xff]
        %v1162 = vld [vmem:[%s397 + $0x1120] sm:$0xff]
        %v1163 = vld [vmem:[%s397 + $0x1128] sm:$0xff]
        %v1164 = vld [vmem:[%s397 + $0x1130] sm:$0xff]
        %v1165 = vld [vmem:[%s397 + $0x1138] sm:$0xff]
        %v1166 = vld [vmem:[%s397 + $0x1140] sm:$0xff]
        %v1167 = vld [vmem:[%s397 + $0x1148] sm:$0xff]
        %v1168 = vld [vmem:[%s397 + $0x1150] sm:$0xff]
        %v1169 = vld [vmem:[%s397 + $0x1158] sm:$0xff]
        %v1170 = vld [vmem:[%s397 + $0x1160] sm:$0xff]
        %v1171 = vld [vmem:[%s397 + $0x1168] sm:$0xff]
        %v1172 = vld [vmem:[%s397 + $0x1170] sm:$0xff]
        %v1173 = vld [vmem:[%s397 + $0x1178] sm:$0xff]
        %v1174 = vld [vmem:[%s397 + $0x1180] sm:$0xff]
        %v1175 = vld [vmem:[%s397 + $0x1188] sm:$0xff]
        %v1176 = vld [vmem:[%s397 + $0x1190] sm:$0xff]
        %v1177 = vld [vmem:[%s397 + $0x1198] sm:$0xff]
        %v1178 = vld [vmem:[%s397 + $0x11a0] sm:$0xff]
        %v1179 = vld [vmem:[%s397 + $0x11a8] sm:$0xff]
        %v1180 = vld [vmem:[%s397 + $0x11b0] sm:$0xff]
        %v1181 = vld [vmem:[%s397 + $0x11b8] sm:$0xff]
        %v1182 = vld [vmem:[%s397 + $0x11c0] sm:$0xff]
        %v1183 = vld [vmem:[%s397 + $0x11c8] sm:$0xff]
        %v1184 = vld [vmem:[%s397 + $0x11d0] sm:$0xff]
        %v1185 = vld [vmem:[%s397 + $0x11d8] sm:$0xff]
        %v1186 = vld [vmem:[%s397 + $0x11e0] sm:$0xff]
        %v1187 = vld [vmem:[%s397 + $0x11e8] sm:$0xff]
        %v1188 = vld [vmem:[%s397 + $0x11f0] sm:$0xff]
        %v1189 = vld [vmem:[%s397 + $0x11f8] sm:$0xff]
        %v1190 = vld [vmem:[%s397 + $0x1200] sm:$0xff]
        %v1191 = vld [vmem:[%s397 + $0x1208] sm:$0xff]
        %v1192 = vld [vmem:[%s397 + $0x1210] sm:$0xff]
        %v1193 = vld [vmem:[%s397 + $0x1218] sm:$0xff]
        %v1194 = vld [vmem:[%s397 + $0x1220] sm:$0xff]
        %v1195 = vld [vmem:[%s397 + $0x1228] sm:$0xff]
        %v1196 = vld [vmem:[%s397 + $0x1230] sm:$0xff]
        %v1197 = vld [vmem:[%s397 + $0x1238] sm:$0xff]
        %v1198 = vld [vmem:[%s397 + $0x1240] sm:$0xff]
        %v1199 = vld [vmem:[%s397 + $0x1248] sm:$0xff]
        %v1200 = vld [vmem:[%s397 + $0x1250] sm:$0xff]
        %v1201 = vld [vmem:[%s397 + $0x1258] sm:$0xff]
        %v1202 = vld [vmem:[%s397 + $0x1260] sm:$0xff]
        %v1203 = vld [vmem:[%s397 + $0x1268] sm:$0xff]
        %v1204 = vld [vmem:[%s397 + $0x1270] sm:$0xff]
        %v1205 = vld [vmem:[%s397 + $0x1278] sm:$0xff]
        %v1206 = vld [vmem:[%s397 + $0x1280] sm:$0xff]
        %v1207 = vld [vmem:[%s397 + $0x1288] sm:$0xff]
        %v1208 = vld [vmem:[%s397 + $0x1290] sm:$0xff]
        %v1209 = vld [vmem:[%s397 + $0x1298] sm:$0xff]
        %v1210 = vld [vmem:[%s397 + $0x12a0] sm:$0xff]
        %v1211 = vld [vmem:[%s397 + $0x12a8] sm:$0xff]
        %v1212 = vld [vmem:[%s397 + $0x12b0] sm:$0xff]
        %v1213 = vld [vmem:[%s397 + $0x12b8] sm:$0xff]
        %v1214 = vld [vmem:[%s397 + $0x12c0] sm:$0xff]
        %v1215 = vld [vmem:[%s397 + $0x12c8] sm:$0xff]
        %v1216 = vld [vmem:[%s397 + $0x12d0] sm:$0xff]
        %v1217 = vld [vmem:[%s397 + $0x12d8] sm:$0xff]
        %v1218 = vld [vmem:[%s397 + $0x12e0] sm:$0xff]
        %v1219 = vld [vmem:[%s397 + $0x12e8] sm:$0xff]
        %v1220 = vld [vmem:[%s397 + $0x12f0] sm:$0xff]
        %v1221 = vld [vmem:[%s397 + $0x12f8] sm:$0xff]
        %v1222 = vld [vmem:[%s397 + $0x1300] sm:$0xff]
        %v1223 = vld [vmem:[%s397 + $0x1308] sm:$0xff]
        %v1224 = vld [vmem:[%s397 + $0x1310] sm:$0xff]
        %v1225 = vld [vmem:[%s397 + $0x1318] sm:$0xff]
        %v1226 = vld [vmem:[%s397 + $0x1320] sm:$0xff]
        %v1227 = vld [vmem:[%s397 + $0x1328] sm:$0xff]
        %v1228 = vld [vmem:[%s397 + $0x1330] sm:$0xff]
        %v1229 = vld [vmem:[%s397 + $0x1338] sm:$0xff]
        %v1230 = vld [vmem:[%s397 + $0x1340] sm:$0xff]
        %v1231 = vld [vmem:[%s397 + $0x1348] sm:$0xff]
        %v1232 = vld [vmem:[%s397 + $0x1350] sm:$0xff]
        %v1233 = vld [vmem:[%s397 + $0x1358] sm:$0xff]
        %v1234 = vld [vmem:[%s397 + $0x1360] sm:$0xff]
        %v1235 = vld [vmem:[%s397 + $0x1368] sm:$0xff]
        %v1236 = vld [vmem:[%s397 + $0x1370] sm:$0xff]
        %v1237 = vld [vmem:[%s397 + $0x1378] sm:$0xff]
        %v1238 = vld [vmem:[%s397 + $0x1380] sm:$0xff]
        %v1239 = vld [vmem:[%s397 + $0x1388] sm:$0xff]
        %v1240 = vld [vmem:[%s397 + $0x1390] sm:$0xff]
        %v1241 = vld [vmem:[%s397 + $0x1398] sm:$0xff]
        %v1242 = vld [vmem:[%s397 + $0x13a0] sm:$0xff]
        %v1243 = vld [vmem:[%s397 + $0x13a8] sm:$0xff]
        %v1244 = vld [vmem:[%s397 + $0x13b0] sm:$0xff]
        %v1245 = vld [vmem:[%s397 + $0x13b8] sm:$0xff]
        %v1246 = vld [vmem:[%s397 + $0x13c0] sm:$0xff]
        %v1247 = vld [vmem:[%s397 + $0x13c8] sm:$0xff]
        %v1248 = vld [vmem:[%s397 + $0x13d0] sm:$0xff]
        %v1249 = vld [vmem:[%s397 + $0x13d8] sm:$0xff]
        %v1250 = vld [vmem:[%s397 + $0x13e0] sm:$0xff]
        %v1251 = vld [vmem:[%s397 + $0x13e8] sm:$0xff]
        %v1252 = vld [vmem:[%s397 + $0x13f0] sm:$0xff]
        %v1253 = vld [vmem:[%s397 + $0x13f8] sm:$0xff]
        %v1254 = vld [vmem:[%s397 + $0x1400] sm:$0xff]
        %v1255 = vld [vmem:[%s397 + $0x1408] sm:$0xff]
        %v1256 = vld [vmem:[%s397 + $0x1410] sm:$0xff]
        %v1257 = vld [vmem:[%s397 + $0x1418] sm:$0xff]
        %v1258 = vld [vmem:[%s397 + $0x1420] sm:$0xff]
        %v1259 = vld [vmem:[%s397 + $0x1428] sm:$0xff]
        %v1260 = vld [vmem:[%s397 + $0x1430] sm:$0xff]
        %v1261 = vld [vmem:[%s397 + $0x1438] sm:$0xff]
        %v1262 = vld [vmem:[%s397 + $0x1440] sm:$0xff]
        %v1263 = vld [vmem:[%s397 + $0x1448] sm:$0xff]
        %v1264 = vld [vmem:[%s397 + $0x1450] sm:$0xff]
        %v1265 = vld [vmem:[%s397 + $0x1458] sm:$0xff]
        %v1266 = vld [vmem:[%s397 + $0x1460] sm:$0xff]
        %v1267 = vld [vmem:[%s397 + $0x1468] sm:$0xff]
        %v1268 = vld [vmem:[%s397 + $0x1470] sm:$0xff]
        %v1269 = vld [vmem:[%s397 + $0x1478] sm:$0xff]
        %v1270 = vld [vmem:[%s397 + $0x1480] sm:$0xff]
        %v1271 = vld [vmem:[%s397 + $0x1488] sm:$0xff]
        %v1272 = vld [vmem:[%s397 + $0x1490] sm:$0xff]
        %v1273 = vld [vmem:[%s397 + $0x1498] sm:$0xff]
        %v1274 = vld [vmem:[%s397 + $0x14a0] sm:$0xff]
        %v1275 = vld [vmem:[%s397 + $0x14a8] sm:$0xff]
        %v1276 = vld [vmem:[%s397 + $0x14b0] sm:$0xff]
        %v1277 = vld [vmem:[%s397 + $0x14b8] sm:$0xff]
        %v1278 = vld [vmem:[%s397 + $0x14c0] sm:$0xff]
        %v1279 = vld [vmem:[%s397 + $0x14c8] sm:$0xff]
        %v1280 = vld [vmem:[%s397 + $0x14d0] sm:$0xff]
        %v1281 = vld [vmem:[%s397 + $0x14d8] sm:$0xff]
        %v1282 = vld [vmem:[%s397 + $0x14e0] sm:$0xff]
        %v1283 = vld [vmem:[%s397 + $0x14e8] sm:$0xff]
        %v1284 = vld [vmem:[%s397 + $0x14f0] sm:$0xff]
        %v1285 = vld [vmem:[%s397 + $0x14f8] sm:$0xff]
        %v1286 = vld [vmem:[%s397 + $0x1500] sm:$0xff]
        %v1287 = vld [vmem:[%s397 + $0x1508] sm:$0xff]
        %v1288 = vld [vmem:[%s397 + $0x1510] sm:$0xff]
        %v1289 = vld [vmem:[%s397 + $0x1518] sm:$0xff]
        %v1290 = vld [vmem:[%s397 + $0x1520] sm:$0xff]
        %v1291 = vld [vmem:[%s397 + $0x1528] sm:$0xff]
        %v1292 = vld [vmem:[%s397 + $0x1530] sm:$0xff]
        %v1293 = vld [vmem:[%s397 + $0x1538] sm:$0xff]
        %v1294 = vld [vmem:[%s397 + $0x1540] sm:$0xff]
        %v1295 = vld [vmem:[%s397 + $0x1548] sm:$0xff]
        %v1296 = vld [vmem:[%s397 + $0x1550] sm:$0xff]
        %v1297 = vld [vmem:[%s397 + $0x1558] sm:$0xff]
        %v1298 = vld [vmem:[%s397 + $0x1560] sm:$0xff]
        %v1299 = vld [vmem:[%s397 + $0x1568] sm:$0xff]
        %v1300 = vld [vmem:[%s397 + $0x1570] sm:$0xff]
        %v1301 = vld [vmem:[%s397 + $0x1578] sm:$0xff]
        %v1302 = vld [vmem:[%s397 + $0x1580] sm:$0xff]
        %v1303 = vld [vmem:[%s397 + $0x1588] sm:$0xff]
        %v1304 = vld [vmem:[%s397 + $0x1590] sm:$0xff]
        %v1305 = vld [vmem:[%s397 + $0x1598] sm:$0xff]
        %v1306 = vld [vmem:[%s397 + $0x15a0] sm:$0xff]
        %v1307 = vld [vmem:[%s397 + $0x15a8] sm:$0xff]
        %v1308 = vld [vmem:[%s397 + $0x15b0] sm:$0xff]
        %v1309 = vld [vmem:[%s397 + $0x15b8] sm:$0xff]
        %v1310 = vld [vmem:[%s397 + $0x15c0] sm:$0xff]
        %v1311 = vld [vmem:[%s397 + $0x15c8] sm:$0xff]
        %v1312 = vld [vmem:[%s397 + $0x15d0] sm:$0xff]
        %v1313 = vld [vmem:[%s397 + $0x15d8] sm:$0xff]
        %v1314 = vld [vmem:[%s397 + $0x15e0] sm:$0xff]
        %v1315 = vld [vmem:[%s397 + $0x15e8] sm:$0xff]
        %v1316 = vld [vmem:[%s397 + $0x15f0] sm:$0xff]
        %v1317 = vld [vmem:[%s397 + $0x15f8] sm:$0xff]
        %v1318 = vld [vmem:[%s397 + $0x1600] sm:$0xff]
        %v1319 = vld [vmem:[%s397 + $0x1608] sm:$0xff]
        %v1320 = vld [vmem:[%s397 + $0x1610] sm:$0xff]
        %v1321 = vld [vmem:[%s397 + $0x1618] sm:$0xff]
        %v1322 = vld [vmem:[%s397 + $0x1620] sm:$0xff]
        %v1323 = vld [vmem:[%s397 + $0x1628] sm:$0xff]
        %v1324 = vld [vmem:[%s397 + $0x1630] sm:$0xff]
        %v1325 = vld [vmem:[%s397 + $0x1638] sm:$0xff]
        %v1326 = vld [vmem:[%s397 + $0x1640] sm:$0xff]
        %v1327 = vld [vmem:[%s397 + $0x1648] sm:$0xff]
        %v1328 = vld [vmem:[%s397 + $0x1650] sm:$0xff]
        %v1329 = vld [vmem:[%s397 + $0x1658] sm:$0xff]
        %v1330 = vld [vmem:[%s397 + $0x1660] sm:$0xff]
        %v1331 = vld [vmem:[%s397 + $0x1668] sm:$0xff]
        %v1332 = vld [vmem:[%s397 + $0x1670] sm:$0xff]
        %v1333 = vld [vmem:[%s397 + $0x1678] sm:$0xff]
        %v1334 = vld [vmem:[%s397 + $0x1680] sm:$0xff]
        %v1335 = vld [vmem:[%s397 + $0x1688] sm:$0xff]
        %v1336 = vld [vmem:[%s397 + $0x1690] sm:$0xff]
        %v1337 = vld [vmem:[%s397 + $0x1698] sm:$0xff]
        %v1338 = vld [vmem:[%s397 + $0x16a0] sm:$0xff]
        %v1339 = vld [vmem:[%s397 + $0x16a8] sm:$0xff]
        %v1340 = vld [vmem:[%s397 + $0x16b0] sm:$0xff]
        %v1341 = vld [vmem:[%s397 + $0x16b8] sm:$0xff]
        %v1342 = vld [vmem:[%s397 + $0x16c0] sm:$0xff]
        %v1343 = vld [vmem:[%s397 + $0x16c8] sm:$0xff]
        %v1344 = vld [vmem:[%s397 + $0x16d0] sm:$0xff]
        %v1345 = vld [vmem:[%s397 + $0x16d8] sm:$0xff]
        %v1346 = vld [vmem:[%s397 + $0x16e0] sm:$0xff]
        %v1347 = vld [vmem:[%s397 + $0x16e8] sm:$0xff]
        %v1348 = vld [vmem:[%s397 + $0x16f0] sm:$0xff]
        %v1349 = vld [vmem:[%s397 + $0x16f8] sm:$0xff]
        %v1350 = vld [vmem:[%s397 + $0x1700] sm:$0xff]
        %v1351 = vld [vmem:[%s397 + $0x1708] sm:$0xff]
        %v1352 = vld [vmem:[%s397 + $0x1710] sm:$0xff]
        %v1353 = vld [vmem:[%s397 + $0x1718] sm:$0xff]
        %v1354 = vld [vmem:[%s397 + $0x1720] sm:$0xff]
        %v1355 = vld [vmem:[%s397 + $0x1728] sm:$0xff]
        %v1356 = vld [vmem:[%s397 + $0x1730] sm:$0xff]
        %v1357 = vld [vmem:[%s397 + $0x1738] sm:$0xff]
        %v1358 = vld [vmem:[%s397 + $0x1740] sm:$0xff]
        %v1359 = vld [vmem:[%s397 + $0x1748] sm:$0xff]
        %v1360 = vld [vmem:[%s397 + $0x1750] sm:$0xff]
        %v1361 = vld [vmem:[%s397 + $0x1758] sm:$0xff]
        %v1362 = vld [vmem:[%s397 + $0x1760] sm:$0xff]
        %v1363 = vld [vmem:[%s397 + $0x1768] sm:$0xff]
        %v1364 = vld [vmem:[%s397 + $0x1770] sm:$0xff]
        %v1365 = vld [vmem:[%s397 + $0x1778] sm:$0xff]
        %v1366 = vld [vmem:[%s397 + $0x1780] sm:$0xff]
        %v1367 = vld [vmem:[%s397 + $0x1788] sm:$0xff]
        %v1368 = vld [vmem:[%s397 + $0x1790] sm:$0xff]
        %v1369 = vld [vmem:[%s397 + $0x1798] sm:$0xff]
        %v1370 = vld [vmem:[%s397 + $0x17a0] sm:$0xff]
        %v1371 = vld [vmem:[%s397 + $0x17a8] sm:$0xff]
        %v1372 = vld [vmem:[%s397 + $0x17b0] sm:$0xff]
        %v1373 = vld [vmem:[%s397 + $0x17b8] sm:$0xff]
        %v1374 = vld [vmem:[%s397 + $0x17c0] sm:$0xff]
        %v1375 = vld [vmem:[%s397 + $0x17c8] sm:$0xff]
        %v1376 = vld [vmem:[%s397 + $0x17d0] sm:$0xff]
        %v1377 = vld [vmem:[%s397 + $0x17d8] sm:$0xff]
        %v1378 = vld [vmem:[%s397 + $0x17e0] sm:$0xff]
        %v1379 = vld [vmem:[%s397 + $0x17e8] sm:$0xff]
        %v1380 = vld [vmem:[%s397 + $0x17f0] sm:$0xff]
        %v1381 = vld [vmem:[%s397 + $0x17f8] sm:$0xff]
        %v1394 = vunpack.c.l.b16 %v602
        %v1395 = vunpack.c.h.b16 %v602
        %v1396 = vunpack.c.l.b16 %v603
        %v1397 = vunpack.c.h.b16 %v603
        %v1398 = vunpack.c.l.b16 %v604
        %v1399 = vunpack.c.h.b16 %v604
        %v1400 = vunpack.c.l.b16 %v605
        %v1401 = vunpack.c.h.b16 %v605
        %v1402 = vunpack.c.l.b16 %v606
        %v1403 = vunpack.c.h.b16 %v606
        %v1404 = vunpack.c.l.b16 %v607
        %v1405 = vunpack.c.h.b16 %v607
        %v1406 = vunpack.c.l.b16 %v608
        %v1407 = vunpack.c.h.b16 %v608
        %v1408 = vunpack.c.l.b16 %v609
        %v1409 = vunpack.c.h.b16 %v609
        %v1410 = vunpack.c.l.b16 %v610
        %v1411 = vunpack.c.h.b16 %v610
        %v1412 = vunpack.c.l.b16 %v611
        %v1413 = vunpack.c.h.b16 %v611
        %v1414 = vunpack.c.l.b16 %v612
        %v1415 = vunpack.c.h.b16 %v612
        %v1416 = vunpack.c.l.b16 %v613
        %v1417 = vunpack.c.h.b16 %v613
        %v1418 = vpack.c.b16 %v1394, %v1394
        %v1419 = vpack.c.b16 %v1395, %v1395
        %v1420 = vpack.c.b16 %v1396, %v1396
        %v1421 = vpack.c.b16 %v1397, %v1397
        %v1422 = vpack.c.b16 %v1398, %v1398
        %v1423 = vpack.c.b16 %v1399, %v1399
        %v1424 = vpack.c.b16 %v1400, %v1400
        %v1425 = vpack.c.b16 %v1401, %v1401
        %v1426 = vpack.c.b16 %v1402, %v1402
        %v1427 = vpack.c.b16 %v1403, %v1403
        %v1428 = vpack.c.b16 %v1404, %v1404
        %v1429 = vpack.c.b16 %v1405, %v1405
        %v1430 = vpack.c.b16 %v1406, %v1406
        %v1431 = vpack.c.b16 %v1407, %v1407
        %v1432 = vpack.c.b16 %v1408, %v1408
        %v1433 = vpack.c.b16 %v1409, %v1409
        %v1434 = vpack.c.b16 %v1410, %v1410
        %v1435 = vpack.c.b16 %v1411, %v1411
        %v1436 = vpack.c.b16 %v1412, %v1412
        %v1437 = vpack.c.b16 %v1413, %v1413
        %v1438 = vpack.c.b16 %v1414, %v1414
        %v1439 = vpack.c.b16 %v1415, %v1415
        %v1440 = vpack.c.b16 %v1416, %v1416
        %v1441 = vpack.c.b16 %v1417, %v1417
        %v2234 = vunpack.c.l.b16 %v614
        %v2235 = vunpack.c.h.b16 %v614
        %v2236 = vunpack.c.l.b16 %v615
        %v2237 = vunpack.c.h.b16 %v615
        %v2238 = vunpack.c.l.b16 %v616
        %v2239 = vunpack.c.h.b16 %v616
        %v2240 = vunpack.c.l.b16 %v617
        %v2241 = vunpack.c.h.b16 %v617
        %v2242 = vunpack.c.l.b16 %v618
        %v2243 = vunpack.c.h.b16 %v618
        %v2244 = vunpack.c.l.b16 %v619
        %v2245 = vunpack.c.h.b16 %v619
        %v2246 = vunpack.c.l.b16 %v620
        %v2247 = vunpack.c.h.b16 %v620
        %v2248 = vunpack.c.l.b16 %v621
        %v2249 = vunpack.c.h.b16 %v621
        %v2250 = vunpack.c.l.b16 %v622
        %v2251 = vunpack.c.h.b16 %v622
        %v2252 = vunpack.c.l.b16 %v623
        %v2253 = vunpack.c.h.b16 %v623
        %v2254 = vunpack.c.l.b16 %v624
        %v2255 = vunpack.c.h.b16 %v624
        %v2256 = vunpack.c.l.b16 %v625
        %v2257 = vunpack.c.h.b16 %v625
        %v2258 = vunpack.c.l.b16 %v626
        %v2259 = vunpack.c.h.b16 %v626
        %v2260 = vunpack.c.l.b16 %v627
        %v2261 = vunpack.c.h.b16 %v627
        %v2262 = vunpack.c.l.b16 %v628
        %v2263 = vunpack.c.h.b16 %v628
        %v2264 = vunpack.c.l.b16 %v629
        %v2265 = vunpack.c.h.b16 %v629
        %v2266 = vunpack.c.l.b16 %v630
        %v2267 = vunpack.c.h.b16 %v630
        %v2268 = vunpack.c.l.b16 %v631
        %v2269 = vunpack.c.h.b16 %v631
        %v2270 = vunpack.c.l.b16 %v632
        %v2271 = vunpack.c.h.b16 %v632
        %v2272 = vunpack.c.l.b16 %v633
        %v2273 = vunpack.c.h.b16 %v633
        %v2274 = vunpack.c.l.b16 %v634
        %v2275 = vunpack.c.h.b16 %v634
        %v2276 = vunpack.c.l.b16 %v635
        %v2277 = vunpack.c.h.b16 %v635
        %v2278 = vunpack.c.l.b16 %v636
        %v2279 = vunpack.c.h.b16 %v636
        %v2280 = vunpack.c.l.b16 %v637
        %v2281 = vunpack.c.h.b16 %v637
        %v2282 = vunpack.c.l.b16 %v638
        %v2283 = vunpack.c.h.b16 %v638
        %v2284 = vunpack.c.l.b16 %v639
        %v2285 = vunpack.c.h.b16 %v639
        %v2286 = vunpack.c.l.b16 %v640
        %v2287 = vunpack.c.h.b16 %v640
        %v2288 = vunpack.c.l.b16 %v641
        %v2289 = vunpack.c.h.b16 %v641
        %v2290 = vunpack.c.l.b16 %v642
        %v2291 = vunpack.c.h.b16 %v642
        %v2292 = vunpack.c.l.b16 %v643
        %v2293 = vunpack.c.h.b16 %v643
        %v2294 = vunpack.c.l.b16 %v644
        %v2295 = vunpack.c.h.b16 %v644
        %v2296 = vunpack.c.l.b16 %v645
        %v2297 = vunpack.c.h.b16 %v645
        %v2298 = vunpack.c.l.b16 %v646
        %v2299 = vunpack.c.h.b16 %v646
        %v2300 = vunpack.c.l.b16 %v647
        %v2301 = vunpack.c.h.b16 %v647
        %v2302 = vunpack.c.l.b16 %v648
        %v2303 = vunpack.c.h.b16 %v648
        %v2304 = vunpack.c.l.b16 %v649
        %v2305 = vunpack.c.h.b16 %v649
        %v2306 = vunpack.c.l.b16 %v650
        %v2307 = vunpack.c.h.b16 %v650
        %v2308 = vunpack.c.l.b16 %v651
        %v2309 = vunpack.c.h.b16 %v651
        %v2310 = vunpack.c.l.b16 %v652
        %v2311 = vunpack.c.h.b16 %v652
        %v2312 = vunpack.c.l.b16 %v653
        %v2313 = vunpack.c.h.b16 %v653
        %v2314 = vunpack.c.l.b16 %v654
        %v2315 = vunpack.c.h.b16 %v654
        %v2316 = vunpack.c.l.b16 %v655
        %v2317 = vunpack.c.h.b16 %v655
        %v2318 = vunpack.c.l.b16 %v656
        %v2319 = vunpack.c.h.b16 %v656
        %v2320 = vunpack.c.l.b16 %v657
        %v2321 = vunpack.c.h.b16 %v657
        %v2322 = vunpack.c.l.b16 %v658
        %v2323 = vunpack.c.h.b16 %v658
        %v2324 = vunpack.c.l.b16 %v659
        %v2325 = vunpack.c.h.b16 %v659
        %v2326 = vunpack.c.l.b16 %v660
        %v2327 = vunpack.c.h.b16 %v660
        %v2328 = vunpack.c.l.b16 %v661
        %v2329 = vunpack.c.h.b16 %v661
        %v2330 = vunpack.c.l.b16 %v662
        %v2331 = vunpack.c.h.b16 %v662
        %v2332 = vunpack.c.l.b16 %v663
        %v2333 = vunpack.c.h.b16 %v663
        %v2334 = vunpack.c.l.b16 %v664
        %v2335 = vunpack.c.h.b16 %v664
        %v2336 = vunpack.c.l.b16 %v665
        %v2337 = vunpack.c.h.b16 %v665
        %v2338 = vunpack.c.l.b16 %v666
        %v2339 = vunpack.c.h.b16 %v666
        %v2340 = vunpack.c.l.b16 %v667
        %v2341 = vunpack.c.h.b16 %v667
        %v2342 = vunpack.c.l.b16 %v668
        %v2343 = vunpack.c.h.b16 %v668
        %v2344 = vunpack.c.l.b16 %v669
        %v2345 = vunpack.c.h.b16 %v669
        %v2346 = vunpack.c.l.b16 %v670
        %v2347 = vunpack.c.h.b16 %v670
        %v2348 = vunpack.c.l.b16 %v671
        %v2349 = vunpack.c.h.b16 %v671
        %v2350 = vunpack.c.l.b16 %v672
        %v2351 = vunpack.c.h.b16 %v672
        %v2352 = vunpack.c.l.b16 %v673
        %v2353 = vunpack.c.h.b16 %v673
        %v2354 = vunpack.c.l.b16 %v674
        %v2355 = vunpack.c.h.b16 %v674
        %v2356 = vunpack.c.l.b16 %v675
        %v2357 = vunpack.c.h.b16 %v675
        %v2358 = vunpack.c.l.b16 %v676
        %v2359 = vunpack.c.h.b16 %v676
        %v2360 = vunpack.c.l.b16 %v677
        %v2361 = vunpack.c.h.b16 %v677
        %v2362 = vunpack.c.l.b16 %v678
        %v2363 = vunpack.c.h.b16 %v678
        %v2364 = vunpack.c.l.b16 %v679
        %v2365 = vunpack.c.h.b16 %v679
        %v2366 = vunpack.c.l.b16 %v680
        %v2367 = vunpack.c.h.b16 %v680
        %v2368 = vunpack.c.l.b16 %v681
        %v2369 = vunpack.c.h.b16 %v681
        %v2370 = vunpack.c.l.b16 %v682
        %v2371 = vunpack.c.h.b16 %v682
        %v2372 = vunpack.c.l.b16 %v683
        %v2373 = vunpack.c.h.b16 %v683
        %v2374 = vunpack.c.l.b16 %v684
        %v2375 = vunpack.c.h.b16 %v684
        %v2376 = vunpack.c.l.b16 %v685
        %v2377 = vunpack.c.h.b16 %v685
        %v2378 = vunpack.c.l.b16 %v686
        %v2379 = vunpack.c.h.b16 %v686
        %v2380 = vunpack.c.l.b16 %v687
        %v2381 = vunpack.c.h.b16 %v687
        %v2382 = vunpack.c.l.b16 %v688
        %v2383 = vunpack.c.h.b16 %v688
        %v2384 = vunpack.c.l.b16 %v689
        %v2385 = vunpack.c.h.b16 %v689
        %v2386 = vunpack.c.l.b16 %v690
        %v2387 = vunpack.c.h.b16 %v690
        %v2388 = vunpack.c.l.b16 %v691
        %v2389 = vunpack.c.h.b16 %v691
        %v2390 = vunpack.c.l.b16 %v692
        %v2391 = vunpack.c.h.b16 %v692
        %v2392 = vunpack.c.l.b16 %v693
        %v2393 = vunpack.c.h.b16 %v693
        %v2394 = vunpack.c.l.b16 %v694
        %v2395 = vunpack.c.h.b16 %v694
        %v2396 = vunpack.c.l.b16 %v695
        %v2397 = vunpack.c.h.b16 %v695
        %v2398 = vunpack.c.l.b16 %v696
        %v2399 = vunpack.c.h.b16 %v696
        %v2400 = vunpack.c.l.b16 %v697
        %v2401 = vunpack.c.h.b16 %v697
        %v2402 = vunpack.c.l.b16 %v698
        %v2403 = vunpack.c.h.b16 %v698
        %v2404 = vunpack.c.l.b16 %v699
        %v2405 = vunpack.c.h.b16 %v699
        %v2406 = vunpack.c.l.b16 %v700
        %v2407 = vunpack.c.h.b16 %v700
        %v2408 = vunpack.c.l.b16 %v701
        %v2409 = vunpack.c.h.b16 %v701
        %v2410 = vunpack.c.l.b16 %v702
        %v2411 = vunpack.c.h.b16 %v702
        %v2412 = vunpack.c.l.b16 %v703
        %v2413 = vunpack.c.h.b16 %v703
        %v2414 = vunpack.c.l.b16 %v704
        %v2415 = vunpack.c.h.b16 %v704
        %v2416 = vunpack.c.l.b16 %v705
        %v2417 = vunpack.c.h.b16 %v705
        %v2418 = vunpack.c.l.b16 %v706
        %v2419 = vunpack.c.h.b16 %v706
        %v2420 = vunpack.c.l.b16 %v707
        %v2421 = vunpack.c.h.b16 %v707
        %v2422 = vunpack.c.l.b16 %v708
        %v2423 = vunpack.c.h.b16 %v708
        %v2424 = vunpack.c.l.b16 %v709
        %v2425 = vunpack.c.h.b16 %v709
        %v2426 = vunpack.c.l.b16 %v710
        %v2427 = vunpack.c.h.b16 %v710
        %v2428 = vunpack.c.l.b16 %v711
        %v2429 = vunpack.c.h.b16 %v711
        %v2430 = vunpack.c.l.b16 %v712
        %v2431 = vunpack.c.h.b16 %v712
        %v2432 = vunpack.c.l.b16 %v713
        %v2433 = vunpack.c.h.b16 %v713
        %v2434 = vunpack.c.l.b16 %v714
        %v2435 = vunpack.c.h.b16 %v714
        %v2436 = vunpack.c.l.b16 %v715
        %v2437 = vunpack.c.h.b16 %v715
        %v2438 = vunpack.c.l.b16 %v716
        %v2439 = vunpack.c.h.b16 %v716
        %v2440 = vunpack.c.l.b16 %v717
        %v2441 = vunpack.c.h.b16 %v717
        %v2442 = vunpack.c.l.b16 %v718
        %v2443 = vunpack.c.h.b16 %v718
        %v2444 = vunpack.c.l.b16 %v719
        %v2445 = vunpack.c.h.b16 %v719
        %v2446 = vunpack.c.l.b16 %v720
        %v2447 = vunpack.c.h.b16 %v720
        %v2448 = vunpack.c.l.b16 %v721
        %v2449 = vunpack.c.h.b16 %v721
        %v2450 = vunpack.c.l.b16 %v722
        %v2451 = vunpack.c.h.b16 %v722
        %v2452 = vunpack.c.l.b16 %v723
        %v2453 = vunpack.c.h.b16 %v723
        %v2454 = vunpack.c.l.b16 %v724
        %v2455 = vunpack.c.h.b16 %v724
        %v2456 = vunpack.c.l.b16 %v725
        %v2457 = vunpack.c.h.b16 %v725
        %v2458 = vunpack.c.l.b16 %v726
        %v2459 = vunpack.c.h.b16 %v726
        %v2460 = vunpack.c.l.b16 %v727
        %v2461 = vunpack.c.h.b16 %v727
        %v2462 = vunpack.c.l.b16 %v728
        %v2463 = vunpack.c.h.b16 %v728
        %v2464 = vunpack.c.l.b16 %v729
        %v2465 = vunpack.c.h.b16 %v729
        %v2466 = vunpack.c.l.b16 %v730
        %v2467 = vunpack.c.h.b16 %v730
        %v2468 = vunpack.c.l.b16 %v731
        %v2469 = vunpack.c.h.b16 %v731
        %v2470 = vunpack.c.l.b16 %v732
        %v2471 = vunpack.c.h.b16 %v732
        %v2472 = vunpack.c.l.b16 %v733
        %v2473 = vunpack.c.h.b16 %v733
        %v2474 = vunpack.c.l.b16 %v734
        %v2475 = vunpack.c.h.b16 %v734
        %v2476 = vunpack.c.l.b16 %v735
        %v2477 = vunpack.c.h.b16 %v735
        %v2478 = vunpack.c.l.b16 %v736
        %v2479 = vunpack.c.h.b16 %v736
        %v2480 = vunpack.c.l.b16 %v737
        %v2481 = vunpack.c.h.b16 %v737
        %v2482 = vunpack.c.l.b16 %v738
        %v2483 = vunpack.c.h.b16 %v738
        %v2484 = vunpack.c.l.b16 %v739
        %v2485 = vunpack.c.h.b16 %v739
        %v2486 = vunpack.c.l.b16 %v740
        %v2487 = vunpack.c.h.b16 %v740
        %v2488 = vunpack.c.l.b16 %v741
        %v2489 = vunpack.c.h.b16 %v741
        %v2490 = vunpack.c.l.b16 %v742
        %v2491 = vunpack.c.h.b16 %v742
        %v2492 = vunpack.c.l.b16 %v743
        %v2493 = vunpack.c.h.b16 %v743
        %v2494 = vunpack.c.l.b16 %v744
        %v2495 = vunpack.c.h.b16 %v744
        %v2496 = vunpack.c.l.b16 %v745
        %v2497 = vunpack.c.h.b16 %v745
        %v2498 = vunpack.c.l.b16 %v746
        %v2499 = vunpack.c.h.b16 %v746
        %v2500 = vunpack.c.l.b16 %v747
        %v2501 = vunpack.c.h.b16 %v747
        %v2502 = vunpack.c.l.b16 %v748
        %v2503 = vunpack.c.h.b16 %v748
        %v2504 = vunpack.c.l.b16 %v749
        %v2505 = vunpack.c.h.b16 %v749
        %v2506 = vunpack.c.l.b16 %v750
        %v2507 = vunpack.c.h.b16 %v750
        %v2508 = vunpack.c.l.b16 %v751
        %v2509 = vunpack.c.h.b16 %v751
        %v2510 = vunpack.c.l.b16 %v752
        %v2511 = vunpack.c.h.b16 %v752
        %v2512 = vunpack.c.l.b16 %v753
        %v2513 = vunpack.c.h.b16 %v753
        %v2514 = vunpack.c.l.b16 %v754
        %v2515 = vunpack.c.h.b16 %v754
        %v2516 = vunpack.c.l.b16 %v755
        %v2517 = vunpack.c.h.b16 %v755
        %v2518 = vunpack.c.l.b16 %v756
        %v2519 = vunpack.c.h.b16 %v756
        %v2520 = vunpack.c.l.b16 %v757
        %v2521 = vunpack.c.h.b16 %v757
        %v2522 = vunpack.c.l.b16 %v758
        %v2523 = vunpack.c.h.b16 %v758
        %v2524 = vunpack.c.l.b16 %v759
        %v2525 = vunpack.c.h.b16 %v759
        %v2526 = vunpack.c.l.b16 %v760
        %v2527 = vunpack.c.h.b16 %v760
        %v2528 = vunpack.c.l.b16 %v761
        %v2529 = vunpack.c.h.b16 %v761
        %v2530 = vunpack.c.l.b16 %v762
        %v2531 = vunpack.c.h.b16 %v762
        %v2532 = vunpack.c.l.b16 %v763
        %v2533 = vunpack.c.h.b16 %v763
        %v2534 = vunpack.c.l.b16 %v764
        %v2535 = vunpack.c.h.b16 %v764
        %v2536 = vunpack.c.l.b16 %v765
        %v2537 = vunpack.c.h.b16 %v765
        %v2538 = vunpack.c.l.b16 %v766
        %v2539 = vunpack.c.h.b16 %v766
        %v2540 = vunpack.c.l.b16 %v767
        %v2541 = vunpack.c.h.b16 %v767
        %v2542 = vunpack.c.l.b16 %v768
        %v2543 = vunpack.c.h.b16 %v768
        %v2544 = vunpack.c.l.b16 %v769
        %v2545 = vunpack.c.h.b16 %v769
        %v2546 = vunpack.c.l.b16 %v770
        %v2547 = vunpack.c.h.b16 %v770
        %v2548 = vunpack.c.l.b16 %v771
        %v2549 = vunpack.c.h.b16 %v771
        %v2550 = vunpack.c.l.b16 %v772
        %v2551 = vunpack.c.h.b16 %v772
        %v2552 = vunpack.c.l.b16 %v773
        %v2553 = vunpack.c.h.b16 %v773
        %v2554 = vunpack.c.l.b16 %v774
        %v2555 = vunpack.c.h.b16 %v774
        %v2556 = vunpack.c.l.b16 %v775
        %v2557 = vunpack.c.h.b16 %v775
        %v2558 = vunpack.c.l.b16 %v776
        %v2559 = vunpack.c.h.b16 %v776
        %v2560 = vunpack.c.l.b16 %v777
        %v2561 = vunpack.c.h.b16 %v777
        %v2562 = vunpack.c.l.b16 %v778
        %v2563 = vunpack.c.h.b16 %v778
        %v2564 = vunpack.c.l.b16 %v779
        %v2565 = vunpack.c.h.b16 %v779
        %v2566 = vunpack.c.l.b16 %v780
        %v2567 = vunpack.c.h.b16 %v780
        %v2568 = vunpack.c.l.b16 %v781
        %v2569 = vunpack.c.h.b16 %v781
        %v2570 = vunpack.c.l.b16 %v782
        %v2571 = vunpack.c.h.b16 %v782
        %v2572 = vunpack.c.l.b16 %v783
        %v2573 = vunpack.c.h.b16 %v783
        %v2574 = vunpack.c.l.b16 %v784
        %v2575 = vunpack.c.h.b16 %v784
        %v2576 = vunpack.c.l.b16 %v785
        %v2577 = vunpack.c.h.b16 %v785
        %v2578 = vunpack.c.l.b16 %v786
        %v2579 = vunpack.c.h.b16 %v786
        %v2580 = vunpack.c.l.b16 %v787
        %v2581 = vunpack.c.h.b16 %v787
        %v2582 = vunpack.c.l.b16 %v788
        %v2583 = vunpack.c.h.b16 %v788
        %v2584 = vunpack.c.l.b16 %v789
        %v2585 = vunpack.c.h.b16 %v789
        %v2586 = vunpack.c.l.b16 %v790
        %v2587 = vunpack.c.h.b16 %v790
        %v2588 = vunpack.c.l.b16 %v791
        %v2589 = vunpack.c.h.b16 %v791
        %v2590 = vunpack.c.l.b16 %v792
        %v2591 = vunpack.c.h.b16 %v792
        %v2592 = vunpack.c.l.b16 %v793
        %v2593 = vunpack.c.h.b16 %v793
        %v2594 = vunpack.c.l.b16 %v794
        %v2595 = vunpack.c.h.b16 %v794
        %v2596 = vunpack.c.l.b16 %v795
        %v2597 = vunpack.c.h.b16 %v795
        %v2598 = vunpack.c.l.b16 %v796
        %v2599 = vunpack.c.h.b16 %v796
        %v2600 = vunpack.c.l.b16 %v797
        %v2601 = vunpack.c.h.b16 %v797
        %v2602 = vunpack.c.l.b16 %v798
        %v2603 = vunpack.c.h.b16 %v798
        %v2604 = vunpack.c.l.b16 %v799
        %v2605 = vunpack.c.h.b16 %v799
        %v2606 = vunpack.c.l.b16 %v800
        %v2607 = vunpack.c.h.b16 %v800
        %v2608 = vunpack.c.l.b16 %v801
        %v2609 = vunpack.c.h.b16 %v801
        %v2610 = vunpack.c.l.b16 %v802
        %v2611 = vunpack.c.h.b16 %v802
        %v2612 = vunpack.c.l.b16 %v803
        %v2613 = vunpack.c.h.b16 %v803
        %v2614 = vunpack.c.l.b16 %v804
        %v2615 = vunpack.c.h.b16 %v804
        %v2616 = vunpack.c.l.b16 %v805
        %v2617 = vunpack.c.h.b16 %v805
        %v2618 = vunpack.c.l.b16 %v806
        %v2619 = vunpack.c.h.b16 %v806
        %v2620 = vunpack.c.l.b16 %v807
        %v2621 = vunpack.c.h.b16 %v807
        %v2622 = vunpack.c.l.b16 %v808
        %v2623 = vunpack.c.h.b16 %v808
        %v2624 = vunpack.c.l.b16 %v809
        %v2625 = vunpack.c.h.b16 %v809
        %v2626 = vunpack.c.l.b16 %v810
        %v2627 = vunpack.c.h.b16 %v810
        %v2628 = vunpack.c.l.b16 %v811
        %v2629 = vunpack.c.h.b16 %v811
        %v2630 = vunpack.c.l.b16 %v812
        %v2631 = vunpack.c.h.b16 %v812
        %v2632 = vunpack.c.l.b16 %v813
        %v2633 = vunpack.c.h.b16 %v813
        %v2634 = vunpack.c.l.b16 %v814
        %v2635 = vunpack.c.h.b16 %v814
        %v2636 = vunpack.c.l.b16 %v815
        %v2637 = vunpack.c.h.b16 %v815
        %v2638 = vunpack.c.l.b16 %v816
        %v2639 = vunpack.c.h.b16 %v816
        %v2640 = vunpack.c.l.b16 %v817
        %v2641 = vunpack.c.h.b16 %v817
        %v2642 = vunpack.c.l.b16 %v818
        %v2643 = vunpack.c.h.b16 %v818
        %v2644 = vunpack.c.l.b16 %v819
        %v2645 = vunpack.c.h.b16 %v819
        %v2646 = vunpack.c.l.b16 %v820
        %v2647 = vunpack.c.h.b16 %v820
        %v2648 = vunpack.c.l.b16 %v821
        %v2649 = vunpack.c.h.b16 %v821
        %v2650 = vunpack.c.l.b16 %v822
        %v2651 = vunpack.c.h.b16 %v822
        %v2652 = vunpack.c.l.b16 %v823
        %v2653 = vunpack.c.h.b16 %v823
        %v2654 = vunpack.c.l.b16 %v824
        %v2655 = vunpack.c.h.b16 %v824
        %v2656 = vunpack.c.l.b16 %v825
        %v2657 = vunpack.c.h.b16 %v825
        %v2658 = vunpack.c.l.b16 %v826
        %v2659 = vunpack.c.h.b16 %v826
        %v2660 = vunpack.c.l.b16 %v827
        %v2661 = vunpack.c.h.b16 %v827
        %v2662 = vunpack.c.l.b16 %v828
        %v2663 = vunpack.c.h.b16 %v828
        %v2664 = vunpack.c.l.b16 %v829
        %v2665 = vunpack.c.h.b16 %v829
        %v2666 = vunpack.c.l.b16 %v830
        %v2667 = vunpack.c.h.b16 %v830
        %v2668 = vunpack.c.l.b16 %v831
        %v2669 = vunpack.c.h.b16 %v831
        %v2670 = vunpack.c.l.b16 %v832
        %v2671 = vunpack.c.h.b16 %v832
        %v2672 = vunpack.c.l.b16 %v833
        %v2673 = vunpack.c.h.b16 %v833
        %v2674 = vunpack.c.l.b16 %v834
        %v2675 = vunpack.c.h.b16 %v834
        %v2676 = vunpack.c.l.b16 %v835
        %v2677 = vunpack.c.h.b16 %v835
        %v2678 = vunpack.c.l.b16 %v836
        %v2679 = vunpack.c.h.b16 %v836
        %v2680 = vunpack.c.l.b16 %v837
        %v2681 = vunpack.c.h.b16 %v837
        %v2682 = vunpack.c.l.b16 %v838
        %v2683 = vunpack.c.h.b16 %v838
        %v2684 = vunpack.c.l.b16 %v839
        %v2685 = vunpack.c.h.b16 %v839
        %v2686 = vunpack.c.l.b16 %v840
        %v2687 = vunpack.c.h.b16 %v840
        %v2688 = vunpack.c.l.b16 %v841
        %v2689 = vunpack.c.h.b16 %v841
        %v2690 = vunpack.c.l.b16 %v842
        %v2691 = vunpack.c.h.b16 %v842
        %v2692 = vunpack.c.l.b16 %v843
        %v2693 = vunpack.c.h.b16 %v843
        %v2694 = vunpack.c.l.b16 %v844
        %v2695 = vunpack.c.h.b16 %v844
        %v2696 = vunpack.c.l.b16 %v845
        %v2697 = vunpack.c.h.b16 %v845
        %v2698 = vunpack.c.l.b16 %v846
        %v2699 = vunpack.c.h.b16 %v846
        %v2700 = vunpack.c.l.b16 %v847
        %v2701 = vunpack.c.h.b16 %v847
        %v2702 = vunpack.c.l.b16 %v848
        %v2703 = vunpack.c.h.b16 %v848
        %v2704 = vunpack.c.l.b16 %v849
        %v2705 = vunpack.c.h.b16 %v849
        %v2706 = vunpack.c.l.b16 %v850
        %v2707 = vunpack.c.h.b16 %v850
        %v2708 = vunpack.c.l.b16 %v851
        %v2709 = vunpack.c.h.b16 %v851
        %v2710 = vunpack.c.l.b16 %v852
        %v2711 = vunpack.c.h.b16 %v852
        %v2712 = vunpack.c.l.b16 %v853
        %v2713 = vunpack.c.h.b16 %v853
        %v2714 = vunpack.c.l.b16 %v854
        %v2715 = vunpack.c.h.b16 %v854
        %v2716 = vunpack.c.l.b16 %v855
        %v2717 = vunpack.c.h.b16 %v855
        %v2718 = vunpack.c.l.b16 %v856
        %v2719 = vunpack.c.h.b16 %v856
        %v2720 = vunpack.c.l.b16 %v857
        %v2721 = vunpack.c.h.b16 %v857
        %v2722 = vunpack.c.l.b16 %v858
        %v2723 = vunpack.c.h.b16 %v858
        %v2724 = vunpack.c.l.b16 %v859
        %v2725 = vunpack.c.h.b16 %v859
        %v2726 = vunpack.c.l.b16 %v860
        %v2727 = vunpack.c.h.b16 %v860
        %v2728 = vunpack.c.l.b16 %v861
        %v2729 = vunpack.c.h.b16 %v861
        %v2730 = vunpack.c.l.b16 %v862
        %v2731 = vunpack.c.h.b16 %v862
        %v2732 = vunpack.c.l.b16 %v863
        %v2733 = vunpack.c.h.b16 %v863
        %v2734 = vunpack.c.l.b16 %v864
        %v2735 = vunpack.c.h.b16 %v864
        %v2736 = vunpack.c.l.b16 %v865
        %v2737 = vunpack.c.h.b16 %v865
        %v2738 = vunpack.c.l.b16 %v866
        %v2739 = vunpack.c.h.b16 %v866
        %v2740 = vunpack.c.l.b16 %v867
        %v2741 = vunpack.c.h.b16 %v867
        %v2742 = vunpack.c.l.b16 %v868
        %v2743 = vunpack.c.h.b16 %v868
        %v2744 = vunpack.c.l.b16 %v869
        %v2745 = vunpack.c.h.b16 %v869
        %v2746 = vunpack.c.l.b16 %v870
        %v2747 = vunpack.c.h.b16 %v870
        %v2748 = vunpack.c.l.b16 %v871
        %v2749 = vunpack.c.h.b16 %v871
        %v2750 = vunpack.c.l.b16 %v872
        %v2751 = vunpack.c.h.b16 %v872
        %v2752 = vunpack.c.l.b16 %v873
        %v2753 = vunpack.c.h.b16 %v873
        %v2754 = vunpack.c.l.b16 %v874
        %v2755 = vunpack.c.h.b16 %v874
        %v2756 = vunpack.c.l.b16 %v875
        %v2757 = vunpack.c.h.b16 %v875
        %v2758 = vunpack.c.l.b16 %v876
        %v2759 = vunpack.c.h.b16 %v876
        %v2760 = vunpack.c.l.b16 %v877
        %v2761 = vunpack.c.h.b16 %v877
        %v2762 = vunpack.c.l.b16 %v878
        %v2763 = vunpack.c.h.b16 %v878
        %v2764 = vunpack.c.l.b16 %v879
        %v2765 = vunpack.c.h.b16 %v879
        %v2766 = vunpack.c.l.b16 %v880
        %v2767 = vunpack.c.h.b16 %v880
        %v2768 = vunpack.c.l.b16 %v881
        %v2769 = vunpack.c.h.b16 %v881
        %v2770 = vunpack.c.l.b16 %v882
        %v2771 = vunpack.c.h.b16 %v882
        %v2772 = vunpack.c.l.b16 %v883
        %v2773 = vunpack.c.h.b16 %v883
        %v2774 = vunpack.c.l.b16 %v884
        %v2775 = vunpack.c.h.b16 %v884
        %v2776 = vunpack.c.l.b16 %v885
        %v2777 = vunpack.c.h.b16 %v885
        %v2778 = vunpack.c.l.b16 %v886
        %v2779 = vunpack.c.h.b16 %v886
        %v2780 = vunpack.c.l.b16 %v887
        %v2781 = vunpack.c.h.b16 %v887
        %v2782 = vunpack.c.l.b16 %v888
        %v2783 = vunpack.c.h.b16 %v888
        %v2784 = vunpack.c.l.b16 %v889
        %v2785 = vunpack.c.h.b16 %v889
        %v2786 = vunpack.c.l.b16 %v890
        %v2787 = vunpack.c.h.b16 %v890
        %v2788 = vunpack.c.l.b16 %v891
        %v2789 = vunpack.c.h.b16 %v891
        %v2790 = vunpack.c.l.b16 %v892
        %v2791 = vunpack.c.h.b16 %v892
        %v2792 = vunpack.c.l.b16 %v893
        %v2793 = vunpack.c.h.b16 %v893
        %v2794 = vunpack.c.l.b16 %v894
        %v2795 = vunpack.c.h.b16 %v894
        %v2796 = vunpack.c.l.b16 %v895
        %v2797 = vunpack.c.h.b16 %v895
        %v2798 = vunpack.c.l.b16 %v896
        %v2799 = vunpack.c.h.b16 %v896
        %v2800 = vunpack.c.l.b16 %v897
        %v2801 = vunpack.c.h.b16 %v897
        %v2802 = vunpack.c.l.b16 %v898
        %v2803 = vunpack.c.h.b16 %v898
        %v2804 = vunpack.c.l.b16 %v899
        %v2805 = vunpack.c.h.b16 %v899
        %v2806 = vunpack.c.l.b16 %v900
        %v2807 = vunpack.c.h.b16 %v900
        %v2808 = vunpack.c.l.b16 %v901
        %v2809 = vunpack.c.h.b16 %v901
        %v2810 = vunpack.c.l.b16 %v902
        %v2811 = vunpack.c.h.b16 %v902
        %v2812 = vunpack.c.l.b16 %v903
        %v2813 = vunpack.c.h.b16 %v903
        %v2814 = vunpack.c.l.b16 %v904
        %v2815 = vunpack.c.h.b16 %v904
        %v2816 = vunpack.c.l.b16 %v905
        %v2817 = vunpack.c.h.b16 %v905
        %v2818 = vunpack.c.l.b16 %v906
        %v2819 = vunpack.c.h.b16 %v906
        %v2820 = vunpack.c.l.b16 %v907
        %v2821 = vunpack.c.h.b16 %v907
        %v2822 = vunpack.c.l.b16 %v908
        %v2823 = vunpack.c.h.b16 %v908
        %v2824 = vunpack.c.l.b16 %v909
        %v2825 = vunpack.c.h.b16 %v909
        %v2826 = vunpack.c.l.b16 %v910
        %v2827 = vunpack.c.h.b16 %v910
        %v2828 = vunpack.c.l.b16 %v911
        %v2829 = vunpack.c.h.b16 %v911
        %v2830 = vunpack.c.l.b16 %v912
        %v2831 = vunpack.c.h.b16 %v912
        %v2832 = vunpack.c.l.b16 %v913
        %v2833 = vunpack.c.h.b16 %v913
        %v2834 = vunpack.c.l.b16 %v914
        %v2835 = vunpack.c.h.b16 %v914
        %v2836 = vunpack.c.l.b16 %v915
        %v2837 = vunpack.c.h.b16 %v915
        %v2838 = vunpack.c.l.b16 %v916
        %v2839 = vunpack.c.h.b16 %v916
        %v2840 = vunpack.c.l.b16 %v917
        %v2841 = vunpack.c.h.b16 %v917
        %v2842 = vunpack.c.l.b16 %v918
        %v2843 = vunpack.c.h.b16 %v918
        %v2844 = vunpack.c.l.b16 %v919
        %v2845 = vunpack.c.h.b16 %v919
        %v2846 = vunpack.c.l.b16 %v920
        %v2847 = vunpack.c.h.b16 %v920
        %v2848 = vunpack.c.l.b16 %v921
        %v2849 = vunpack.c.h.b16 %v921
        %v2850 = vunpack.c.l.b16 %v922
        %v2851 = vunpack.c.h.b16 %v922
        %v2852 = vunpack.c.l.b16 %v923
        %v2853 = vunpack.c.h.b16 %v923
        %v2854 = vunpack.c.l.b16 %v924
        %v2855 = vunpack.c.h.b16 %v924
        %v2856 = vunpack.c.l.b16 %v925
        %v2857 = vunpack.c.h.b16 %v925
        %v2858 = vunpack.c.l.b16 %v926
        %v2859 = vunpack.c.h.b16 %v926
        %v2860 = vunpack.c.l.b16 %v927
        %v2861 = vunpack.c.h.b16 %v927
        %v2862 = vunpack.c.l.b16 %v928
        %v2863 = vunpack.c.h.b16 %v928
        %v2864 = vunpack.c.l.b16 %v929
        %v2865 = vunpack.c.h.b16 %v929
        %v2866 = vunpack.c.l.b16 %v930
        %v2867 = vunpack.c.h.b16 %v930
        %v2868 = vunpack.c.l.b16 %v931
        %v2869 = vunpack.c.h.b16 %v931
        %v2870 = vunpack.c.l.b16 %v932
        %v2871 = vunpack.c.h.b16 %v932
        %v2872 = vunpack.c.l.b16 %v933
        %v2873 = vunpack.c.h.b16 %v933
        %v2874 = vunpack.c.l.b16 %v934
        %v2875 = vunpack.c.h.b16 %v934
        %v2876 = vunpack.c.l.b16 %v935
        %v2877 = vunpack.c.h.b16 %v935
        %v2878 = vunpack.c.l.b16 %v936
        %v2879 = vunpack.c.h.b16 %v936
        %v2880 = vunpack.c.l.b16 %v937
        %v2881 = vunpack.c.h.b16 %v937
        %v2882 = vunpack.c.l.b16 %v938
        %v2883 = vunpack.c.h.b16 %v938
        %v2884 = vunpack.c.l.b16 %v939
        %v2885 = vunpack.c.h.b16 %v939
        %v2886 = vunpack.c.l.b16 %v940
        %v2887 = vunpack.c.h.b16 %v940
        %v2888 = vunpack.c.l.b16 %v941
        %v2889 = vunpack.c.h.b16 %v941
        %v2890 = vunpack.c.l.b16 %v942
        %v2891 = vunpack.c.h.b16 %v942
        %v2892 = vunpack.c.l.b16 %v943
        %v2893 = vunpack.c.h.b16 %v943
        %v2894 = vunpack.c.l.b16 %v944
        %v2895 = vunpack.c.h.b16 %v944
        %v2896 = vunpack.c.l.b16 %v945
        %v2897 = vunpack.c.h.b16 %v945
        %v2898 = vunpack.c.l.b16 %v946
        %v2899 = vunpack.c.h.b16 %v946
        %v2900 = vunpack.c.l.b16 %v947
        %v2901 = vunpack.c.h.b16 %v947
        %v2902 = vunpack.c.l.b16 %v948
        %v2903 = vunpack.c.h.b16 %v948
        %v2904 = vunpack.c.l.b16 %v949
        %v2905 = vunpack.c.h.b16 %v949
        %v2906 = vunpack.c.l.b16 %v950
        %v2907 = vunpack.c.h.b16 %v950
        %v2908 = vunpack.c.l.b16 %v951
        %v2909 = vunpack.c.h.b16 %v951
        %v2910 = vunpack.c.l.b16 %v952
        %v2911 = vunpack.c.h.b16 %v952
        %v2912 = vunpack.c.l.b16 %v953
        %v2913 = vunpack.c.h.b16 %v953
        %v2914 = vunpack.c.l.b16 %v954
        %v2915 = vunpack.c.h.b16 %v954
        %v2916 = vunpack.c.l.b16 %v955
        %v2917 = vunpack.c.h.b16 %v955
        %v2918 = vunpack.c.l.b16 %v956
        %v2919 = vunpack.c.h.b16 %v956
        %v2920 = vunpack.c.l.b16 %v957
        %v2921 = vunpack.c.h.b16 %v957
        %v2922 = vunpack.c.l.b16 %v958
        %v2923 = vunpack.c.h.b16 %v958
        %v2924 = vunpack.c.l.b16 %v959
        %v2925 = vunpack.c.h.b16 %v959
        %v2926 = vunpack.c.l.b16 %v960
        %v2927 = vunpack.c.h.b16 %v960
        %v2928 = vunpack.c.l.b16 %v961
        %v2929 = vunpack.c.h.b16 %v961
        %v2930 = vunpack.c.l.b16 %v962
        %v2931 = vunpack.c.h.b16 %v962
        %v2932 = vunpack.c.l.b16 %v963
        %v2933 = vunpack.c.h.b16 %v963
        %v2934 = vunpack.c.l.b16 %v964
        %v2935 = vunpack.c.h.b16 %v964
        %v2936 = vunpack.c.l.b16 %v965
        %v2937 = vunpack.c.h.b16 %v965
        %v2938 = vunpack.c.l.b16 %v966
        %v2939 = vunpack.c.h.b16 %v966
        %v2940 = vunpack.c.l.b16 %v967
        %v2941 = vunpack.c.h.b16 %v967
        %v2942 = vunpack.c.l.b16 %v968
        %v2943 = vunpack.c.h.b16 %v968
        %v2944 = vunpack.c.l.b16 %v969
        %v2945 = vunpack.c.h.b16 %v969
        %v2946 = vunpack.c.l.b16 %v970
        %v2947 = vunpack.c.h.b16 %v970
        %v2948 = vunpack.c.l.b16 %v971
        %v2949 = vunpack.c.h.b16 %v971
        %v2950 = vunpack.c.l.b16 %v972
        %v2951 = vunpack.c.h.b16 %v972
        %v2952 = vunpack.c.l.b16 %v973
        %v2953 = vunpack.c.h.b16 %v973
        %v2954 = vunpack.c.l.b16 %v974
        %v2955 = vunpack.c.h.b16 %v974
        %v2956 = vunpack.c.l.b16 %v975
        %v2957 = vunpack.c.h.b16 %v975
        %v2958 = vunpack.c.l.b16 %v976
        %v2959 = vunpack.c.h.b16 %v976
        %v2960 = vunpack.c.l.b16 %v977
        %v2961 = vunpack.c.h.b16 %v977
        %v2962 = vunpack.c.l.b16 %v978
        %v2963 = vunpack.c.h.b16 %v978
        %v2964 = vunpack.c.l.b16 %v979
        %v2965 = vunpack.c.h.b16 %v979
        %v2966 = vunpack.c.l.b16 %v980
        %v2967 = vunpack.c.h.b16 %v980
        %v2968 = vunpack.c.l.b16 %v981
        %v2969 = vunpack.c.h.b16 %v981
        %v2970 = vunpack.c.l.b16 %v982
        %v2971 = vunpack.c.h.b16 %v982
        %v2972 = vunpack.c.l.b16 %v983
        %v2973 = vunpack.c.h.b16 %v983
        %v2974 = vunpack.c.l.b16 %v984
        %v2975 = vunpack.c.h.b16 %v984
        %v2976 = vunpack.c.l.b16 %v985
        %v2977 = vunpack.c.h.b16 %v985
        %v2978 = vunpack.c.l.b16 %v986
        %v2979 = vunpack.c.h.b16 %v986
        %v2980 = vunpack.c.l.b16 %v987
        %v2981 = vunpack.c.h.b16 %v987
        %v2982 = vunpack.c.l.b16 %v988
        %v2983 = vunpack.c.h.b16 %v988
        %v2984 = vunpack.c.l.b16 %v989
        %v2985 = vunpack.c.h.b16 %v989
        %v2986 = vunpack.c.l.b16 %v990
        %v2987 = vunpack.c.h.b16 %v990
        %v2988 = vunpack.c.l.b16 %v991
        %v2989 = vunpack.c.h.b16 %v991
        %v2990 = vunpack.c.l.b16 %v992
        %v2991 = vunpack.c.h.b16 %v992
        %v2992 = vunpack.c.l.b16 %v993
        %v2993 = vunpack.c.h.b16 %v993
        %v2994 = vunpack.c.l.b16 %v994
        %v2995 = vunpack.c.h.b16 %v994
        %v2996 = vunpack.c.l.b16 %v995
        %v2997 = vunpack.c.h.b16 %v995
        %v2998 = vunpack.c.l.b16 %v996
        %v2999 = vunpack.c.h.b16 %v996
        %v3000 = vunpack.c.l.b16 %v997
        %v3001 = vunpack.c.h.b16 %v997
        %v3002 = vunpack.c.l.b16 %v998
        %v3003 = vunpack.c.h.b16 %v998
        %v3004 = vunpack.c.l.b16 %v999
        %v3005 = vunpack.c.h.b16 %v999
        %v3006 = vunpack.c.l.b16 %v1000
        %v3007 = vunpack.c.h.b16 %v1000
        %v3008 = vunpack.c.l.b16 %v1001
        %v3009 = vunpack.c.h.b16 %v1001
        %v3010 = vunpack.c.l.b16 %v1002
        %v3011 = vunpack.c.h.b16 %v1002
        %v3012 = vunpack.c.l.b16 %v1003
        %v3013 = vunpack.c.h.b16 %v1003
        %v3014 = vunpack.c.l.b16 %v1004
        %v3015 = vunpack.c.h.b16 %v1004
        %v3016 = vunpack.c.l.b16 %v1005
        %v3017 = vunpack.c.h.b16 %v1005
        %v3018 = vunpack.c.l.b16 %v1006
        %v3019 = vunpack.c.h.b16 %v1006
        %v3020 = vunpack.c.l.b16 %v1007
        %v3021 = vunpack.c.h.b16 %v1007
        %v3022 = vunpack.c.l.b16 %v1008
        %v3023 = vunpack.c.h.b16 %v1008
        %v3024 = vunpack.c.l.b16 %v1009
        %v3025 = vunpack.c.h.b16 %v1009
        %v3026 = vunpack.c.l.b16 %v1010
        %v3027 = vunpack.c.h.b16 %v1010
        %v3028 = vunpack.c.l.b16 %v1011
        %v3029 = vunpack.c.h.b16 %v1011
        %v3030 = vunpack.c.l.b16 %v1012
        %v3031 = vunpack.c.h.b16 %v1012
        %v3032 = vunpack.c.l.b16 %v1013
        %v3033 = vunpack.c.h.b16 %v1013
        %v3034 = vunpack.c.l.b16 %v1014
        %v3035 = vunpack.c.h.b16 %v1014
        %v3036 = vunpack.c.l.b16 %v1015
        %v3037 = vunpack.c.h.b16 %v1015
        %v3038 = vunpack.c.l.b16 %v1016
        %v3039 = vunpack.c.h.b16 %v1016
        %v3040 = vunpack.c.l.b16 %v1017
        %v3041 = vunpack.c.h.b16 %v1017
        %v3042 = vunpack.c.l.b16 %v1018
        %v3043 = vunpack.c.h.b16 %v1018
        %v3044 = vunpack.c.l.b16 %v1019
        %v3045 = vunpack.c.h.b16 %v1019
        %v3046 = vunpack.c.l.b16 %v1020
        %v3047 = vunpack.c.h.b16 %v1020
        %v3048 = vunpack.c.l.b16 %v1021
        %v3049 = vunpack.c.h.b16 %v1021
        %v3050 = vunpack.c.l.b16 %v1022
        %v3051 = vunpack.c.h.b16 %v1022
        %v3052 = vunpack.c.l.b16 %v1023
        %v3053 = vunpack.c.h.b16 %v1023
        %v3054 = vunpack.c.l.b16 %v1024
        %v3055 = vunpack.c.h.b16 %v1024
        %v3056 = vunpack.c.l.b16 %v1025
        %v3057 = vunpack.c.h.b16 %v1025
        %v3058 = vunpack.c.l.b16 %v1026
        %v3059 = vunpack.c.h.b16 %v1026
        %v3060 = vunpack.c.l.b16 %v1027
        %v3061 = vunpack.c.h.b16 %v1027
        %v3062 = vunpack.c.l.b16 %v1028
        %v3063 = vunpack.c.h.b16 %v1028
        %v3064 = vunpack.c.l.b16 %v1029
        %v3065 = vunpack.c.h.b16 %v1029
        %v3066 = vunpack.c.l.b16 %v1030
        %v3067 = vunpack.c.h.b16 %v1030
        %v3068 = vunpack.c.l.b16 %v1031
        %v3069 = vunpack.c.h.b16 %v1031
        %v3070 = vunpack.c.l.b16 %v1032
        %v3071 = vunpack.c.h.b16 %v1032
        %v3072 = vunpack.c.l.b16 %v1033
        %v3073 = vunpack.c.h.b16 %v1033
        %v3074 = vunpack.c.l.b16 %v1034
        %v3075 = vunpack.c.h.b16 %v1034
        %v3076 = vunpack.c.l.b16 %v1035
        %v3077 = vunpack.c.h.b16 %v1035
        %v3078 = vunpack.c.l.b16 %v1036
        %v3079 = vunpack.c.h.b16 %v1036
        %v3080 = vunpack.c.l.b16 %v1037
        %v3081 = vunpack.c.h.b16 %v1037
        %v3082 = vunpack.c.l.b16 %v1038
        %v3083 = vunpack.c.h.b16 %v1038
        %v3084 = vunpack.c.l.b16 %v1039
        %v3085 = vunpack.c.h.b16 %v1039
        %v3086 = vunpack.c.l.b16 %v1040
        %v3087 = vunpack.c.h.b16 %v1040
        %v3088 = vunpack.c.l.b16 %v1041
        %v3089 = vunpack.c.h.b16 %v1041
        %v3090 = vunpack.c.l.b16 %v1042
        %v3091 = vunpack.c.h.b16 %v1042
        %v3092 = vunpack.c.l.b16 %v1043
        %v3093 = vunpack.c.h.b16 %v1043
        %v3094 = vunpack.c.l.b16 %v1044
        %v3095 = vunpack.c.h.b16 %v1044
        %v3096 = vunpack.c.l.b16 %v1045
        %v3097 = vunpack.c.h.b16 %v1045
        %v3098 = vunpack.c.l.b16 %v1046
        %v3099 = vunpack.c.h.b16 %v1046
        %v3100 = vunpack.c.l.b16 %v1047
        %v3101 = vunpack.c.h.b16 %v1047
        %v3102 = vunpack.c.l.b16 %v1048
        %v3103 = vunpack.c.h.b16 %v1048
        %v3104 = vunpack.c.l.b16 %v1049
        %v3105 = vunpack.c.h.b16 %v1049
        %v3106 = vunpack.c.l.b16 %v1050
        %v3107 = vunpack.c.h.b16 %v1050
        %v3108 = vunpack.c.l.b16 %v1051
        %v3109 = vunpack.c.h.b16 %v1051
        %v3110 = vunpack.c.l.b16 %v1052
        %v3111 = vunpack.c.h.b16 %v1052
        %v3112 = vunpack.c.l.b16 %v1053
        %v3113 = vunpack.c.h.b16 %v1053
        %v3114 = vunpack.c.l.b16 %v1054
        %v3115 = vunpack.c.h.b16 %v1054
        %v3116 = vunpack.c.l.b16 %v1055
        %v3117 = vunpack.c.h.b16 %v1055
        %v3118 = vunpack.c.l.b16 %v1056
        %v3119 = vunpack.c.h.b16 %v1056
        %v3120 = vunpack.c.l.b16 %v1057
        %v3121 = vunpack.c.h.b16 %v1057
        %v3122 = vunpack.c.l.b16 %v1058
        %v3123 = vunpack.c.h.b16 %v1058
        %v3124 = vunpack.c.l.b16 %v1059
        %v3125 = vunpack.c.h.b16 %v1059
        %v3126 = vunpack.c.l.b16 %v1060
        %v3127 = vunpack.c.h.b16 %v1060
        %v3128 = vunpack.c.l.b16 %v1061
        %v3129 = vunpack.c.h.b16 %v1061
        %v3130 = vunpack.c.l.b16 %v1062
        %v3131 = vunpack.c.h.b16 %v1062
        %v3132 = vunpack.c.l.b16 %v1063
        %v3133 = vunpack.c.h.b16 %v1063
        %v3134 = vunpack.c.l.b16 %v1064
        %v3135 = vunpack.c.h.b16 %v1064
        %v3136 = vunpack.c.l.b16 %v1065
        %v3137 = vunpack.c.h.b16 %v1065
        %v3138 = vunpack.c.l.b16 %v1066
        %v3139 = vunpack.c.h.b16 %v1066
        %v3140 = vunpack.c.l.b16 %v1067
        %v3141 = vunpack.c.h.b16 %v1067
        %v3142 = vunpack.c.l.b16 %v1068
        %v3143 = vunpack.c.h.b16 %v1068
        %v3144 = vunpack.c.l.b16 %v1069
        %v3145 = vunpack.c.h.b16 %v1069
        %v3146 = vunpack.c.l.b16 %v1070
        %v3147 = vunpack.c.h.b16 %v1070
        %v3148 = vunpack.c.l.b16 %v1071
        %v3149 = vunpack.c.h.b16 %v1071
        %v3150 = vunpack.c.l.b16 %v1072
        %v3151 = vunpack.c.h.b16 %v1072
        %v3152 = vunpack.c.l.b16 %v1073
        %v3153 = vunpack.c.h.b16 %v1073
        %v3154 = vunpack.c.l.b16 %v1074
        %v3155 = vunpack.c.h.b16 %v1074
        %v3156 = vunpack.c.l.b16 %v1075
        %v3157 = vunpack.c.h.b16 %v1075
        %v3158 = vunpack.c.l.b16 %v1076
        %v3159 = vunpack.c.h.b16 %v1076
        %v3160 = vunpack.c.l.b16 %v1077
        %v3161 = vunpack.c.h.b16 %v1077
        %v3162 = vunpack.c.l.b16 %v1078
        %v3163 = vunpack.c.h.b16 %v1078
        %v3164 = vunpack.c.l.b16 %v1079
        %v3165 = vunpack.c.h.b16 %v1079
        %v3166 = vunpack.c.l.b16 %v1080
        %v3167 = vunpack.c.h.b16 %v1080
        %v3168 = vunpack.c.l.b16 %v1081
        %v3169 = vunpack.c.h.b16 %v1081
        %v3170 = vunpack.c.l.b16 %v1082
        %v3171 = vunpack.c.h.b16 %v1082
        %v3172 = vunpack.c.l.b16 %v1083
        %v3173 = vunpack.c.h.b16 %v1083
        %v3174 = vunpack.c.l.b16 %v1084
        %v3175 = vunpack.c.h.b16 %v1084
        %v3176 = vunpack.c.l.b16 %v1085
        %v3177 = vunpack.c.h.b16 %v1085
        %v3178 = vunpack.c.l.b16 %v1086
        %v3179 = vunpack.c.h.b16 %v1086
        %v3180 = vunpack.c.l.b16 %v1087
        %v3181 = vunpack.c.h.b16 %v1087
        %v3182 = vunpack.c.l.b16 %v1088
        %v3183 = vunpack.c.h.b16 %v1088
        %v3184 = vunpack.c.l.b16 %v1089
        %v3185 = vunpack.c.h.b16 %v1089
        %v3186 = vunpack.c.l.b16 %v1090
        %v3187 = vunpack.c.h.b16 %v1090
        %v3188 = vunpack.c.l.b16 %v1091
        %v3189 = vunpack.c.h.b16 %v1091
        %v3190 = vunpack.c.l.b16 %v1092
        %v3191 = vunpack.c.h.b16 %v1092
        %v3192 = vunpack.c.l.b16 %v1093
        %v3193 = vunpack.c.h.b16 %v1093
        %v3194 = vunpack.c.l.b16 %v1094
        %v3195 = vunpack.c.h.b16 %v1094
        %v3196 = vunpack.c.l.b16 %v1095
        %v3197 = vunpack.c.h.b16 %v1095
        %v3198 = vunpack.c.l.b16 %v1096
        %v3199 = vunpack.c.h.b16 %v1096
        %v3200 = vunpack.c.l.b16 %v1097
        %v3201 = vunpack.c.h.b16 %v1097
        %v3202 = vunpack.c.l.b16 %v1098
        %v3203 = vunpack.c.h.b16 %v1098
        %v3204 = vunpack.c.l.b16 %v1099
        %v3205 = vunpack.c.h.b16 %v1099
        %v3206 = vunpack.c.l.b16 %v1100
        %v3207 = vunpack.c.h.b16 %v1100
        %v3208 = vunpack.c.l.b16 %v1101
        %v3209 = vunpack.c.h.b16 %v1101
        %v3210 = vunpack.c.l.b16 %v1102
        %v3211 = vunpack.c.h.b16 %v1102
        %v3212 = vunpack.c.l.b16 %v1103
        %v3213 = vunpack.c.h.b16 %v1103
        %v3214 = vunpack.c.l.b16 %v1104
        %v3215 = vunpack.c.h.b16 %v1104
        %v3216 = vunpack.c.l.b16 %v1105
        %v3217 = vunpack.c.h.b16 %v1105
        %v3218 = vunpack.c.l.b16 %v1106
        %v3219 = vunpack.c.h.b16 %v1106
        %v3220 = vunpack.c.l.b16 %v1107
        %v3221 = vunpack.c.h.b16 %v1107
        %v3222 = vunpack.c.l.b16 %v1108
        %v3223 = vunpack.c.h.b16 %v1108
        %v3224 = vunpack.c.l.b16 %v1109
        %v3225 = vunpack.c.h.b16 %v1109
        %v3226 = vunpack.c.l.b16 %v1110
        %v3227 = vunpack.c.h.b16 %v1110
        %v3228 = vunpack.c.l.b16 %v1111
        %v3229 = vunpack.c.h.b16 %v1111
        %v3230 = vunpack.c.l.b16 %v1112
        %v3231 = vunpack.c.h.b16 %v1112
        %v3232 = vunpack.c.l.b16 %v1113
        %v3233 = vunpack.c.h.b16 %v1113
        %v3234 = vunpack.c.l.b16 %v1114
        %v3235 = vunpack.c.h.b16 %v1114
        %v3236 = vunpack.c.l.b16 %v1115
        %v3237 = vunpack.c.h.b16 %v1115
        %v3238 = vunpack.c.l.b16 %v1116
        %v3239 = vunpack.c.h.b16 %v1116
        %v3240 = vunpack.c.l.b16 %v1117
        %v3241 = vunpack.c.h.b16 %v1117
        %v3242 = vunpack.c.l.b16 %v1118
        %v3243 = vunpack.c.h.b16 %v1118
        %v3244 = vunpack.c.l.b16 %v1119
        %v3245 = vunpack.c.h.b16 %v1119
        %v3246 = vunpack.c.l.b16 %v1120
        %v3247 = vunpack.c.h.b16 %v1120
        %v3248 = vunpack.c.l.b16 %v1121
        %v3249 = vunpack.c.h.b16 %v1121
        %v3250 = vunpack.c.l.b16 %v1122
        %v3251 = vunpack.c.h.b16 %v1122
        %v3252 = vunpack.c.l.b16 %v1123
        %v3253 = vunpack.c.h.b16 %v1123
        %v3254 = vunpack.c.l.b16 %v1124
        %v3255 = vunpack.c.h.b16 %v1124
        %v3256 = vunpack.c.l.b16 %v1125
        %v3257 = vunpack.c.h.b16 %v1125
        %v3258 = vunpack.c.l.b16 %v1126
        %v3259 = vunpack.c.h.b16 %v1126
        %v3260 = vunpack.c.l.b16 %v1127
        %v3261 = vunpack.c.h.b16 %v1127
        %v3262 = vunpack.c.l.b16 %v1128
        %v3263 = vunpack.c.h.b16 %v1128
        %v3264 = vunpack.c.l.b16 %v1129
        %v3265 = vunpack.c.h.b16 %v1129
        %v3266 = vunpack.c.l.b16 %v1130
        %v3267 = vunpack.c.h.b16 %v1130
        %v3268 = vunpack.c.l.b16 %v1131
        %v3269 = vunpack.c.h.b16 %v1131
        %v3270 = vunpack.c.l.b16 %v1132
        %v3271 = vunpack.c.h.b16 %v1132
        %v3272 = vunpack.c.l.b16 %v1133
        %v3273 = vunpack.c.h.b16 %v1133
        %v3274 = vunpack.c.l.b16 %v1134
        %v3275 = vunpack.c.h.b16 %v1134
        %v3276 = vunpack.c.l.b16 %v1135
        %v3277 = vunpack.c.h.b16 %v1135
        %v3278 = vunpack.c.l.b16 %v1136
        %v3279 = vunpack.c.h.b16 %v1136
        %v3280 = vunpack.c.l.b16 %v1137
        %v3281 = vunpack.c.h.b16 %v1137
        %v3282 = vunpack.c.l.b16 %v1138
        %v3283 = vunpack.c.h.b16 %v1138
        %v3284 = vunpack.c.l.b16 %v1139
        %v3285 = vunpack.c.h.b16 %v1139
        %v3286 = vunpack.c.l.b16 %v1140
        %v3287 = vunpack.c.h.b16 %v1140
        %v3288 = vunpack.c.l.b16 %v1141
        %v3289 = vunpack.c.h.b16 %v1141
        %v3290 = vunpack.c.l.b16 %v1142
        %v3291 = vunpack.c.h.b16 %v1142
        %v3292 = vunpack.c.l.b16 %v1143
        %v3293 = vunpack.c.h.b16 %v1143
        %v3294 = vunpack.c.l.b16 %v1144
        %v3295 = vunpack.c.h.b16 %v1144
        %v3296 = vunpack.c.l.b16 %v1145
        %v3297 = vunpack.c.h.b16 %v1145
        %v3298 = vunpack.c.l.b16 %v1146
        %v3299 = vunpack.c.h.b16 %v1146
        %v3300 = vunpack.c.l.b16 %v1147
        %v3301 = vunpack.c.h.b16 %v1147
        %v3302 = vunpack.c.l.b16 %v1148
        %v3303 = vunpack.c.h.b16 %v1148
        %v3304 = vunpack.c.l.b16 %v1149
        %v3305 = vunpack.c.h.b16 %v1149
        %v3306 = vunpack.c.l.b16 %v1150
        %v3307 = vunpack.c.h.b16 %v1150
        %v3308 = vunpack.c.l.b16 %v1151
        %v3309 = vunpack.c.h.b16 %v1151
        %v3310 = vunpack.c.l.b16 %v1152
        %v3311 = vunpack.c.h.b16 %v1152
        %v3312 = vunpack.c.l.b16 %v1153
        %v3313 = vunpack.c.h.b16 %v1153
        %v3314 = vunpack.c.l.b16 %v1154
        %v3315 = vunpack.c.h.b16 %v1154
        %v3316 = vunpack.c.l.b16 %v1155
        %v3317 = vunpack.c.h.b16 %v1155
        %v3318 = vunpack.c.l.b16 %v1156
        %v3319 = vunpack.c.h.b16 %v1156
        %v3320 = vunpack.c.l.b16 %v1157
        %v3321 = vunpack.c.h.b16 %v1157
        %v3322 = vunpack.c.l.b16 %v1158
        %v3323 = vunpack.c.h.b16 %v1158
        %v3324 = vunpack.c.l.b16 %v1159
        %v3325 = vunpack.c.h.b16 %v1159
        %v3326 = vunpack.c.l.b16 %v1160
        %v3327 = vunpack.c.h.b16 %v1160
        %v3328 = vunpack.c.l.b16 %v1161
        %v3329 = vunpack.c.h.b16 %v1161
        %v3330 = vunpack.c.l.b16 %v1162
        %v3331 = vunpack.c.h.b16 %v1162
        %v3332 = vunpack.c.l.b16 %v1163
        %v3333 = vunpack.c.h.b16 %v1163
        %v3334 = vunpack.c.l.b16 %v1164
        %v3335 = vunpack.c.h.b16 %v1164
        %v3336 = vunpack.c.l.b16 %v1165
        %v3337 = vunpack.c.h.b16 %v1165
        %v3338 = vunpack.c.l.b16 %v1166
        %v3339 = vunpack.c.h.b16 %v1166
        %v3340 = vunpack.c.l.b16 %v1167
        %v3341 = vunpack.c.h.b16 %v1167
        %v3342 = vunpack.c.l.b16 %v1168
        %v3343 = vunpack.c.h.b16 %v1168
        %v3344 = vunpack.c.l.b16 %v1169
        %v3345 = vunpack.c.h.b16 %v1169
        %v3346 = vunpack.c.l.b16 %v1170
        %v3347 = vunpack.c.h.b16 %v1170
        %v3348 = vunpack.c.l.b16 %v1171
        %v3349 = vunpack.c.h.b16 %v1171
        %v3350 = vunpack.c.l.b16 %v1172
        %v3351 = vunpack.c.h.b16 %v1172
        %v3352 = vunpack.c.l.b16 %v1173
        %v3353 = vunpack.c.h.b16 %v1173
        %v3354 = vunpack.c.l.b16 %v1174
        %v3355 = vunpack.c.h.b16 %v1174
        %v3356 = vunpack.c.l.b16 %v1175
        %v3357 = vunpack.c.h.b16 %v1175
        %v3358 = vunpack.c.l.b16 %v1176
        %v3359 = vunpack.c.h.b16 %v1176
        %v3360 = vunpack.c.l.b16 %v1177
        %v3361 = vunpack.c.h.b16 %v1177
        %v3362 = vunpack.c.l.b16 %v1178
        %v3363 = vunpack.c.h.b16 %v1178
        %v3364 = vunpack.c.l.b16 %v1179
        %v3365 = vunpack.c.h.b16 %v1179
        %v3366 = vunpack.c.l.b16 %v1180
        %v3367 = vunpack.c.h.b16 %v1180
        %v3368 = vunpack.c.l.b16 %v1181
        %v3369 = vunpack.c.h.b16 %v1181
        %v3370 = vunpack.c.l.b16 %v1182
        %v3371 = vunpack.c.h.b16 %v1182
        %v3372 = vunpack.c.l.b16 %v1183
        %v3373 = vunpack.c.h.b16 %v1183
        %v3374 = vunpack.c.l.b16 %v1184
        %v3375 = vunpack.c.h.b16 %v1184
        %v3376 = vunpack.c.l.b16 %v1185
        %v3377 = vunpack.c.h.b16 %v1185
        %v3378 = vunpack.c.l.b16 %v1186
        %v3379 = vunpack.c.h.b16 %v1186
        %v3380 = vunpack.c.l.b16 %v1187
        %v3381 = vunpack.c.h.b16 %v1187
        %v3382 = vunpack.c.l.b16 %v1188
        %v3383 = vunpack.c.h.b16 %v1188
        %v3384 = vunpack.c.l.b16 %v1189
        %v3385 = vunpack.c.h.b16 %v1189
        %v3386 = vunpack.c.l.b16 %v1190
        %v3387 = vunpack.c.h.b16 %v1190
        %v3388 = vunpack.c.l.b16 %v1191
        %v3389 = vunpack.c.h.b16 %v1191
        %v3390 = vunpack.c.l.b16 %v1192
        %v3391 = vunpack.c.h.b16 %v1192
        %v3392 = vunpack.c.l.b16 %v1193
        %v3393 = vunpack.c.h.b16 %v1193
        %v3394 = vunpack.c.l.b16 %v1194
        %v3395 = vunpack.c.h.b16 %v1194
        %v3396 = vunpack.c.l.b16 %v1195
        %v3397 = vunpack.c.h.b16 %v1195
        %v3398 = vunpack.c.l.b16 %v1196
        %v3399 = vunpack.c.h.b16 %v1196
        %v3400 = vunpack.c.l.b16 %v1197
        %v3401 = vunpack.c.h.b16 %v1197
        %v3402 = vunpack.c.l.b16 %v1198
        %v3403 = vunpack.c.h.b16 %v1198
        %v3404 = vunpack.c.l.b16 %v1199
        %v3405 = vunpack.c.h.b16 %v1199
        %v3406 = vunpack.c.l.b16 %v1200
        %v3407 = vunpack.c.h.b16 %v1200
        %v3408 = vunpack.c.l.b16 %v1201
        %v3409 = vunpack.c.h.b16 %v1201
        %v3410 = vunpack.c.l.b16 %v1202
        %v3411 = vunpack.c.h.b16 %v1202
        %v3412 = vunpack.c.l.b16 %v1203
        %v3413 = vunpack.c.h.b16 %v1203
        %v3414 = vunpack.c.l.b16 %v1204
        %v3415 = vunpack.c.h.b16 %v1204
        %v3416 = vunpack.c.l.b16 %v1205
        %v3417 = vunpack.c.h.b16 %v1205
        %v3418 = vunpack.c.l.b16 %v1206
        %v3419 = vunpack.c.h.b16 %v1206
        %v3420 = vunpack.c.l.b16 %v1207
        %v3421 = vunpack.c.h.b16 %v1207
        %v3422 = vunpack.c.l.b16 %v1208
        %v3423 = vunpack.c.h.b16 %v1208
        %v3424 = vunpack.c.l.b16 %v1209
        %v3425 = vunpack.c.h.b16 %v1209
        %v3426 = vunpack.c.l.b16 %v1210
        %v3427 = vunpack.c.h.b16 %v1210
        %v3428 = vunpack.c.l.b16 %v1211
        %v3429 = vunpack.c.h.b16 %v1211
        %v3430 = vunpack.c.l.b16 %v1212
        %v3431 = vunpack.c.h.b16 %v1212
        %v3432 = vunpack.c.l.b16 %v1213
        %v3433 = vunpack.c.h.b16 %v1213
        %v3434 = vunpack.c.l.b16 %v1214
        %v3435 = vunpack.c.h.b16 %v1214
        %v3436 = vunpack.c.l.b16 %v1215
        %v3437 = vunpack.c.h.b16 %v1215
        %v3438 = vunpack.c.l.b16 %v1216
        %v3439 = vunpack.c.h.b16 %v1216
        %v3440 = vunpack.c.l.b16 %v1217
        %v3441 = vunpack.c.h.b16 %v1217
        %v3442 = vunpack.c.l.b16 %v1218
        %v3443 = vunpack.c.h.b16 %v1218
        %v3444 = vunpack.c.l.b16 %v1219
        %v3445 = vunpack.c.h.b16 %v1219
        %v3446 = vunpack.c.l.b16 %v1220
        %v3447 = vunpack.c.h.b16 %v1220
        %v3448 = vunpack.c.l.b16 %v1221
        %v3449 = vunpack.c.h.b16 %v1221
        %v3450 = vunpack.c.l.b16 %v1222
        %v3451 = vunpack.c.h.b16 %v1222
        %v3452 = vunpack.c.l.b16 %v1223
        %v3453 = vunpack.c.h.b16 %v1223
        %v3454 = vunpack.c.l.b16 %v1224
        %v3455 = vunpack.c.h.b16 %v1224
        %v3456 = vunpack.c.l.b16 %v1225
        %v3457 = vunpack.c.h.b16 %v1225
        %v3458 = vunpack.c.l.b16 %v1226
        %v3459 = vunpack.c.h.b16 %v1226
        %v3460 = vunpack.c.l.b16 %v1227
        %v3461 = vunpack.c.h.b16 %v1227
        %v3462 = vunpack.c.l.b16 %v1228
        %v3463 = vunpack.c.h.b16 %v1228
        %v3464 = vunpack.c.l.b16 %v1229
        %v3465 = vunpack.c.h.b16 %v1229
        %v3466 = vunpack.c.l.b16 %v1230
        %v3467 = vunpack.c.h.b16 %v1230
        %v3468 = vunpack.c.l.b16 %v1231
        %v3469 = vunpack.c.h.b16 %v1231
        %v3470 = vunpack.c.l.b16 %v1232
        %v3471 = vunpack.c.h.b16 %v1232
        %v3472 = vunpack.c.l.b16 %v1233
        %v3473 = vunpack.c.h.b16 %v1233
        %v3474 = vunpack.c.l.b16 %v1234
        %v3475 = vunpack.c.h.b16 %v1234
        %v3476 = vunpack.c.l.b16 %v1235
        %v3477 = vunpack.c.h.b16 %v1235
        %v3478 = vunpack.c.l.b16 %v1236
        %v3479 = vunpack.c.h.b16 %v1236
        %v3480 = vunpack.c.l.b16 %v1237
        %v3481 = vunpack.c.h.b16 %v1237
        %v3482 = vunpack.c.l.b16 %v1238
        %v3483 = vunpack.c.h.b16 %v1238
        %v3484 = vunpack.c.l.b16 %v1239
        %v3485 = vunpack.c.h.b16 %v1239
        %v3486 = vunpack.c.l.b16 %v1240
        %v3487 = vunpack.c.h.b16 %v1240
        %v3488 = vunpack.c.l.b16 %v1241
        %v3489 = vunpack.c.h.b16 %v1241
        %v3490 = vunpack.c.l.b16 %v1242
        %v3491 = vunpack.c.h.b16 %v1242
        %v3492 = vunpack.c.l.b16 %v1243
        %v3493 = vunpack.c.h.b16 %v1243
        %v3494 = vunpack.c.l.b16 %v1244
        %v3495 = vunpack.c.h.b16 %v1244
        %v3496 = vunpack.c.l.b16 %v1245
        %v3497 = vunpack.c.h.b16 %v1245
        %v3498 = vunpack.c.l.b16 %v1246
        %v3499 = vunpack.c.h.b16 %v1246
        %v3500 = vunpack.c.l.b16 %v1247
        %v3501 = vunpack.c.h.b16 %v1247
        %v3502 = vunpack.c.l.b16 %v1248
        %v3503 = vunpack.c.h.b16 %v1248
        %v3504 = vunpack.c.l.b16 %v1249
        %v3505 = vunpack.c.h.b16 %v1249
        %v3506 = vunpack.c.l.b16 %v1250
        %v3507 = vunpack.c.h.b16 %v1250
        %v3508 = vunpack.c.l.b16 %v1251
        %v3509 = vunpack.c.h.b16 %v1251
        %v3510 = vunpack.c.l.b16 %v1252
        %v3511 = vunpack.c.h.b16 %v1252
        %v3512 = vunpack.c.l.b16 %v1253
        %v3513 = vunpack.c.h.b16 %v1253
        %v3514 = vunpack.c.l.b16 %v1254
        %v3515 = vunpack.c.h.b16 %v1254
        %v3516 = vunpack.c.l.b16 %v1255
        %v3517 = vunpack.c.h.b16 %v1255
        %v3518 = vunpack.c.l.b16 %v1256
        %v3519 = vunpack.c.h.b16 %v1256
        %v3520 = vunpack.c.l.b16 %v1257
        %v3521 = vunpack.c.h.b16 %v1257
        %v3522 = vunpack.c.l.b16 %v1258
        %v3523 = vunpack.c.h.b16 %v1258
        %v3524 = vunpack.c.l.b16 %v1259
        %v3525 = vunpack.c.h.b16 %v1259
        %v3526 = vunpack.c.l.b16 %v1260
        %v3527 = vunpack.c.h.b16 %v1260
        %v3528 = vunpack.c.l.b16 %v1261
        %v3529 = vunpack.c.h.b16 %v1261
        %v3530 = vunpack.c.l.b16 %v1262
        %v3531 = vunpack.c.h.b16 %v1262
        %v3532 = vunpack.c.l.b16 %v1263
        %v3533 = vunpack.c.h.b16 %v1263
        %v3534 = vunpack.c.l.b16 %v1264
        %v3535 = vunpack.c.h.b16 %v1264
        %v3536 = vunpack.c.l.b16 %v1265
        %v3537 = vunpack.c.h.b16 %v1265
        %v3538 = vunpack.c.l.b16 %v1266
        %v3539 = vunpack.c.h.b16 %v1266
        %v3540 = vunpack.c.l.b16 %v1267
        %v3541 = vunpack.c.h.b16 %v1267
        %v3542 = vunpack.c.l.b16 %v1268
        %v3543 = vunpack.c.h.b16 %v1268
        %v3544 = vunpack.c.l.b16 %v1269
        %v3545 = vunpack.c.h.b16 %v1269
        %v3546 = vunpack.c.l.b16 %v1270
        %v3547 = vunpack.c.h.b16 %v1270
        %v3548 = vunpack.c.l.b16 %v1271
        %v3549 = vunpack.c.h.b16 %v1271
        %v3550 = vunpack.c.l.b16 %v1272
        %v3551 = vunpack.c.h.b16 %v1272
        %v3552 = vunpack.c.l.b16 %v1273
        %v3553 = vunpack.c.h.b16 %v1273
        %v3554 = vunpack.c.l.b16 %v1274
        %v3555 = vunpack.c.h.b16 %v1274
        %v3556 = vunpack.c.l.b16 %v1275
        %v3557 = vunpack.c.h.b16 %v1275
        %v3558 = vunpack.c.l.b16 %v1276
        %v3559 = vunpack.c.h.b16 %v1276
        %v3560 = vunpack.c.l.b16 %v1277
        %v3561 = vunpack.c.h.b16 %v1277
        %v3562 = vunpack.c.l.b16 %v1278
        %v3563 = vunpack.c.h.b16 %v1278
        %v3564 = vunpack.c.l.b16 %v1279
        %v3565 = vunpack.c.h.b16 %v1279
        %v3566 = vunpack.c.l.b16 %v1280
        %v3567 = vunpack.c.h.b16 %v1280
        %v3568 = vunpack.c.l.b16 %v1281
        %v3569 = vunpack.c.h.b16 %v1281
        %v3570 = vunpack.c.l.b16 %v1282
        %v3571 = vunpack.c.h.b16 %v1282
        %v3572 = vunpack.c.l.b16 %v1283
        %v3573 = vunpack.c.h.b16 %v1283
        %v3574 = vunpack.c.l.b16 %v1284
        %v3575 = vunpack.c.h.b16 %v1284
        %v3576 = vunpack.c.l.b16 %v1285
        %v3577 = vunpack.c.h.b16 %v1285
        %v3578 = vunpack.c.l.b16 %v1286
        %v3579 = vunpack.c.h.b16 %v1286
        %v3580 = vunpack.c.l.b16 %v1287
        %v3581 = vunpack.c.h.b16 %v1287
        %v3582 = vunpack.c.l.b16 %v1288
        %v3583 = vunpack.c.h.b16 %v1288
        %v3584 = vunpack.c.l.b16 %v1289
        %v3585 = vunpack.c.h.b16 %v1289
        %v3586 = vunpack.c.l.b16 %v1290
        %v3587 = vunpack.c.h.b16 %v1290
        %v3588 = vunpack.c.l.b16 %v1291
        %v3589 = vunpack.c.h.b16 %v1291
        %v3590 = vunpack.c.l.b16 %v1292
        %v3591 = vunpack.c.h.b16 %v1292
        %v3592 = vunpack.c.l.b16 %v1293
        %v3593 = vunpack.c.h.b16 %v1293
        %v3594 = vunpack.c.l.b16 %v1294
        %v3595 = vunpack.c.h.b16 %v1294
        %v3596 = vunpack.c.l.b16 %v1295
        %v3597 = vunpack.c.h.b16 %v1295
        %v3598 = vunpack.c.l.b16 %v1296
        %v3599 = vunpack.c.h.b16 %v1296
        %v3600 = vunpack.c.l.b16 %v1297
        %v3601 = vunpack.c.h.b16 %v1297
        %v3602 = vunpack.c.l.b16 %v1298
        %v3603 = vunpack.c.h.b16 %v1298
        %v3604 = vunpack.c.l.b16 %v1299
        %v3605 = vunpack.c.h.b16 %v1299
        %v3606 = vunpack.c.l.b16 %v1300
        %v3607 = vunpack.c.h.b16 %v1300
        %v3608 = vunpack.c.l.b16 %v1301
        %v3609 = vunpack.c.h.b16 %v1301
        %v3610 = vunpack.c.l.b16 %v1302
        %v3611 = vunpack.c.h.b16 %v1302
        %v3612 = vunpack.c.l.b16 %v1303
        %v3613 = vunpack.c.h.b16 %v1303
        %v3614 = vunpack.c.l.b16 %v1304
        %v3615 = vunpack.c.h.b16 %v1304
        %v3616 = vunpack.c.l.b16 %v1305
        %v3617 = vunpack.c.h.b16 %v1305
        %v3618 = vunpack.c.l.b16 %v1306
        %v3619 = vunpack.c.h.b16 %v1306
        %v3620 = vunpack.c.l.b16 %v1307
        %v3621 = vunpack.c.h.b16 %v1307
        %v3622 = vunpack.c.l.b16 %v1308
        %v3623 = vunpack.c.h.b16 %v1308
        %v3624 = vunpack.c.l.b16 %v1309
        %v3625 = vunpack.c.h.b16 %v1309
        %v3626 = vunpack.c.l.b16 %v1310
        %v3627 = vunpack.c.h.b16 %v1310
        %v3628 = vunpack.c.l.b16 %v1311
        %v3629 = vunpack.c.h.b16 %v1311
        %v3630 = vunpack.c.l.b16 %v1312
        %v3631 = vunpack.c.h.b16 %v1312
        %v3632 = vunpack.c.l.b16 %v1313
        %v3633 = vunpack.c.h.b16 %v1313
        %v3634 = vunpack.c.l.b16 %v1314
        %v3635 = vunpack.c.h.b16 %v1314
        %v3636 = vunpack.c.l.b16 %v1315
        %v3637 = vunpack.c.h.b16 %v1315
        %v3638 = vunpack.c.l.b16 %v1316
        %v3639 = vunpack.c.h.b16 %v1316
        %v3640 = vunpack.c.l.b16 %v1317
        %v3641 = vunpack.c.h.b16 %v1317
        %v3642 = vunpack.c.l.b16 %v1318
        %v3643 = vunpack.c.h.b16 %v1318
        %v3644 = vunpack.c.l.b16 %v1319
        %v3645 = vunpack.c.h.b16 %v1319
        %v3646 = vunpack.c.l.b16 %v1320
        %v3647 = vunpack.c.h.b16 %v1320
        %v3648 = vunpack.c.l.b16 %v1321
        %v3649 = vunpack.c.h.b16 %v1321
        %v3650 = vunpack.c.l.b16 %v1322
        %v3651 = vunpack.c.h.b16 %v1322
        %v3652 = vunpack.c.l.b16 %v1323
        %v3653 = vunpack.c.h.b16 %v1323
        %v3654 = vunpack.c.l.b16 %v1324
        %v3655 = vunpack.c.h.b16 %v1324
        %v3656 = vunpack.c.l.b16 %v1325
        %v3657 = vunpack.c.h.b16 %v1325
        %v3658 = vunpack.c.l.b16 %v1326
        %v3659 = vunpack.c.h.b16 %v1326
        %v3660 = vunpack.c.l.b16 %v1327
        %v3661 = vunpack.c.h.b16 %v1327
        %v3662 = vunpack.c.l.b16 %v1328
        %v3663 = vunpack.c.h.b16 %v1328
        %v3664 = vunpack.c.l.b16 %v1329
        %v3665 = vunpack.c.h.b16 %v1329
        %v3666 = vunpack.c.l.b16 %v1330
        %v3667 = vunpack.c.h.b16 %v1330
        %v3668 = vunpack.c.l.b16 %v1331
        %v3669 = vunpack.c.h.b16 %v1331
        %v3670 = vunpack.c.l.b16 %v1332
        %v3671 = vunpack.c.h.b16 %v1332
        %v3672 = vunpack.c.l.b16 %v1333
        %v3673 = vunpack.c.h.b16 %v1333
        %v3674 = vunpack.c.l.b16 %v1334
        %v3675 = vunpack.c.h.b16 %v1334
        %v3676 = vunpack.c.l.b16 %v1335
        %v3677 = vunpack.c.h.b16 %v1335
        %v3678 = vunpack.c.l.b16 %v1336
        %v3679 = vunpack.c.h.b16 %v1336
        %v3680 = vunpack.c.l.b16 %v1337
        %v3681 = vunpack.c.h.b16 %v1337
        %v3682 = vunpack.c.l.b16 %v1338
        %v3683 = vunpack.c.h.b16 %v1338
        %v3684 = vunpack.c.l.b16 %v1339
        %v3685 = vunpack.c.h.b16 %v1339
        %v3686 = vunpack.c.l.b16 %v1340
        %v3687 = vunpack.c.h.b16 %v1340
        %v3688 = vunpack.c.l.b16 %v1341
        %v3689 = vunpack.c.h.b16 %v1341
        %v3690 = vunpack.c.l.b16 %v1342
        %v3691 = vunpack.c.h.b16 %v1342
        %v3692 = vunpack.c.l.b16 %v1343
        %v3693 = vunpack.c.h.b16 %v1343
        %v3694 = vunpack.c.l.b16 %v1344
        %v3695 = vunpack.c.h.b16 %v1344
        %v3696 = vunpack.c.l.b16 %v1345
        %v3697 = vunpack.c.h.b16 %v1345
        %v3698 = vunpack.c.l.b16 %v1346
        %v3699 = vunpack.c.h.b16 %v1346
        %v3700 = vunpack.c.l.b16 %v1347
        %v3701 = vunpack.c.h.b16 %v1347
        %v3702 = vunpack.c.l.b16 %v1348
        %v3703 = vunpack.c.h.b16 %v1348
        %v3704 = vunpack.c.l.b16 %v1349
        %v3705 = vunpack.c.h.b16 %v1349
        %v3706 = vunpack.c.l.b16 %v1350
        %v3707 = vunpack.c.h.b16 %v1350
        %v3708 = vunpack.c.l.b16 %v1351
        %v3709 = vunpack.c.h.b16 %v1351
        %v3710 = vunpack.c.l.b16 %v1352
        %v3711 = vunpack.c.h.b16 %v1352
        %v3712 = vunpack.c.l.b16 %v1353
        %v3713 = vunpack.c.h.b16 %v1353
        %v3714 = vunpack.c.l.b16 %v1354
        %v3715 = vunpack.c.h.b16 %v1354
        %v3716 = vunpack.c.l.b16 %v1355
        %v3717 = vunpack.c.h.b16 %v1355
        %v3718 = vunpack.c.l.b16 %v1356
        %v3719 = vunpack.c.h.b16 %v1356
        %v3720 = vunpack.c.l.b16 %v1357
        %v3721 = vunpack.c.h.b16 %v1357
        %v3722 = vunpack.c.l.b16 %v1358
        %v3723 = vunpack.c.h.b16 %v1358
        %v3724 = vunpack.c.l.b16 %v1359
        %v3725 = vunpack.c.h.b16 %v1359
        %v3726 = vunpack.c.l.b16 %v1360
        %v3727 = vunpack.c.h.b16 %v1360
        %v3728 = vunpack.c.l.b16 %v1361
        %v3729 = vunpack.c.h.b16 %v1361
        %v3730 = vunpack.c.l.b16 %v1362
        %v3731 = vunpack.c.h.b16 %v1362
        %v3732 = vunpack.c.l.b16 %v1363
        %v3733 = vunpack.c.h.b16 %v1363
        %v3734 = vunpack.c.l.b16 %v1364
        %v3735 = vunpack.c.h.b16 %v1364
        %v3736 = vunpack.c.l.b16 %v1365
        %v3737 = vunpack.c.h.b16 %v1365
        %v3738 = vunpack.c.l.b16 %v1366
        %v3739 = vunpack.c.h.b16 %v1366
        %v3740 = vunpack.c.l.b16 %v1367
        %v3741 = vunpack.c.h.b16 %v1367
        %v3742 = vunpack.c.l.b16 %v1368
        %v3743 = vunpack.c.h.b16 %v1368
        %v3744 = vunpack.c.l.b16 %v1369
        %v3745 = vunpack.c.h.b16 %v1369
        %v3746 = vunpack.c.l.b16 %v1370
        %v3747 = vunpack.c.h.b16 %v1370
        %v3748 = vunpack.c.l.b16 %v1371
        %v3749 = vunpack.c.h.b16 %v1371
        %v3750 = vunpack.c.l.b16 %v1372
        %v3751 = vunpack.c.h.b16 %v1372
        %v3752 = vunpack.c.l.b16 %v1373
        %v3753 = vunpack.c.h.b16 %v1373
        %v3754 = vunpack.c.l.b16 %v1374
        %v3755 = vunpack.c.h.b16 %v1374
        %v3756 = vunpack.c.l.b16 %v1375
        %v3757 = vunpack.c.h.b16 %v1375
        %v3758 = vunpack.c.l.b16 %v1376
        %v3759 = vunpack.c.h.b16 %v1376
        %v3760 = vunpack.c.l.b16 %v1377
        %v3761 = vunpack.c.h.b16 %v1377
        %v3762 = vunpack.c.l.b16 %v1378
        %v3763 = vunpack.c.h.b16 %v1378
        %v3764 = vunpack.c.l.b16 %v1379
        %v3765 = vunpack.c.h.b16 %v1379
        %v3766 = vunpack.c.l.b16 %v1380
        %v3767 = vunpack.c.h.b16 %v1380
        %v3768 = vunpack.c.l.b16 %v1381
        %v3769 = vunpack.c.h.b16 %v1381
        %v3770 = vpack.c.b16 %v2238, %v2234
        %v3771 = vpack.c.b16 %v2239, %v2235
        %v3772 = vpack.c.b16 %v2240, %v2236
        %v3773 = vpack.c.b16 %v2241, %v2237
        %v3774 = vpack.c.b16 %v2246, %v2242
        %v3775 = vpack.c.b16 %v2247, %v2243
        %v3776 = vpack.c.b16 %v2248, %v2244
        %v3777 = vpack.c.b16 %v2249, %v2245
        %v3778 = vpack.c.b16 %v2254, %v2250
        %v3779 = vpack.c.b16 %v2255, %v2251
        %v3780 = vpack.c.b16 %v2256, %v2252
        %v3781 = vpack.c.b16 %v2257, %v2253
        %v3782 = vpack.c.b16 %v2262, %v2258
        %v3783 = vpack.c.b16 %v2263, %v2259
        %v3784 = vpack.c.b16 %v2264, %v2260
        %v3785 = vpack.c.b16 %v2265, %v2261
        %v3786 = vpack.c.b16 %v2270, %v2266
        %v3787 = vpack.c.b16 %v2271, %v2267
        %v3788 = vpack.c.b16 %v2272, %v2268
        %v3789 = vpack.c.b16 %v2273, %v2269
        %v3790 = vpack.c.b16 %v2278, %v2274
        %v3791 = vpack.c.b16 %v2279, %v2275
        %v3792 = vpack.c.b16 %v2280, %v2276
        %v3793 = vpack.c.b16 %v2281, %v2277
        %v3794 = vpack.c.b16 %v2286, %v2282
        %v3795 = vpack.c.b16 %v2287, %v2283
        %v3796 = vpack.c.b16 %v2288, %v2284
        %v3797 = vpack.c.b16 %v2289, %v2285
        %v3798 = vpack.c.b16 %v2294, %v2290
        %v3799 = vpack.c.b16 %v2295, %v2291
        %v3800 = vpack.c.b16 %v2296, %v2292
        %v3801 = vpack.c.b16 %v2297, %v2293
        %v3802 = vpack.c.b16 %v2302, %v2298
        %v3803 = vpack.c.b16 %v2303, %v2299
        %v3804 = vpack.c.b16 %v2304, %v2300
        %v3805 = vpack.c.b16 %v2305, %v2301
        %v3806 = vpack.c.b16 %v2310, %v2306
        %v3807 = vpack.c.b16 %v2311, %v2307
        %v3808 = vpack.c.b16 %v2312, %v2308
        %v3809 = vpack.c.b16 %v2313, %v2309
        %v3810 = vpack.c.b16 %v2318, %v2314
        %v3811 = vpack.c.b16 %v2319, %v2315
        %v3812 = vpack.c.b16 %v2320, %v2316
        %v3813 = vpack.c.b16 %v2321, %v2317
        %v3814 = vpack.c.b16 %v2326, %v2322
        %v3815 = vpack.c.b16 %v2327, %v2323
        %v3816 = vpack.c.b16 %v2328, %v2324
        %v3817 = vpack.c.b16 %v2329, %v2325
        %v3818 = vpack.c.b16 %v2334, %v2330
        %v3819 = vpack.c.b16 %v2335, %v2331
        %v3820 = vpack.c.b16 %v2336, %v2332
        %v3821 = vpack.c.b16 %v2337, %v2333
        %v3822 = vpack.c.b16 %v2342, %v2338
        %v3823 = vpack.c.b16 %v2343, %v2339
        %v3824 = vpack.c.b16 %v2344, %v2340
        %v3825 = vpack.c.b16 %v2345, %v2341
        %v3826 = vpack.c.b16 %v2350, %v2346
        %v3827 = vpack.c.b16 %v2351, %v2347
        %v3828 = vpack.c.b16 %v2352, %v2348
        %v3829 = vpack.c.b16 %v2353, %v2349
        %v3830 = vpack.c.b16 %v2358, %v2354
        %v3831 = vpack.c.b16 %v2359, %v2355
        %v3832 = vpack.c.b16 %v2360, %v2356
        %v3833 = vpack.c.b16 %v2361, %v2357
        %v3834 = vpack.c.b16 %v2366, %v2362
        %v3835 = vpack.c.b16 %v2367, %v2363
        %v3836 = vpack.c.b16 %v2368, %v2364
        %v3837 = vpack.c.b16 %v2369, %v2365
        %v3838 = vpack.c.b16 %v2374, %v2370
        %v3839 = vpack.c.b16 %v2375, %v2371
        %v3840 = vpack.c.b16 %v2376, %v2372
        %v3841 = vpack.c.b16 %v2377, %v2373
        %v3842 = vpack.c.b16 %v2382, %v2378
        %v3843 = vpack.c.b16 %v2383, %v2379
        %v3844 = vpack.c.b16 %v2384, %v2380
        %v3845 = vpack.c.b16 %v2385, %v2381
        %v3846 = vpack.c.b16 %v2390, %v2386
        %v3847 = vpack.c.b16 %v2391, %v2387
        %v3848 = vpack.c.b16 %v2392, %v2388
        %v3849 = vpack.c.b16 %v2393, %v2389
        %v3850 = vpack.c.b16 %v2398, %v2394
        %v3851 = vpack.c.b16 %v2399, %v2395
        %v3852 = vpack.c.b16 %v2400, %v2396
        %v3853 = vpack.c.b16 %v2401, %v2397
        %v3854 = vpack.c.b16 %v2406, %v2402
        %v3855 = vpack.c.b16 %v2407, %v2403
        %v3856 = vpack.c.b16 %v2408, %v2404
        %v3857 = vpack.c.b16 %v2409, %v2405
        %v3858 = vpack.c.b16 %v2414, %v2410
        %v3859 = vpack.c.b16 %v2415, %v2411
        %v3860 = vpack.c.b16 %v2416, %v2412
        %v3861 = vpack.c.b16 %v2417, %v2413
        %v3862 = vpack.c.b16 %v2422, %v2418
        %v3863 = vpack.c.b16 %v2423, %v2419
        %v3864 = vpack.c.b16 %v2424, %v2420
        %v3865 = vpack.c.b16 %v2425, %v2421
        %v3866 = vpack.c.b16 %v2430, %v2426
        %v3867 = vpack.c.b16 %v2431, %v2427
        %v3868 = vpack.c.b16 %v2432, %v2428
        %v3869 = vpack.c.b16 %v2433, %v2429
        %v3870 = vpack.c.b16 %v2438, %v2434
        %v3871 = vpack.c.b16 %v2439, %v2435
        %v3872 = vpack.c.b16 %v2440, %v2436
        %v3873 = vpack.c.b16 %v2441, %v2437
        %v3874 = vpack.c.b16 %v2446, %v2442
        %v3875 = vpack.c.b16 %v2447, %v2443
        %v3876 = vpack.c.b16 %v2448, %v2444
        %v3877 = vpack.c.b16 %v2449, %v2445
        %v3878 = vpack.c.b16 %v2454, %v2450
        %v3879 = vpack.c.b16 %v2455, %v2451
        %v3880 = vpack.c.b16 %v2456, %v2452
        %v3881 = vpack.c.b16 %v2457, %v2453
        %v3882 = vpack.c.b16 %v2462, %v2458
        %v3883 = vpack.c.b16 %v2463, %v2459
        %v3884 = vpack.c.b16 %v2464, %v2460
        %v3885 = vpack.c.b16 %v2465, %v2461
        %v3886 = vpack.c.b16 %v2470, %v2466
        %v3887 = vpack.c.b16 %v2471, %v2467
        %v3888 = vpack.c.b16 %v2472, %v2468
        %v3889 = vpack.c.b16 %v2473, %v2469
        %v3890 = vpack.c.b16 %v2478, %v2474
        %v3891 = vpack.c.b16 %v2479, %v2475
        %v3892 = vpack.c.b16 %v2480, %v2476
        %v3893 = vpack.c.b16 %v2481, %v2477
        %v3894 = vpack.c.b16 %v2486, %v2482
        %v3895 = vpack.c.b16 %v2487, %v2483
        %v3896 = vpack.c.b16 %v2488, %v2484
        %v3897 = vpack.c.b16 %v2489, %v2485
        %v3898 = vpack.c.b16 %v2494, %v2490
        %v3899 = vpack.c.b16 %v2495, %v2491
        %v3900 = vpack.c.b16 %v2496, %v2492
        %v3901 = vpack.c.b16 %v2497, %v2493
        %v3902 = vpack.c.b16 %v2502, %v2498
        %v3903 = vpack.c.b16 %v2503, %v2499
        %v3904 = vpack.c.b16 %v2504, %v2500
        %v3905 = vpack.c.b16 %v2505, %v2501
        %v3906 = vpack.c.b16 %v2510, %v2506
        %v3907 = vpack.c.b16 %v2511, %v2507
        %v3908 = vpack.c.b16 %v2512, %v2508
        %v3909 = vpack.c.b16 %v2513, %v2509
        %v3910 = vpack.c.b16 %v2518, %v2514
        %v3911 = vpack.c.b16 %v2519, %v2515
        %v3912 = vpack.c.b16 %v2520, %v2516
        %v3913 = vpack.c.b16 %v2521, %v2517
        %v3914 = vpack.c.b16 %v2526, %v2522
        %v3915 = vpack.c.b16 %v2527, %v2523
        %v3916 = vpack.c.b16 %v2528, %v2524
        %v3917 = vpack.c.b16 %v2529, %v2525
        %v3918 = vpack.c.b16 %v2534, %v2530
        %v3919 = vpack.c.b16 %v2535, %v2531
        %v3920 = vpack.c.b16 %v2536, %v2532
        %v3921 = vpack.c.b16 %v2537, %v2533
        %v3922 = vpack.c.b16 %v2542, %v2538
        %v3923 = vpack.c.b16 %v2543, %v2539
        %v3924 = vpack.c.b16 %v2544, %v2540
        %v3925 = vpack.c.b16 %v2545, %v2541
        %v3926 = vpack.c.b16 %v2550, %v2546
        %v3927 = vpack.c.b16 %v2551, %v2547
        %v3928 = vpack.c.b16 %v2552, %v2548
        %v3929 = vpack.c.b16 %v2553, %v2549
        %v3930 = vpack.c.b16 %v2558, %v2554
        %v3931 = vpack.c.b16 %v2559, %v2555
        %v3932 = vpack.c.b16 %v2560, %v2556
        %v3933 = vpack.c.b16 %v2561, %v2557
        %v3934 = vpack.c.b16 %v2566, %v2562
        %v3935 = vpack.c.b16 %v2567, %v2563
        %v3936 = vpack.c.b16 %v2568, %v2564
        %v3937 = vpack.c.b16 %v2569, %v2565
        %v3938 = vpack.c.b16 %v2574, %v2570
        %v3939 = vpack.c.b16 %v2575, %v2571
        %v3940 = vpack.c.b16 %v2576, %v2572
        %v3941 = vpack.c.b16 %v2577, %v2573
        %v3942 = vpack.c.b16 %v2582, %v2578
        %v3943 = vpack.c.b16 %v2583, %v2579
        %v3944 = vpack.c.b16 %v2584, %v2580
        %v3945 = vpack.c.b16 %v2585, %v2581
        %v3946 = vpack.c.b16 %v2590, %v2586
        %v3947 = vpack.c.b16 %v2591, %v2587
        %v3948 = vpack.c.b16 %v2592, %v2588
        %v3949 = vpack.c.b16 %v2593, %v2589
        %v3950 = vpack.c.b16 %v2598, %v2594
        %v3951 = vpack.c.b16 %v2599, %v2595
        %v3952 = vpack.c.b16 %v2600, %v2596
        %v3953 = vpack.c.b16 %v2601, %v2597
        %v3954 = vpack.c.b16 %v2606, %v2602
        %v3955 = vpack.c.b16 %v2607, %v2603
        %v3956 = vpack.c.b16 %v2608, %v2604
        %v3957 = vpack.c.b16 %v2609, %v2605
        %v3958 = vpack.c.b16 %v2614, %v2610
        %v3959 = vpack.c.b16 %v2615, %v2611
        %v3960 = vpack.c.b16 %v2616, %v2612
        %v3961 = vpack.c.b16 %v2617, %v2613
        %v3962 = vpack.c.b16 %v2622, %v2618
        %v3963 = vpack.c.b16 %v2623, %v2619
        %v3964 = vpack.c.b16 %v2624, %v2620
        %v3965 = vpack.c.b16 %v2625, %v2621
        %v3966 = vpack.c.b16 %v2630, %v2626
        %v3967 = vpack.c.b16 %v2631, %v2627
        %v3968 = vpack.c.b16 %v2632, %v2628
        %v3969 = vpack.c.b16 %v2633, %v2629
        %v3970 = vpack.c.b16 %v2638, %v2634
        %v3971 = vpack.c.b16 %v2639, %v2635
        %v3972 = vpack.c.b16 %v2640, %v2636
        %v3973 = vpack.c.b16 %v2641, %v2637
        %v3974 = vpack.c.b16 %v2646, %v2642
        %v3975 = vpack.c.b16 %v2647, %v2643
        %v3976 = vpack.c.b16 %v2648, %v2644
        %v3977 = vpack.c.b16 %v2649, %v2645
        %v3978 = vpack.c.b16 %v2654, %v2650
        %v3979 = vpack.c.b16 %v2655, %v2651
        %v3980 = vpack.c.b16 %v2656, %v2652
        %v3981 = vpack.c.b16 %v2657, %v2653
        %v3982 = vpack.c.b16 %v2662, %v2658
        %v3983 = vpack.c.b16 %v2663, %v2659
        %v3984 = vpack.c.b16 %v2664, %v2660
        %v3985 = vpack.c.b16 %v2665, %v2661
        %v3986 = vpack.c.b16 %v2670, %v2666
        %v3987 = vpack.c.b16 %v2671, %v2667
        %v3988 = vpack.c.b16 %v2672, %v2668
        %v3989 = vpack.c.b16 %v2673, %v2669
        %v3990 = vpack.c.b16 %v2678, %v2674
        %v3991 = vpack.c.b16 %v2679, %v2675
        %v3992 = vpack.c.b16 %v2680, %v2676
        %v3993 = vpack.c.b16 %v2681, %v2677
        %v3994 = vpack.c.b16 %v2686, %v2682
        %v3995 = vpack.c.b16 %v2687, %v2683
        %v3996 = vpack.c.b16 %v2688, %v2684
        %v3997 = vpack.c.b16 %v2689, %v2685
        %v3998 = vpack.c.b16 %v2694, %v2690
        %v3999 = vpack.c.b16 %v2695, %v2691
        %v4000 = vpack.c.b16 %v2696, %v2692
        %v4001 = vpack.c.b16 %v2697, %v2693
        %v4002 = vpack.c.b16 %v2702, %v2698
        %v4003 = vpack.c.b16 %v2703, %v2699
        %v4004 = vpack.c.b16 %v2704, %v2700
        %v4005 = vpack.c.b16 %v2705, %v2701
        %v4006 = vpack.c.b16 %v2710, %v2706
        %v4007 = vpack.c.b16 %v2711, %v2707
        %v4008 = vpack.c.b16 %v2712, %v2708
        %v4009 = vpack.c.b16 %v2713, %v2709
        %v4010 = vpack.c.b16 %v2718, %v2714
        %v4011 = vpack.c.b16 %v2719, %v2715
        %v4012 = vpack.c.b16 %v2720, %v2716
        %v4013 = vpack.c.b16 %v2721, %v2717
        %v4014 = vpack.c.b16 %v2726, %v2722
        %v4015 = vpack.c.b16 %v2727, %v2723
        %v4016 = vpack.c.b16 %v2728, %v2724
        %v4017 = vpack.c.b16 %v2729, %v2725
        %v4018 = vpack.c.b16 %v2734, %v2730
        %v4019 = vpack.c.b16 %v2735, %v2731
        %v4020 = vpack.c.b16 %v2736, %v2732
        %v4021 = vpack.c.b16 %v2737, %v2733
        %v4022 = vpack.c.b16 %v2742, %v2738
        %v4023 = vpack.c.b16 %v2743, %v2739
        %v4024 = vpack.c.b16 %v2744, %v2740
        %v4025 = vpack.c.b16 %v2745, %v2741
        %v4026 = vpack.c.b16 %v2750, %v2746
        %v4027 = vpack.c.b16 %v2751, %v2747
        %v4028 = vpack.c.b16 %v2752, %v2748
        %v4029 = vpack.c.b16 %v2753, %v2749
        %v4030 = vpack.c.b16 %v2758, %v2754
        %v4031 = vpack.c.b16 %v2759, %v2755
        %v4032 = vpack.c.b16 %v2760, %v2756
        %v4033 = vpack.c.b16 %v2761, %v2757
        %v4034 = vpack.c.b16 %v2766, %v2762
        %v4035 = vpack.c.b16 %v2767, %v2763
        %v4036 = vpack.c.b16 %v2768, %v2764
        %v4037 = vpack.c.b16 %v2769, %v2765
        %v4038 = vpack.c.b16 %v2774, %v2770
        %v4039 = vpack.c.b16 %v2775, %v2771
        %v4040 = vpack.c.b16 %v2776, %v2772
        %v4041 = vpack.c.b16 %v2777, %v2773
        %v4042 = vpack.c.b16 %v2782, %v2778
        %v4043 = vpack.c.b16 %v2783, %v2779
        %v4044 = vpack.c.b16 %v2784, %v2780
        %v4045 = vpack.c.b16 %v2785, %v2781
        %v4046 = vpack.c.b16 %v2790, %v2786
        %v4047 = vpack.c.b16 %v2791, %v2787
        %v4048 = vpack.c.b16 %v2792, %v2788
        %v4049 = vpack.c.b16 %v2793, %v2789
        %v4050 = vpack.c.b16 %v2798, %v2794
        %v4051 = vpack.c.b16 %v2799, %v2795
        %v4052 = vpack.c.b16 %v2800, %v2796
        %v4053 = vpack.c.b16 %v2801, %v2797
        %v4054 = vpack.c.b16 %v2806, %v2802
        %v4055 = vpack.c.b16 %v2807, %v2803
        %v4056 = vpack.c.b16 %v2808, %v2804
        %v4057 = vpack.c.b16 %v2809, %v2805
        %v4058 = vpack.c.b16 %v2814, %v2810
        %v4059 = vpack.c.b16 %v2815, %v2811
        %v4060 = vpack.c.b16 %v2816, %v2812
        %v4061 = vpack.c.b16 %v2817, %v2813
        %v4062 = vpack.c.b16 %v2822, %v2818
        %v4063 = vpack.c.b16 %v2823, %v2819
        %v4064 = vpack.c.b16 %v2824, %v2820
        %v4065 = vpack.c.b16 %v2825, %v2821
        %v4066 = vpack.c.b16 %v2830, %v2826
        %v4067 = vpack.c.b16 %v2831, %v2827
        %v4068 = vpack.c.b16 %v2832, %v2828
        %v4069 = vpack.c.b16 %v2833, %v2829
        %v4070 = vpack.c.b16 %v2838, %v2834
        %v4071 = vpack.c.b16 %v2839, %v2835
        %v4072 = vpack.c.b16 %v2840, %v2836
        %v4073 = vpack.c.b16 %v2841, %v2837
        %v4074 = vpack.c.b16 %v2846, %v2842
        %v4075 = vpack.c.b16 %v2847, %v2843
        %v4076 = vpack.c.b16 %v2848, %v2844
        %v4077 = vpack.c.b16 %v2849, %v2845
        %v4078 = vpack.c.b16 %v2854, %v2850
        %v4079 = vpack.c.b16 %v2855, %v2851
        %v4080 = vpack.c.b16 %v2856, %v2852
        %v4081 = vpack.c.b16 %v2857, %v2853
        %v4082 = vpack.c.b16 %v2862, %v2858
        %v4083 = vpack.c.b16 %v2863, %v2859
        %v4084 = vpack.c.b16 %v2864, %v2860
        %v4085 = vpack.c.b16 %v2865, %v2861
        %v4086 = vpack.c.b16 %v2870, %v2866
        %v4087 = vpack.c.b16 %v2871, %v2867
        %v4088 = vpack.c.b16 %v2872, %v2868
        %v4089 = vpack.c.b16 %v2873, %v2869
        %v4090 = vpack.c.b16 %v2878, %v2874
        %v4091 = vpack.c.b16 %v2879, %v2875
        %v4092 = vpack.c.b16 %v2880, %v2876
        %v4093 = vpack.c.b16 %v2881, %v2877
        %v4094 = vpack.c.b16 %v2886, %v2882
        %v4095 = vpack.c.b16 %v2887, %v2883
        %v4096 = vpack.c.b16 %v2888, %v2884
        %v4097 = vpack.c.b16 %v2889, %v2885
        %v4098 = vpack.c.b16 %v2894, %v2890
        %v4099 = vpack.c.b16 %v2895, %v2891
        %v4100 = vpack.c.b16 %v2896, %v2892
        %v4101 = vpack.c.b16 %v2897, %v2893
        %v4102 = vpack.c.b16 %v2902, %v2898
        %v4103 = vpack.c.b16 %v2903, %v2899
        %v4104 = vpack.c.b16 %v2904, %v2900
        %v4105 = vpack.c.b16 %v2905, %v2901
        %v4106 = vpack.c.b16 %v2910, %v2906
        %v4107 = vpack.c.b16 %v2911, %v2907
        %v4108 = vpack.c.b16 %v2912, %v2908
        %v4109 = vpack.c.b16 %v2913, %v2909
        %v4110 = vpack.c.b16 %v2918, %v2914
        %v4111 = vpack.c.b16 %v2919, %v2915
        %v4112 = vpack.c.b16 %v2920, %v2916
        %v4113 = vpack.c.b16 %v2921, %v2917
        %v4114 = vpack.c.b16 %v2926, %v2922
        %v4115 = vpack.c.b16 %v2927, %v2923
        %v4116 = vpack.c.b16 %v2928, %v2924
        %v4117 = vpack.c.b16 %v2929, %v2925
        %v4118 = vpack.c.b16 %v2934, %v2930
        %v4119 = vpack.c.b16 %v2935, %v2931
        %v4120 = vpack.c.b16 %v2936, %v2932
        %v4121 = vpack.c.b16 %v2937, %v2933
        %v4122 = vpack.c.b16 %v2942, %v2938
        %v4123 = vpack.c.b16 %v2943, %v2939
        %v4124 = vpack.c.b16 %v2944, %v2940
        %v4125 = vpack.c.b16 %v2945, %v2941
        %v4126 = vpack.c.b16 %v2950, %v2946
        %v4127 = vpack.c.b16 %v2951, %v2947
        %v4128 = vpack.c.b16 %v2952, %v2948
        %v4129 = vpack.c.b16 %v2953, %v2949
        %v4130 = vpack.c.b16 %v2958, %v2954
        %v4131 = vpack.c.b16 %v2959, %v2955
        %v4132 = vpack.c.b16 %v2960, %v2956
        %v4133 = vpack.c.b16 %v2961, %v2957
        %v4134 = vpack.c.b16 %v2966, %v2962
        %v4135 = vpack.c.b16 %v2967, %v2963
        %v4136 = vpack.c.b16 %v2968, %v2964
        %v4137 = vpack.c.b16 %v2969, %v2965
        %v4138 = vpack.c.b16 %v2974, %v2970
        %v4139 = vpack.c.b16 %v2975, %v2971
        %v4140 = vpack.c.b16 %v2976, %v2972
        %v4141 = vpack.c.b16 %v2977, %v2973
        %v4142 = vpack.c.b16 %v2982, %v2978
        %v4143 = vpack.c.b16 %v2983, %v2979
        %v4144 = vpack.c.b16 %v2984, %v2980
        %v4145 = vpack.c.b16 %v2985, %v2981
        %v4146 = vpack.c.b16 %v2990, %v2986
        %v4147 = vpack.c.b16 %v2991, %v2987
        %v4148 = vpack.c.b16 %v2992, %v2988
        %v4149 = vpack.c.b16 %v2993, %v2989
        %v4150 = vpack.c.b16 %v2998, %v2994
        %v4151 = vpack.c.b16 %v2999, %v2995
        %v4152 = vpack.c.b16 %v3000, %v2996
        %v4153 = vpack.c.b16 %v3001, %v2997
        %v4154 = vpack.c.b16 %v3006, %v3002
        %v4155 = vpack.c.b16 %v3007, %v3003
        %v4156 = vpack.c.b16 %v3008, %v3004
        %v4157 = vpack.c.b16 %v3009, %v3005
        %v4158 = vpack.c.b16 %v3014, %v3010
        %v4159 = vpack.c.b16 %v3015, %v3011
        %v4160 = vpack.c.b16 %v3016, %v3012
        %v4161 = vpack.c.b16 %v3017, %v3013
        %v4162 = vpack.c.b16 %v3022, %v3018
        %v4163 = vpack.c.b16 %v3023, %v3019
        %v4164 = vpack.c.b16 %v3024, %v3020
        %v4165 = vpack.c.b16 %v3025, %v3021
        %v4166 = vpack.c.b16 %v3030, %v3026
        %v4167 = vpack.c.b16 %v3031, %v3027
        %v4168 = vpack.c.b16 %v3032, %v3028
        %v4169 = vpack.c.b16 %v3033, %v3029
        %v4170 = vpack.c.b16 %v3038, %v3034
        %v4171 = vpack.c.b16 %v3039, %v3035
        %v4172 = vpack.c.b16 %v3040, %v3036
        %v4173 = vpack.c.b16 %v3041, %v3037
        %v4174 = vpack.c.b16 %v3046, %v3042
        %v4175 = vpack.c.b16 %v3047, %v3043
        %v4176 = vpack.c.b16 %v3048, %v3044
        %v4177 = vpack.c.b16 %v3049, %v3045
        %v4178 = vpack.c.b16 %v3054, %v3050
        %v4179 = vpack.c.b16 %v3055, %v3051
        %v4180 = vpack.c.b16 %v3056, %v3052
        %v4181 = vpack.c.b16 %v3057, %v3053
        %v4182 = vpack.c.b16 %v3062, %v3058
        %v4183 = vpack.c.b16 %v3063, %v3059
        %v4184 = vpack.c.b16 %v3064, %v3060
        %v4185 = vpack.c.b16 %v3065, %v3061
        %v4186 = vpack.c.b16 %v3070, %v3066
        %v4187 = vpack.c.b16 %v3071, %v3067
        %v4188 = vpack.c.b16 %v3072, %v3068
        %v4189 = vpack.c.b16 %v3073, %v3069
        %v4190 = vpack.c.b16 %v3078, %v3074
        %v4191 = vpack.c.b16 %v3079, %v3075
        %v4192 = vpack.c.b16 %v3080, %v3076
        %v4193 = vpack.c.b16 %v3081, %v3077
        %v4194 = vpack.c.b16 %v3086, %v3082
        %v4195 = vpack.c.b16 %v3087, %v3083
        %v4196 = vpack.c.b16 %v3088, %v3084
        %v4197 = vpack.c.b16 %v3089, %v3085
        %v4198 = vpack.c.b16 %v3094, %v3090
        %v4199 = vpack.c.b16 %v3095, %v3091
        %v4200 = vpack.c.b16 %v3096, %v3092
        %v4201 = vpack.c.b16 %v3097, %v3093
        %v4202 = vpack.c.b16 %v3102, %v3098
        %v4203 = vpack.c.b16 %v3103, %v3099
        %v4204 = vpack.c.b16 %v3104, %v3100
        %v4205 = vpack.c.b16 %v3105, %v3101
        %v4206 = vpack.c.b16 %v3110, %v3106
        %v4207 = vpack.c.b16 %v3111, %v3107
        %v4208 = vpack.c.b16 %v3112, %v3108
        %v4209 = vpack.c.b16 %v3113, %v3109
        %v4210 = vpack.c.b16 %v3118, %v3114
        %v4211 = vpack.c.b16 %v3119, %v3115
        %v4212 = vpack.c.b16 %v3120, %v3116
        %v4213 = vpack.c.b16 %v3121, %v3117
        %v4214 = vpack.c.b16 %v3126, %v3122
        %v4215 = vpack.c.b16 %v3127, %v3123
        %v4216 = vpack.c.b16 %v3128, %v3124
        %v4217 = vpack.c.b16 %v3129, %v3125
        %v4218 = vpack.c.b16 %v3134, %v3130
        %v4219 = vpack.c.b16 %v3135, %v3131
        %v4220 = vpack.c.b16 %v3136, %v3132
        %v4221 = vpack.c.b16 %v3137, %v3133
        %v4222 = vpack.c.b16 %v3142, %v3138
        %v4223 = vpack.c.b16 %v3143, %v3139
        %v4224 = vpack.c.b16 %v3144, %v3140
        %v4225 = vpack.c.b16 %v3145, %v3141
        %v4226 = vpack.c.b16 %v3150, %v3146
        %v4227 = vpack.c.b16 %v3151, %v3147
        %v4228 = vpack.c.b16 %v3152, %v3148
        %v4229 = vpack.c.b16 %v3153, %v3149
        %v4230 = vpack.c.b16 %v3158, %v3154
        %v4231 = vpack.c.b16 %v3159, %v3155
        %v4232 = vpack.c.b16 %v3160, %v3156
        %v4233 = vpack.c.b16 %v3161, %v3157
        %v4234 = vpack.c.b16 %v3166, %v3162
        %v4235 = vpack.c.b16 %v3167, %v3163
        %v4236 = vpack.c.b16 %v3168, %v3164
        %v4237 = vpack.c.b16 %v3169, %v3165
        %v4238 = vpack.c.b16 %v3174, %v3170
        %v4239 = vpack.c.b16 %v3175, %v3171
        %v4240 = vpack.c.b16 %v3176, %v3172
        %v4241 = vpack.c.b16 %v3177, %v3173
        %v4242 = vpack.c.b16 %v3182, %v3178
        %v4243 = vpack.c.b16 %v3183, %v3179
        %v4244 = vpack.c.b16 %v3184, %v3180
        %v4245 = vpack.c.b16 %v3185, %v3181
        %v4246 = vpack.c.b16 %v3190, %v3186
        %v4247 = vpack.c.b16 %v3191, %v3187
        %v4248 = vpack.c.b16 %v3192, %v3188
        %v4249 = vpack.c.b16 %v3193, %v3189
        %v4250 = vpack.c.b16 %v3198, %v3194
        %v4251 = vpack.c.b16 %v3199, %v3195
        %v4252 = vpack.c.b16 %v3200, %v3196
        %v4253 = vpack.c.b16 %v3201, %v3197
        %v4254 = vpack.c.b16 %v3206, %v3202
        %v4255 = vpack.c.b16 %v3207, %v3203
        %v4256 = vpack.c.b16 %v3208, %v3204
        %v4257 = vpack.c.b16 %v3209, %v3205
        %v4258 = vpack.c.b16 %v3214, %v3210
        %v4259 = vpack.c.b16 %v3215, %v3211
        %v4260 = vpack.c.b16 %v3216, %v3212
        %v4261 = vpack.c.b16 %v3217, %v3213
        %v4262 = vpack.c.b16 %v3222, %v3218
        %v4263 = vpack.c.b16 %v3223, %v3219
        %v4264 = vpack.c.b16 %v3224, %v3220
        %v4265 = vpack.c.b16 %v3225, %v3221
        %v4266 = vpack.c.b16 %v3230, %v3226
        %v4267 = vpack.c.b16 %v3231, %v3227
        %v4268 = vpack.c.b16 %v3232, %v3228
        %v4269 = vpack.c.b16 %v3233, %v3229
        %v4270 = vpack.c.b16 %v3238, %v3234
        %v4271 = vpack.c.b16 %v3239, %v3235
        %v4272 = vpack.c.b16 %v3240, %v3236
        %v4273 = vpack.c.b16 %v3241, %v3237
        %v4274 = vpack.c.b16 %v3246, %v3242
        %v4275 = vpack.c.b16 %v3247, %v3243
        %v4276 = vpack.c.b16 %v3248, %v3244
        %v4277 = vpack.c.b16 %v3249, %v3245
        %v4278 = vpack.c.b16 %v3254, %v3250
        %v4279 = vpack.c.b16 %v3255, %v3251
        %v4280 = vpack.c.b16 %v3256, %v3252
        %v4281 = vpack.c.b16 %v3257, %v3253
        %v4282 = vpack.c.b16 %v3262, %v3258
        %v4283 = vpack.c.b16 %v3263, %v3259
        %v4284 = vpack.c.b16 %v3264, %v3260
        %v4285 = vpack.c.b16 %v3265, %v3261
        %v4286 = vpack.c.b16 %v3270, %v3266
        %v4287 = vpack.c.b16 %v3271, %v3267
        %v4288 = vpack.c.b16 %v3272, %v3268
        %v4289 = vpack.c.b16 %v3273, %v3269
        %v4290 = vpack.c.b16 %v3278, %v3274
        %v4291 = vpack.c.b16 %v3279, %v3275
        %v4292 = vpack.c.b16 %v3280, %v3276
        %v4293 = vpack.c.b16 %v3281, %v3277
        %v4294 = vpack.c.b16 %v3286, %v3282
        %v4295 = vpack.c.b16 %v3287, %v3283
        %v4296 = vpack.c.b16 %v3288, %v3284
        %v4297 = vpack.c.b16 %v3289, %v3285
        %v4298 = vpack.c.b16 %v3294, %v3290
        %v4299 = vpack.c.b16 %v3295, %v3291
        %v4300 = vpack.c.b16 %v3296, %v3292
        %v4301 = vpack.c.b16 %v3297, %v3293
        %v4302 = vpack.c.b16 %v3302, %v3298
        %v4303 = vpack.c.b16 %v3303, %v3299
        %v4304 = vpack.c.b16 %v3304, %v3300
        %v4305 = vpack.c.b16 %v3305, %v3301
        %v4306 = vpack.c.b16 %v3310, %v3306
        %v4307 = vpack.c.b16 %v3311, %v3307
        %v4308 = vpack.c.b16 %v3312, %v3308
        %v4309 = vpack.c.b16 %v3313, %v3309
        %v4310 = vpack.c.b16 %v3318, %v3314
        %v4311 = vpack.c.b16 %v3319, %v3315
        %v4312 = vpack.c.b16 %v3320, %v3316
        %v4313 = vpack.c.b16 %v3321, %v3317
        %v4314 = vpack.c.b16 %v3326, %v3322
        %v4315 = vpack.c.b16 %v3327, %v3323
        %v4316 = vpack.c.b16 %v3328, %v3324
        %v4317 = vpack.c.b16 %v3329, %v3325
        %v4318 = vpack.c.b16 %v3334, %v3330
        %v4319 = vpack.c.b16 %v3335, %v3331
        %v4320 = vpack.c.b16 %v3336, %v3332
        %v4321 = vpack.c.b16 %v3337, %v3333
        %v4322 = vpack.c.b16 %v3342, %v3338
        %v4323 = vpack.c.b16 %v3343, %v3339
        %v4324 = vpack.c.b16 %v3344, %v3340
        %v4325 = vpack.c.b16 %v3345, %v3341
        %v4326 = vpack.c.b16 %v3350, %v3346
        %v4327 = vpack.c.b16 %v3351, %v3347
        %v4328 = vpack.c.b16 %v3352, %v3348
        %v4329 = vpack.c.b16 %v3353, %v3349
        %v4330 = vpack.c.b16 %v3358, %v3354
        %v4331 = vpack.c.b16 %v3359, %v3355
        %v4332 = vpack.c.b16 %v3360, %v3356
        %v4333 = vpack.c.b16 %v3361, %v3357
        %v4334 = vpack.c.b16 %v3366, %v3362
        %v4335 = vpack.c.b16 %v3367, %v3363
        %v4336 = vpack.c.b16 %v3368, %v3364
        %v4337 = vpack.c.b16 %v3369, %v3365
        %v4338 = vpack.c.b16 %v3374, %v3370
        %v4339 = vpack.c.b16 %v3375, %v3371
        %v4340 = vpack.c.b16 %v3376, %v3372
        %v4341 = vpack.c.b16 %v3377, %v3373
        %v4342 = vpack.c.b16 %v3382, %v3378
        %v4343 = vpack.c.b16 %v3383, %v3379
        %v4344 = vpack.c.b16 %v3384, %v3380
        %v4345 = vpack.c.b16 %v3385, %v3381
        %v4346 = vpack.c.b16 %v3390, %v3386
        %v4347 = vpack.c.b16 %v3391, %v3387
        %v4348 = vpack.c.b16 %v3392, %v3388
        %v4349 = vpack.c.b16 %v3393, %v3389
        %v4350 = vpack.c.b16 %v3398, %v3394
        %v4351 = vpack.c.b16 %v3399, %v3395
        %v4352 = vpack.c.b16 %v3400, %v3396
        %v4353 = vpack.c.b16 %v3401, %v3397
        %v4354 = vpack.c.b16 %v3406, %v3402
        %v4355 = vpack.c.b16 %v3407, %v3403
        %v4356 = vpack.c.b16 %v3408, %v3404
        %v4357 = vpack.c.b16 %v3409, %v3405
        %v4358 = vpack.c.b16 %v3414, %v3410
        %v4359 = vpack.c.b16 %v3415, %v3411
        %v4360 = vpack.c.b16 %v3416, %v3412
        %v4361 = vpack.c.b16 %v3417, %v3413
        %v4362 = vpack.c.b16 %v3422, %v3418
        %v4363 = vpack.c.b16 %v3423, %v3419
        %v4364 = vpack.c.b16 %v3424, %v3420
        %v4365 = vpack.c.b16 %v3425, %v3421
        %v4366 = vpack.c.b16 %v3430, %v3426
        %v4367 = vpack.c.b16 %v3431, %v3427
        %v4368 = vpack.c.b16 %v3432, %v3428
        %v4369 = vpack.c.b16 %v3433, %v3429
        %v4370 = vpack.c.b16 %v3438, %v3434
        %v4371 = vpack.c.b16 %v3439, %v3435
        %v4372 = vpack.c.b16 %v3440, %v3436
        %v4373 = vpack.c.b16 %v3441, %v3437
        %v4374 = vpack.c.b16 %v3446, %v3442
        %v4375 = vpack.c.b16 %v3447, %v3443
        %v4376 = vpack.c.b16 %v3448, %v3444
        %v4377 = vpack.c.b16 %v3449, %v3445
        %v4378 = vpack.c.b16 %v3454, %v3450
        %v4379 = vpack.c.b16 %v3455, %v3451
        %v4380 = vpack.c.b16 %v3456, %v3452
        %v4381 = vpack.c.b16 %v3457, %v3453
        %v4382 = vpack.c.b16 %v3462, %v3458
        %v4383 = vpack.c.b16 %v3463, %v3459
        %v4384 = vpack.c.b16 %v3464, %v3460
        %v4385 = vpack.c.b16 %v3465, %v3461
        %v4386 = vpack.c.b16 %v3470, %v3466
        %v4387 = vpack.c.b16 %v3471, %v3467
        %v4388 = vpack.c.b16 %v3472, %v3468
        %v4389 = vpack.c.b16 %v3473, %v3469
        %v4390 = vpack.c.b16 %v3478, %v3474
        %v4391 = vpack.c.b16 %v3479, %v3475
        %v4392 = vpack.c.b16 %v3480, %v3476
        %v4393 = vpack.c.b16 %v3481, %v3477
        %v4394 = vpack.c.b16 %v3486, %v3482
        %v4395 = vpack.c.b16 %v3487, %v3483
        %v4396 = vpack.c.b16 %v3488, %v3484
        %v4397 = vpack.c.b16 %v3489, %v3485
        %v4398 = vpack.c.b16 %v3494, %v3490
        %v4399 = vpack.c.b16 %v3495, %v3491
        %v4400 = vpack.c.b16 %v3496, %v3492
        %v4401 = vpack.c.b16 %v3497, %v3493
        %v4402 = vpack.c.b16 %v3502, %v3498
        %v4403 = vpack.c.b16 %v3503, %v3499
        %v4404 = vpack.c.b16 %v3504, %v3500
        %v4405 = vpack.c.b16 %v3505, %v3501
        %v4406 = vpack.c.b16 %v3510, %v3506
        %v4407 = vpack.c.b16 %v3511, %v3507
        %v4408 = vpack.c.b16 %v3512, %v3508
        %v4409 = vpack.c.b16 %v3513, %v3509
        %v4410 = vpack.c.b16 %v3518, %v3514
        %v4411 = vpack.c.b16 %v3519, %v3515
        %v4412 = vpack.c.b16 %v3520, %v3516
        %v4413 = vpack.c.b16 %v3521, %v3517
        %v4414 = vpack.c.b16 %v3526, %v3522
        %v4415 = vpack.c.b16 %v3527, %v3523
        %v4416 = vpack.c.b16 %v3528, %v3524
        %v4417 = vpack.c.b16 %v3529, %v3525
        %v4418 = vpack.c.b16 %v3534, %v3530
        %v4419 = vpack.c.b16 %v3535, %v3531
        %v4420 = vpack.c.b16 %v3536, %v3532
        %v4421 = vpack.c.b16 %v3537, %v3533
        %v4422 = vpack.c.b16 %v3542, %v3538
        %v4423 = vpack.c.b16 %v3543, %v3539
        %v4424 = vpack.c.b16 %v3544, %v3540
        %v4425 = vpack.c.b16 %v3545, %v3541
        %v4426 = vpack.c.b16 %v3550, %v3546
        %v4427 = vpack.c.b16 %v3551, %v3547
        %v4428 = vpack.c.b16 %v3552, %v3548
        %v4429 = vpack.c.b16 %v3553, %v3549
        %v4430 = vpack.c.b16 %v3558, %v3554
        %v4431 = vpack.c.b16 %v3559, %v3555
        %v4432 = vpack.c.b16 %v3560, %v3556
        %v4433 = vpack.c.b16 %v3561, %v3557
        %v4434 = vpack.c.b16 %v3566, %v3562
        %v4435 = vpack.c.b16 %v3567, %v3563
        %v4436 = vpack.c.b16 %v3568, %v3564
        %v4437 = vpack.c.b16 %v3569, %v3565
        %v4438 = vpack.c.b16 %v3574, %v3570
        %v4439 = vpack.c.b16 %v3575, %v3571
        %v4440 = vpack.c.b16 %v3576, %v3572
        %v4441 = vpack.c.b16 %v3577, %v3573
        %v4442 = vpack.c.b16 %v3582, %v3578
        %v4443 = vpack.c.b16 %v3583, %v3579
        %v4444 = vpack.c.b16 %v3584, %v3580
        %v4445 = vpack.c.b16 %v3585, %v3581
        %v4446 = vpack.c.b16 %v3590, %v3586
        %v4447 = vpack.c.b16 %v3591, %v3587
        %v4448 = vpack.c.b16 %v3592, %v3588
        %v4449 = vpack.c.b16 %v3593, %v3589
        %v4450 = vpack.c.b16 %v3598, %v3594
        %v4451 = vpack.c.b16 %v3599, %v3595
        %v4452 = vpack.c.b16 %v3600, %v3596
        %v4453 = vpack.c.b16 %v3601, %v3597
        %v4454 = vpack.c.b16 %v3606, %v3602
        %v4455 = vpack.c.b16 %v3607, %v3603
        %v4456 = vpack.c.b16 %v3608, %v3604
        %v4457 = vpack.c.b16 %v3609, %v3605
        %v4458 = vpack.c.b16 %v3614, %v3610
        %v4459 = vpack.c.b16 %v3615, %v3611
        %v4460 = vpack.c.b16 %v3616, %v3612
        %v4461 = vpack.c.b16 %v3617, %v3613
        %v4462 = vpack.c.b16 %v3622, %v3618
        %v4463 = vpack.c.b16 %v3623, %v3619
        %v4464 = vpack.c.b16 %v3624, %v3620
        %v4465 = vpack.c.b16 %v3625, %v3621
        %v4466 = vpack.c.b16 %v3630, %v3626
        %v4467 = vpack.c.b16 %v3631, %v3627
        %v4468 = vpack.c.b16 %v3632, %v3628
        %v4469 = vpack.c.b16 %v3633, %v3629
        %v4470 = vpack.c.b16 %v3638, %v3634
        %v4471 = vpack.c.b16 %v3639, %v3635
        %v4472 = vpack.c.b16 %v3640, %v3636
        %v4473 = vpack.c.b16 %v3641, %v3637
        %v4474 = vpack.c.b16 %v3646, %v3642
        %v4475 = vpack.c.b16 %v3647, %v3643
        %v4476 = vpack.c.b16 %v3648, %v3644
        %v4477 = vpack.c.b16 %v3649, %v3645
        %v4478 = vpack.c.b16 %v3654, %v3650
        %v4479 = vpack.c.b16 %v3655, %v3651
        %v4480 = vpack.c.b16 %v3656, %v3652
        %v4481 = vpack.c.b16 %v3657, %v3653
        %v4482 = vpack.c.b16 %v3662, %v3658
        %v4483 = vpack.c.b16 %v3663, %v3659
        %v4484 = vpack.c.b16 %v3664, %v3660
        %v4485 = vpack.c.b16 %v3665, %v3661
        %v4486 = vpack.c.b16 %v3670, %v3666
        %v4487 = vpack.c.b16 %v3671, %v3667
        %v4488 = vpack.c.b16 %v3672, %v3668
        %v4489 = vpack.c.b16 %v3673, %v3669
        %v4490 = vpack.c.b16 %v3678, %v3674
        %v4491 = vpack.c.b16 %v3679, %v3675
        %v4492 = vpack.c.b16 %v3680, %v3676
        %v4493 = vpack.c.b16 %v3681, %v3677
        %v4494 = vpack.c.b16 %v3686, %v3682
        %v4495 = vpack.c.b16 %v3687, %v3683
        %v4496 = vpack.c.b16 %v3688, %v3684
        %v4497 = vpack.c.b16 %v3689, %v3685
        %v4498 = vpack.c.b16 %v3694, %v3690
        %v4499 = vpack.c.b16 %v3695, %v3691
        %v4500 = vpack.c.b16 %v3696, %v3692
        %v4501 = vpack.c.b16 %v3697, %v3693
        %v4502 = vpack.c.b16 %v3702, %v3698
        %v4503 = vpack.c.b16 %v3703, %v3699
        %v4504 = vpack.c.b16 %v3704, %v3700
        %v4505 = vpack.c.b16 %v3705, %v3701
        %v4506 = vpack.c.b16 %v3710, %v3706
        %v4507 = vpack.c.b16 %v3711, %v3707
        %v4508 = vpack.c.b16 %v3712, %v3708
        %v4509 = vpack.c.b16 %v3713, %v3709
        %v4510 = vpack.c.b16 %v3718, %v3714
        %v4511 = vpack.c.b16 %v3719, %v3715
        %v4512 = vpack.c.b16 %v3720, %v3716
        %v4513 = vpack.c.b16 %v3721, %v3717
        %v4514 = vpack.c.b16 %v3726, %v3722
        %v4515 = vpack.c.b16 %v3727, %v3723
        %v4516 = vpack.c.b16 %v3728, %v3724
        %v4517 = vpack.c.b16 %v3729, %v3725
        %v4518 = vpack.c.b16 %v3734, %v3730
        %v4519 = vpack.c.b16 %v3735, %v3731
        %v4520 = vpack.c.b16 %v3736, %v3732
        %v4521 = vpack.c.b16 %v3737, %v3733
        %v4522 = vpack.c.b16 %v3742, %v3738
        %v4523 = vpack.c.b16 %v3743, %v3739
        %v4524 = vpack.c.b16 %v3744, %v3740
        %v4525 = vpack.c.b16 %v3745, %v3741
        %v4526 = vpack.c.b16 %v3750, %v3746
        %v4527 = vpack.c.b16 %v3751, %v3747
        %v4528 = vpack.c.b16 %v3752, %v3748
        %v4529 = vpack.c.b16 %v3753, %v3749
        %v4530 = vpack.c.b16 %v3758, %v3754
        %v4531 = vpack.c.b16 %v3759, %v3755
        %v4532 = vpack.c.b16 %v3760, %v3756
        %v4533 = vpack.c.b16 %v3761, %v3757
        %v4534 = vpack.c.b16 %v3766, %v3762
        %v4535 = vpack.c.b16 %v3767, %v3763
        %v4536 = vpack.c.b16 %v3768, %v3764
        %v4537 = vpack.c.b16 %v3769, %v3765
        %5306 = vmatpush.bf16.msra.mxu0 %v3798
        %5307 = vmatpush.bf16.msra.mxu0 %v3794
        %5308 = vmatpush.bf16.msra.mxu0 %v3790
        %5309 = vmatpush.bf16.msra.mxu0 %v3786
        %5310 = vmatpush.bf16.msra.mxu0 %v3782
        %5311 = vmatpush.bf16.msra.mxu0 %v3778
        %5312 = vmatpush.bf16.msra.mxu0 %v3774
        %5313 = vmatpush.bf16.msra.mxu0 %v3770
        %5314 = vmatmul.bf16.gmra.mxu0 %v1418
        %v5315 = vpop.f32.mrf.mxu0
        %v5316 = vadd.f32 0.0, %v5315
        %v5317 = vpop.f32.mrf.mxu0
        %5318 = vdwg.mxu0
        %5319 = vmatpush.bf16.msra.mxu0 %v3830
        %5320 = vmatpush.bf16.msra.mxu0 %v3826
        %5321 = vmatpush.bf16.msra.mxu0 %v3822
        %5322 = vmatpush.bf16.msra.mxu0 %v3818
        %5323 = vmatpush.bf16.msra.mxu0 %v3814
        %5324 = vmatpush.bf16.msra.mxu0 %v3810
        %5325 = vmatpush.bf16.msra.mxu0 %v3806
        %5326 = vmatpush.bf16.msra.mxu0 %v3802
        %5327 = vmatmul.bf16.gmra.mxu0 %v1419
        %v5328 = vpop.f32.mrf.mxu0
        %v5329 = vadd.f32 %v5316, %v5328
        %v5330 = vpop.f32.mrf.mxu0
        %5331 = vdwg.mxu0
        %5332 = vmatpush.bf16.msra.mxu0 %v3862
        %5333 = vmatpush.bf16.msra.mxu0 %v3858
        %5334 = vmatpush.bf16.msra.mxu0 %v3854
        %5335 = vmatpush.bf16.msra.mxu0 %v3850
        %5336 = vmatpush.bf16.msra.mxu0 %v3846
        %5337 = vmatpush.bf16.msra.mxu0 %v3842
        %5338 = vmatpush.bf16.msra.mxu0 %v3838
        %5339 = vmatpush.bf16.msra.mxu0 %v3834
        %5340 = vmatmul.bf16.gmra.mxu0 %v1420
        %v5341 = vpop.f32.mrf.mxu0
        %v5342 = vadd.f32 %v5329, %v5341
        %v5343 = vpop.f32.mrf.mxu0
        %5344 = vdwg.mxu0
        %5345 = vmatpush.bf16.msra.mxu0 %v3894
        %5346 = vmatpush.bf16.msra.mxu0 %v3890
        %5347 = vmatpush.bf16.msra.mxu0 %v3886
        %5348 = vmatpush.bf16.msra.mxu0 %v3882
        %5349 = vmatpush.bf16.msra.mxu0 %v3878
        %5350 = vmatpush.bf16.msra.mxu0 %v3874
        %5351 = vmatpush.bf16.msra.mxu0 %v3870
        %5352 = vmatpush.bf16.msra.mxu0 %v3866
        %5353 = vmatmul.bf16.gmra.mxu0 %v1421
        %v5354 = vpop.f32.mrf.mxu0
        %v5355 = vadd.f32 %v5342, %v5354
        %v5356 = vpop.f32.mrf.mxu0
        %5357 = vdwg.mxu0
        %5358 = vmatpush.bf16.msra.mxu0 %v3926
        %5359 = vmatpush.bf16.msra.mxu0 %v3922
        %5360 = vmatpush.bf16.msra.mxu0 %v3918
        %5361 = vmatpush.bf16.msra.mxu0 %v3914
        %5362 = vmatpush.bf16.msra.mxu0 %v3910
        %5363 = vmatpush.bf16.msra.mxu0 %v3906
        %5364 = vmatpush.bf16.msra.mxu0 %v3902
        %5365 = vmatpush.bf16.msra.mxu0 %v3898
        %5366 = vmatmul.bf16.gmra.mxu0 %v1422
        %v5367 = vpop.f32.mrf.mxu0
        %v5368 = vadd.f32 %v5355, %v5367
        %v5369 = vpop.f32.mrf.mxu0
        %5370 = vdwg.mxu0
        %5371 = vmatpush.bf16.msra.mxu0 %v3958
        %5372 = vmatpush.bf16.msra.mxu0 %v3954
        %5373 = vmatpush.bf16.msra.mxu0 %v3950
        %5374 = vmatpush.bf16.msra.mxu0 %v3946
        %5375 = vmatpush.bf16.msra.mxu0 %v3942
        %5376 = vmatpush.bf16.msra.mxu0 %v3938
        %5377 = vmatpush.bf16.msra.mxu0 %v3934
        %5378 = vmatpush.bf16.msra.mxu0 %v3930
        %5379 = vmatmul.bf16.gmra.mxu0 %v1423
        %v5380 = vpop.f32.mrf.mxu0
        %v5381 = vadd.f32 %v5368, %v5380
        %v5382 = vpop.f32.mrf.mxu0
        %5383 = vdwg.mxu0
        %5384 = vmatpush.bf16.msra.mxu0 %v3990
        %5385 = vmatpush.bf16.msra.mxu0 %v3986
        %5386 = vmatpush.bf16.msra.mxu0 %v3982
        %5387 = vmatpush.bf16.msra.mxu0 %v3978
        %5388 = vmatpush.bf16.msra.mxu0 %v3974
        %5389 = vmatpush.bf16.msra.mxu0 %v3970
        %5390 = vmatpush.bf16.msra.mxu0 %v3966
        %5391 = vmatpush.bf16.msra.mxu0 %v3962
        %5392 = vmatmul.bf16.gmra.mxu0 %v1424
        %v5393 = vpop.f32.mrf.mxu0
        %v5394 = vadd.f32 %v5381, %v5393
        %v5395 = vpop.f32.mrf.mxu0
        %5396 = vdwg.mxu0
        %5397 = vmatpush.bf16.msra.mxu0 %v4022
        %5398 = vmatpush.bf16.msra.mxu0 %v4018
        %5399 = vmatpush.bf16.msra.mxu0 %v4014
        %5400 = vmatpush.bf16.msra.mxu0 %v4010
        %5401 = vmatpush.bf16.msra.mxu0 %v4006
        %5402 = vmatpush.bf16.msra.mxu0 %v4002
        %5403 = vmatpush.bf16.msra.mxu0 %v3998
        %5404 = vmatpush.bf16.msra.mxu0 %v3994
        %5405 = vmatmul.bf16.gmra.mxu0 %v1425
        %v5406 = vpop.f32.mrf.mxu0
        %v5407 = vadd.f32 %v5394, %v5406
        %v5408 = vpop.f32.mrf.mxu0
        %5409 = vdwg.mxu0
        %5410 = vmatpush.bf16.msra.mxu0 %v4054
        %5411 = vmatpush.bf16.msra.mxu0 %v4050
        %5412 = vmatpush.bf16.msra.mxu0 %v4046
        %5413 = vmatpush.bf16.msra.mxu0 %v4042
        %5414 = vmatpush.bf16.msra.mxu0 %v4038
        %5415 = vmatpush.bf16.msra.mxu0 %v4034
        %5416 = vmatpush.bf16.msra.mxu0 %v4030
        %5417 = vmatpush.bf16.msra.mxu0 %v4026
        %5418 = vmatmul.bf16.gmra.mxu0 %v1426
        %v5419 = vpop.f32.mrf.mxu0
        %v5420 = vadd.f32 %v5407, %v5419
        %v5421 = vpop.f32.mrf.mxu0
        %5422 = vdwg.mxu0
        %5423 = vmatpush.bf16.msra.mxu0 %v4086
        %5424 = vmatpush.bf16.msra.mxu0 %v4082
        %5425 = vmatpush.bf16.msra.mxu0 %v4078
        %5426 = vmatpush.bf16.msra.mxu0 %v4074
        %5427 = vmatpush.bf16.msra.mxu0 %v4070
        %5428 = vmatpush.bf16.msra.mxu0 %v4066
        %5429 = vmatpush.bf16.msra.mxu0 %v4062
        %5430 = vmatpush.bf16.msra.mxu0 %v4058
        %5431 = vmatmul.bf16.gmra.mxu0 %v1427
        %v5432 = vpop.f32.mrf.mxu0
        %v5433 = vadd.f32 %v5420, %v5432
        %v5434 = vpop.f32.mrf.mxu0
        %5435 = vdwg.mxu0
        %5436 = vmatpush.bf16.msra.mxu0 %v4118
        %5437 = vmatpush.bf16.msra.mxu0 %v4114
        %5438 = vmatpush.bf16.msra.mxu0 %v4110
        %5439 = vmatpush.bf16.msra.mxu0 %v4106
        %5440 = vmatpush.bf16.msra.mxu0 %v4102
        %5441 = vmatpush.bf16.msra.mxu0 %v4098
        %5442 = vmatpush.bf16.msra.mxu0 %v4094
        %5443 = vmatpush.bf16.msra.mxu0 %v4090
        %5444 = vmatmul.bf16.gmra.mxu0 %v1428
        %v5445 = vpop.f32.mrf.mxu0
        %v5446 = vadd.f32 %v5433, %v5445
        %v5447 = vpop.f32.mrf.mxu0
        %5448 = vdwg.mxu0
        %5449 = vmatpush.bf16.msra.mxu0 %v4150
        %5450 = vmatpush.bf16.msra.mxu0 %v4146
        %5451 = vmatpush.bf16.msra.mxu0 %v4142
        %5452 = vmatpush.bf16.msra.mxu0 %v4138
        %5453 = vmatpush.bf16.msra.mxu0 %v4134
        %5454 = vmatpush.bf16.msra.mxu0 %v4130
        %5455 = vmatpush.bf16.msra.mxu0 %v4126
        %5456 = vmatpush.bf16.msra.mxu0 %v4122
        %5457 = vmatmul.bf16.gmra.mxu0 %v1429
        %v5458 = vpop.f32.mrf.mxu0
        %v5459 = vadd.f32 %v5446, %v5458
        %v5460 = vpop.f32.mrf.mxu0
        %5461 = vdwg.mxu0
        %5462 = vmatpush.bf16.msra.mxu0 %v4182
        %5463 = vmatpush.bf16.msra.mxu0 %v4178
        %5464 = vmatpush.bf16.msra.mxu0 %v4174
        %5465 = vmatpush.bf16.msra.mxu0 %v4170
        %5466 = vmatpush.bf16.msra.mxu0 %v4166
        %5467 = vmatpush.bf16.msra.mxu0 %v4162
        %5468 = vmatpush.bf16.msra.mxu0 %v4158
        %5469 = vmatpush.bf16.msra.mxu0 %v4154
        %5470 = vmatmul.bf16.gmra.mxu0 %v1430
        %v5471 = vpop.f32.mrf.mxu0
        %v5472 = vadd.f32 %v5459, %v5471
        %v5473 = vpop.f32.mrf.mxu0
        %5474 = vdwg.mxu0
        %5475 = vmatpush.bf16.msra.mxu0 %v4214
        %5476 = vmatpush.bf16.msra.mxu0 %v4210
        %5477 = vmatpush.bf16.msra.mxu0 %v4206
        %5478 = vmatpush.bf16.msra.mxu0 %v4202
        %5479 = vmatpush.bf16.msra.mxu0 %v4198
        %5480 = vmatpush.bf16.msra.mxu0 %v4194
        %5481 = vmatpush.bf16.msra.mxu0 %v4190
        %5482 = vmatpush.bf16.msra.mxu0 %v4186
        %5483 = vmatmul.bf16.gmra.mxu0 %v1431
        %v5484 = vpop.f32.mrf.mxu0
        %v5485 = vadd.f32 %v5472, %v5484
        %v5486 = vpop.f32.mrf.mxu0
        %5487 = vdwg.mxu0
        %5488 = vmatpush.bf16.msra.mxu0 %v4246
        %5489 = vmatpush.bf16.msra.mxu0 %v4242
        %5490 = vmatpush.bf16.msra.mxu0 %v4238
        %5491 = vmatpush.bf16.msra.mxu0 %v4234
        %5492 = vmatpush.bf16.msra.mxu0 %v4230
        %5493 = vmatpush.bf16.msra.mxu0 %v4226
        %5494 = vmatpush.bf16.msra.mxu0 %v4222
        %5495 = vmatpush.bf16.msra.mxu0 %v4218
        %5496 = vmatmul.bf16.gmra.mxu0 %v1432
        %v5497 = vpop.f32.mrf.mxu0
        %v5498 = vadd.f32 %v5485, %v5497
        %v5499 = vpop.f32.mrf.mxu0
        %5500 = vdwg.mxu0
        %5501 = vmatpush.bf16.msra.mxu0 %v4278
        %5502 = vmatpush.bf16.msra.mxu0 %v4274
        %5503 = vmatpush.bf16.msra.mxu0 %v4270
        %5504 = vmatpush.bf16.msra.mxu0 %v4266
        %5505 = vmatpush.bf16.msra.mxu0 %v4262
        %5506 = vmatpush.bf16.msra.mxu0 %v4258
        %5507 = vmatpush.bf16.msra.mxu0 %v4254
        %5508 = vmatpush.bf16.msra.mxu0 %v4250
        %5509 = vmatmul.bf16.gmra.mxu0 %v1433
        %v5510 = vpop.f32.mrf.mxu0
        %v5511 = vadd.f32 %v5498, %v5510
        %v5512 = vpop.f32.mrf.mxu0
        %5513 = vdwg.mxu0
        %5514 = vmatpush.bf16.msra.mxu0 %v4310
        %5515 = vmatpush.bf16.msra.mxu0 %v4306
        %5516 = vmatpush.bf16.msra.mxu0 %v4302
        %5517 = vmatpush.bf16.msra.mxu0 %v4298
        %5518 = vmatpush.bf16.msra.mxu0 %v4294
        %5519 = vmatpush.bf16.msra.mxu0 %v4290
        %5520 = vmatpush.bf16.msra.mxu0 %v4286
        %5521 = vmatpush.bf16.msra.mxu0 %v4282
        %5522 = vmatmul.bf16.gmra.mxu0 %v1434
        %v5523 = vpop.f32.mrf.mxu0
        %v5524 = vadd.f32 %v5511, %v5523
        %v5525 = vpop.f32.mrf.mxu0
        %5526 = vdwg.mxu0
        %5527 = vmatpush.bf16.msra.mxu0 %v4342
        %5528 = vmatpush.bf16.msra.mxu0 %v4338
        %5529 = vmatpush.bf16.msra.mxu0 %v4334
        %5530 = vmatpush.bf16.msra.mxu0 %v4330
        %5531 = vmatpush.bf16.msra.mxu0 %v4326
        %5532 = vmatpush.bf16.msra.mxu0 %v4322
        %5533 = vmatpush.bf16.msra.mxu0 %v4318
        %5534 = vmatpush.bf16.msra.mxu0 %v4314
        %5535 = vmatmul.bf16.gmra.mxu0 %v1435
        %v5536 = vpop.f32.mrf.mxu0
        %v5537 = vadd.f32 %v5524, %v5536
        %v5538 = vpop.f32.mrf.mxu0
        %5539 = vdwg.mxu0
        %5540 = vmatpush.bf16.msra.mxu0 %v4374
        %5541 = vmatpush.bf16.msra.mxu0 %v4370
        %5542 = vmatpush.bf16.msra.mxu0 %v4366
        %5543 = vmatpush.bf16.msra.mxu0 %v4362
        %5544 = vmatpush.bf16.msra.mxu0 %v4358
        %5545 = vmatpush.bf16.msra.mxu0 %v4354
        %5546 = vmatpush.bf16.msra.mxu0 %v4350
        %5547 = vmatpush.bf16.msra.mxu0 %v4346
        %5548 = vmatmul.bf16.gmra.mxu0 %v1436
        %v5549 = vpop.f32.mrf.mxu0
        %v5550 = vadd.f32 %v5537, %v5549
        %v5551 = vpop.f32.mrf.mxu0
        %5552 = vdwg.mxu0
        %5553 = vmatpush.bf16.msra.mxu0 %v4406
        %5554 = vmatpush.bf16.msra.mxu0 %v4402
        %5555 = vmatpush.bf16.msra.mxu0 %v4398
        %5556 = vmatpush.bf16.msra.mxu0 %v4394
        %5557 = vmatpush.bf16.msra.mxu0 %v4390
        %5558 = vmatpush.bf16.msra.mxu0 %v4386
        %5559 = vmatpush.bf16.msra.mxu0 %v4382
        %5560 = vmatpush.bf16.msra.mxu0 %v4378
        %5561 = vmatmul.bf16.gmra.mxu0 %v1437
        %v5562 = vpop.f32.mrf.mxu0
        %v5563 = vadd.f32 %v5550, %v5562
        %v5564 = vpop.f32.mrf.mxu0
        %5565 = vdwg.mxu0
        %5566 = vmatpush.bf16.msra.mxu0 %v4438
        %5567 = vmatpush.bf16.msra.mxu0 %v4434
        %5568 = vmatpush.bf16.msra.mxu0 %v4430
        %5569 = vmatpush.bf16.msra.mxu0 %v4426
        %5570 = vmatpush.bf16.msra.mxu0 %v4422
        %5571 = vmatpush.bf16.msra.mxu0 %v4418
        %5572 = vmatpush.bf16.msra.mxu0 %v4414
        %5573 = vmatpush.bf16.msra.mxu0 %v4410
        %5574 = vmatmul.bf16.gmra.mxu0 %v1438
        %v5575 = vpop.f32.mrf.mxu0
        %v5576 = vadd.f32 %v5563, %v5575
        %v5577 = vpop.f32.mrf.mxu0
        %5578 = vdwg.mxu0
        %5579 = vmatpush.bf16.msra.mxu0 %v4470
        %5580 = vmatpush.bf16.msra.mxu0 %v4466
        %5581 = vmatpush.bf16.msra.mxu0 %v4462
        %5582 = vmatpush.bf16.msra.mxu0 %v4458
        %5583 = vmatpush.bf16.msra.mxu0 %v4454
        %5584 = vmatpush.bf16.msra.mxu0 %v4450
        %5585 = vmatpush.bf16.msra.mxu0 %v4446
        %5586 = vmatpush.bf16.msra.mxu0 %v4442
        %5587 = vmatmul.bf16.gmra.mxu0 %v1439
        %v5588 = vpop.f32.mrf.mxu0
        %v5589 = vadd.f32 %v5576, %v5588
        %v5590 = vpop.f32.mrf.mxu0
        %5591 = vdwg.mxu0
        %5592 = vmatpush.bf16.msra.mxu0 %v4502
        %5593 = vmatpush.bf16.msra.mxu0 %v4498
        %5594 = vmatpush.bf16.msra.mxu0 %v4494
        %5595 = vmatpush.bf16.msra.mxu0 %v4490
        %5596 = vmatpush.bf16.msra.mxu0 %v4486
        %5597 = vmatpush.bf16.msra.mxu0 %v4482
        %5598 = vmatpush.bf16.msra.mxu0 %v4478
        %5599 = vmatpush.bf16.msra.mxu0 %v4474
        %5600 = vmatmul.bf16.gmra.mxu0 %v1440
        %v5601 = vpop.f32.mrf.mxu0
        %v5602 = vadd.f32 %v5589, %v5601
        %v5603 = vpop.f32.mrf.mxu0
        %5604 = vdwg.mxu0
        %5605 = vmatpush.bf16.msra.mxu0 %v4534
        %5606 = vmatpush.bf16.msra.mxu0 %v4530
        %5607 = vmatpush.bf16.msra.mxu0 %v4526
        %5608 = vmatpush.bf16.msra.mxu0 %v4522
        %5609 = vmatpush.bf16.msra.mxu0 %v4518
        %5610 = vmatpush.bf16.msra.mxu0 %v4514
        %5611 = vmatpush.bf16.msra.mxu0 %v4510
        %5612 = vmatpush.bf16.msra.mxu0 %v4506
        %5613 = vmatmul.bf16.gmra.mxu0 %v1441
        %v5614 = vpop.f32.mrf.mxu0
        %v5615 = vadd.f32 %v5602, %v5614
        %v5616 = vpop.f32.mrf.mxu0
        %5617 = vdwg.mxu0
        %5618 = vmatpush.bf16.msra.mxu0 %v3799
        %5619 = vmatpush.bf16.msra.mxu0 %v3795
        %5620 = vmatpush.bf16.msra.mxu0 %v3791
        %5621 = vmatpush.bf16.msra.mxu0 %v3787
        %5622 = vmatpush.bf16.msra.mxu0 %v3783
        %5623 = vmatpush.bf16.msra.mxu0 %v3779
        %5624 = vmatpush.bf16.msra.mxu0 %v3775
        %5625 = vmatpush.bf16.msra.mxu0 %v3771
        %5626 = vmatmul.bf16.gmra.mxu0 %v1418
        %v5627 = vpop.f32.mrf.mxu0
        %v5628 = vadd.f32 0.0, %v5627
        %v5629 = vpop.f32.mrf.mxu0
        %5630 = vdwg.mxu0
        %5631 = vmatpush.bf16.msra.mxu0 %v3831
        %5632 = vmatpush.bf16.msra.mxu0 %v3827
        %5633 = vmatpush.bf16.msra.mxu0 %v3823
        %5634 = vmatpush.bf16.msra.mxu0 %v3819
        %5635 = vmatpush.bf16.msra.mxu0 %v3815
        %5636 = vmatpush.bf16.msra.mxu0 %v3811
        %5637 = vmatpush.bf16.msra.mxu0 %v3807
        %5638 = vmatpush.bf16.msra.mxu0 %v3803
        %5639 = vmatmul.bf16.gmra.mxu0 %v1419
        %v5640 = vpop.f32.mrf.mxu0
        %v5641 = vadd.f32 %v5628, %v5640
        %v5642 = vpop.f32.mrf.mxu0
        %5643 = vdwg.mxu0
        %5644 = vmatpush.bf16.msra.mxu0 %v3863
        %5645 = vmatpush.bf16.msra.mxu0 %v3859
        %5646 = vmatpush.bf16.msra.mxu0 %v3855
        %5647 = vmatpush.bf16.msra.mxu0 %v3851
        %5648 = vmatpush.bf16.msra.mxu0 %v3847
        %5649 = vmatpush.bf16.msra.mxu0 %v3843
        %5650 = vmatpush.bf16.msra.mxu0 %v3839
        %5651 = vmatpush.bf16.msra.mxu0 %v3835
        %5652 = vmatmul.bf16.gmra.mxu0 %v1420
        %v5653 = vpop.f32.mrf.mxu0
        %v5654 = vadd.f32 %v5641, %v5653
        %v5655 = vpop.f32.mrf.mxu0
        %5656 = vdwg.mxu0
        %5657 = vmatpush.bf16.msra.mxu0 %v3895
        %5658 = vmatpush.bf16.msra.mxu0 %v3891
        %5659 = vmatpush.bf16.msra.mxu0 %v3887
        %5660 = vmatpush.bf16.msra.mxu0 %v3883
        %5661 = vmatpush.bf16.msra.mxu0 %v3879
        %5662 = vmatpush.bf16.msra.mxu0 %v3875
        %5663 = vmatpush.bf16.msra.mxu0 %v3871
        %5664 = vmatpush.bf16.msra.mxu0 %v3867
        %5665 = vmatmul.bf16.gmra.mxu0 %v1421
        %v5666 = vpop.f32.mrf.mxu0
        %v5667 = vadd.f32 %v5654, %v5666
        %v5668 = vpop.f32.mrf.mxu0
        %5669 = vdwg.mxu0
        %5670 = vmatpush.bf16.msra.mxu0 %v3927
        %5671 = vmatpush.bf16.msra.mxu0 %v3923
        %5672 = vmatpush.bf16.msra.mxu0 %v3919
        %5673 = vmatpush.bf16.msra.mxu0 %v3915
        %5674 = vmatpush.bf16.msra.mxu0 %v3911
        %5675 = vmatpush.bf16.msra.mxu0 %v3907
        %5676 = vmatpush.bf16.msra.mxu0 %v3903
        %5677 = vmatpush.bf16.msra.mxu0 %v3899
        %5678 = vmatmul.bf16.gmra.mxu0 %v1422
        %v5679 = vpop.f32.mrf.mxu0
        %v5680 = vadd.f32 %v5667, %v5679
        %v5681 = vpop.f32.mrf.mxu0
        %5682 = vdwg.mxu0
        %5683 = vmatpush.bf16.msra.mxu0 %v3959
        %5684 = vmatpush.bf16.msra.mxu0 %v3955
        %5685 = vmatpush.bf16.msra.mxu0 %v3951
        %5686 = vmatpush.bf16.msra.mxu0 %v3947
        %5687 = vmatpush.bf16.msra.mxu0 %v3943
        %5688 = vmatpush.bf16.msra.mxu0 %v3939
        %5689 = vmatpush.bf16.msra.mxu0 %v3935
        %5690 = vmatpush.bf16.msra.mxu0 %v3931
        %5691 = vmatmul.bf16.gmra.mxu0 %v1423
        %v5692 = vpop.f32.mrf.mxu0
        %v5693 = vadd.f32 %v5680, %v5692
        %v5694 = vpop.f32.mrf.mxu0
        %5695 = vdwg.mxu0
        %5696 = vmatpush.bf16.msra.mxu0 %v3991
        %5697 = vmatpush.bf16.msra.mxu0 %v3987
        %5698 = vmatpush.bf16.msra.mxu0 %v3983
        %5699 = vmatpush.bf16.msra.mxu0 %v3979
        %5700 = vmatpush.bf16.msra.mxu0 %v3975
        %5701 = vmatpush.bf16.msra.mxu0 %v3971
        %5702 = vmatpush.bf16.msra.mxu0 %v3967
        %5703 = vmatpush.bf16.msra.mxu0 %v3963
        %5704 = vmatmul.bf16.gmra.mxu0 %v1424
        %v5705 = vpop.f32.mrf.mxu0
        %v5706 = vadd.f32 %v5693, %v5705
        %v5707 = vpop.f32.mrf.mxu0
        %5708 = vdwg.mxu0
        %5709 = vmatpush.bf16.msra.mxu0 %v4023
        %5710 = vmatpush.bf16.msra.mxu0 %v4019
        %5711 = vmatpush.bf16.msra.mxu0 %v4015
        %5712 = vmatpush.bf16.msra.mxu0 %v4011
        %5713 = vmatpush.bf16.msra.mxu0 %v4007
        %5714 = vmatpush.bf16.msra.mxu0 %v4003
        %5715 = vmatpush.bf16.msra.mxu0 %v3999
        %5716 = vmatpush.bf16.msra.mxu0 %v3995
        %5717 = vmatmul.bf16.gmra.mxu0 %v1425
        %v5718 = vpop.f32.mrf.mxu0
        %v5719 = vadd.f32 %v5706, %v5718
        %v5720 = vpop.f32.mrf.mxu0
        %5721 = vdwg.mxu0
        %5722 = vmatpush.bf16.msra.mxu0 %v4055
        %5723 = vmatpush.bf16.msra.mxu0 %v4051
        %5724 = vmatpush.bf16.msra.mxu0 %v4047
        %5725 = vmatpush.bf16.msra.mxu0 %v4043
        %5726 = vmatpush.bf16.msra.mxu0 %v4039
        %5727 = vmatpush.bf16.msra.mxu0 %v4035
        %5728 = vmatpush.bf16.msra.mxu0 %v4031
        %5729 = vmatpush.bf16.msra.mxu0 %v4027
        %5730 = vmatmul.bf16.gmra.mxu0 %v1426
        %v5731 = vpop.f32.mrf.mxu0
        %v5732 = vadd.f32 %v5719, %v5731
        %v5733 = vpop.f32.mrf.mxu0
        %5734 = vdwg.mxu0
        %5735 = vmatpush.bf16.msra.mxu0 %v4087
        %5736 = vmatpush.bf16.msra.mxu0 %v4083
        %5737 = vmatpush.bf16.msra.mxu0 %v4079
        %5738 = vmatpush.bf16.msra.mxu0 %v4075
        %5739 = vmatpush.bf16.msra.mxu0 %v4071
        %5740 = vmatpush.bf16.msra.mxu0 %v4067
        %5741 = vmatpush.bf16.msra.mxu0 %v4063
        %5742 = vmatpush.bf16.msra.mxu0 %v4059
        %5743 = vmatmul.bf16.gmra.mxu0 %v1427
        %v5744 = vpop.f32.mrf.mxu0
        %v5745 = vadd.f32 %v5732, %v5744
        %v5746 = vpop.f32.mrf.mxu0
        %5747 = vdwg.mxu0
        %5748 = vmatpush.bf16.msra.mxu0 %v4119
        %5749 = vmatpush.bf16.msra.mxu0 %v4115
        %5750 = vmatpush.bf16.msra.mxu0 %v4111
        %5751 = vmatpush.bf16.msra.mxu0 %v4107
        %5752 = vmatpush.bf16.msra.mxu0 %v4103
        %5753 = vmatpush.bf16.msra.mxu0 %v4099
        %5754 = vmatpush.bf16.msra.mxu0 %v4095
        %5755 = vmatpush.bf16.msra.mxu0 %v4091
        %5756 = vmatmul.bf16.gmra.mxu0 %v1428
        %v5757 = vpop.f32.mrf.mxu0
        %v5758 = vadd.f32 %v5745, %v5757
        %v5759 = vpop.f32.mrf.mxu0
        %5760 = vdwg.mxu0
        %5761 = vmatpush.bf16.msra.mxu0 %v4151
        %5762 = vmatpush.bf16.msra.mxu0 %v4147
        %5763 = vmatpush.bf16.msra.mxu0 %v4143
        %5764 = vmatpush.bf16.msra.mxu0 %v4139
        %5765 = vmatpush.bf16.msra.mxu0 %v4135
        %5766 = vmatpush.bf16.msra.mxu0 %v4131
        %5767 = vmatpush.bf16.msra.mxu0 %v4127
        %5768 = vmatpush.bf16.msra.mxu0 %v4123
        %5769 = vmatmul.bf16.gmra.mxu0 %v1429
        %v5770 = vpop.f32.mrf.mxu0
        %v5771 = vadd.f32 %v5758, %v5770
        %v5772 = vpop.f32.mrf.mxu0
        %5773 = vdwg.mxu0
        %5774 = vmatpush.bf16.msra.mxu0 %v4183
        %5775 = vmatpush.bf16.msra.mxu0 %v4179
        %5776 = vmatpush.bf16.msra.mxu0 %v4175
        %5777 = vmatpush.bf16.msra.mxu0 %v4171
        %5778 = vmatpush.bf16.msra.mxu0 %v4167
        %5779 = vmatpush.bf16.msra.mxu0 %v4163
        %5780 = vmatpush.bf16.msra.mxu0 %v4159
        %5781 = vmatpush.bf16.msra.mxu0 %v4155
        %5782 = vmatmul.bf16.gmra.mxu0 %v1430
        %v5783 = vpop.f32.mrf.mxu0
        %v5784 = vadd.f32 %v5771, %v5783
        %v5785 = vpop.f32.mrf.mxu0
        %5786 = vdwg.mxu0
        %5787 = vmatpush.bf16.msra.mxu0 %v4215
        %5788 = vmatpush.bf16.msra.mxu0 %v4211
        %5789 = vmatpush.bf16.msra.mxu0 %v4207
        %5790 = vmatpush.bf16.msra.mxu0 %v4203
        %5791 = vmatpush.bf16.msra.mxu0 %v4199
        %5792 = vmatpush.bf16.msra.mxu0 %v4195
        %5793 = vmatpush.bf16.msra.mxu0 %v4191
        %5794 = vmatpush.bf16.msra.mxu0 %v4187
        %5795 = vmatmul.bf16.gmra.mxu0 %v1431
        %v5796 = vpop.f32.mrf.mxu0
        %v5797 = vadd.f32 %v5784, %v5796
        %v5798 = vpop.f32.mrf.mxu0
        %5799 = vdwg.mxu0
        %5800 = vmatpush.bf16.msra.mxu0 %v4247
        %5801 = vmatpush.bf16.msra.mxu0 %v4243
        %5802 = vmatpush.bf16.msra.mxu0 %v4239
        %5803 = vmatpush.bf16.msra.mxu0 %v4235
        %5804 = vmatpush.bf16.msra.mxu0 %v4231
        %5805 = vmatpush.bf16.msra.mxu0 %v4227
        %5806 = vmatpush.bf16.msra.mxu0 %v4223
        %5807 = vmatpush.bf16.msra.mxu0 %v4219
        %5808 = vmatmul.bf16.gmra.mxu0 %v1432
        %v5809 = vpop.f32.mrf.mxu0
        %v5810 = vadd.f32 %v5797, %v5809
        %v5811 = vpop.f32.mrf.mxu0
        %5812 = vdwg.mxu0
        %5813 = vmatpush.bf16.msra.mxu0 %v4279
        %5814 = vmatpush.bf16.msra.mxu0 %v4275
        %5815 = vmatpush.bf16.msra.mxu0 %v4271
        %5816 = vmatpush.bf16.msra.mxu0 %v4267
        %5817 = vmatpush.bf16.msra.mxu0 %v4263
        %5818 = vmatpush.bf16.msra.mxu0 %v4259
        %5819 = vmatpush.bf16.msra.mxu0 %v4255
        %5820 = vmatpush.bf16.msra.mxu0 %v4251
        %5821 = vmatmul.bf16.gmra.mxu0 %v1433
        %v5822 = vpop.f32.mrf.mxu0
        %v5823 = vadd.f32 %v5810, %v5822
        %v5824 = vpop.f32.mrf.mxu0
        %5825 = vdwg.mxu0
        %5826 = vmatpush.bf16.msra.mxu0 %v4311
        %5827 = vmatpush.bf16.msra.mxu0 %v4307
        %5828 = vmatpush.bf16.msra.mxu0 %v4303
        %5829 = vmatpush.bf16.msra.mxu0 %v4299
        %5830 = vmatpush.bf16.msra.mxu0 %v4295
        %5831 = vmatpush.bf16.msra.mxu0 %v4291
        %5832 = vmatpush.bf16.msra.mxu0 %v4287
        %5833 = vmatpush.bf16.msra.mxu0 %v4283
        %5834 = vmatmul.bf16.gmra.mxu0 %v1434
        %v5835 = vpop.f32.mrf.mxu0
        %v5836 = vadd.f32 %v5823, %v5835
        %v5837 = vpop.f32.mrf.mxu0
        %5838 = vdwg.mxu0
        %5839 = vmatpush.bf16.msra.mxu0 %v4343
        %5840 = vmatpush.bf16.msra.mxu0 %v4339
        %5841 = vmatpush.bf16.msra.mxu0 %v4335
        %5842 = vmatpush.bf16.msra.mxu0 %v4331
        %5843 = vmatpush.bf16.msra.mxu0 %v4327
        %5844 = vmatpush.bf16.msra.mxu0 %v4323
        %5845 = vmatpush.bf16.msra.mxu0 %v4319
        %5846 = vmatpush.bf16.msra.mxu0 %v4315
        %5847 = vmatmul.bf16.gmra.mxu0 %v1435
        %v5848 = vpop.f32.mrf.mxu0
        %v5849 = vadd.f32 %v5836, %v5848
        %v5850 = vpop.f32.mrf.mxu0
        %5851 = vdwg.mxu0
        %5852 = vmatpush.bf16.msra.mxu0 %v4375
        %5853 = vmatpush.bf16.msra.mxu0 %v4371
        %5854 = vmatpush.bf16.msra.mxu0 %v4367
        %5855 = vmatpush.bf16.msra.mxu0 %v4363
        %5856 = vmatpush.bf16.msra.mxu0 %v4359
        %5857 = vmatpush.bf16.msra.mxu0 %v4355
        %5858 = vmatpush.bf16.msra.mxu0 %v4351
        %5859 = vmatpush.bf16.msra.mxu0 %v4347
        %5860 = vmatmul.bf16.gmra.mxu0 %v1436
        %v5861 = vpop.f32.mrf.mxu0
        %v5862 = vadd.f32 %v5849, %v5861
        %v5863 = vpop.f32.mrf.mxu0
        %5864 = vdwg.mxu0
        %5865 = vmatpush.bf16.msra.mxu0 %v4407
        %5866 = vmatpush.bf16.msra.mxu0 %v4403
        %5867 = vmatpush.bf16.msra.mxu0 %v4399
        %5868 = vmatpush.bf16.msra.mxu0 %v4395
        %5869 = vmatpush.bf16.msra.mxu0 %v4391
        %5870 = vmatpush.bf16.msra.mxu0 %v4387
        %5871 = vmatpush.bf16.msra.mxu0 %v4383
        %5872 = vmatpush.bf16.msra.mxu0 %v4379
        %5873 = vmatmul.bf16.gmra.mxu0 %v1437
        %v5874 = vpop.f32.mrf.mxu0
        %v5875 = vadd.f32 %v5862, %v5874
        %v5876 = vpop.f32.mrf.mxu0
        %5877 = vdwg.mxu0
        %5878 = vmatpush.bf16.msra.mxu0 %v4439
        %5879 = vmatpush.bf16.msra.mxu0 %v4435
        %5880 = vmatpush.bf16.msra.mxu0 %v4431
        %5881 = vmatpush.bf16.msra.mxu0 %v4427
        %5882 = vmatpush.bf16.msra.mxu0 %v4423
        %5883 = vmatpush.bf16.msra.mxu0 %v4419
        %5884 = vmatpush.bf16.msra.mxu0 %v4415
        %5885 = vmatpush.bf16.msra.mxu0 %v4411
        %5886 = vmatmul.bf16.gmra.mxu0 %v1438
        %v5887 = vpop.f32.mrf.mxu0
        %v5888 = vadd.f32 %v5875, %v5887
        %v5889 = vpop.f32.mrf.mxu0
        %5890 = vdwg.mxu0
        %5891 = vmatpush.bf16.msra.mxu0 %v4471
        %5892 = vmatpush.bf16.msra.mxu0 %v4467
        %5893 = vmatpush.bf16.msra.mxu0 %v4463
        %5894 = vmatpush.bf16.msra.mxu0 %v4459
        %5895 = vmatpush.bf16.msra.mxu0 %v4455
        %5896 = vmatpush.bf16.msra.mxu0 %v4451
        %5897 = vmatpush.bf16.msra.mxu0 %v4447
        %5898 = vmatpush.bf16.msra.mxu0 %v4443
        %5899 = vmatmul.bf16.gmra.mxu0 %v1439
        %v5900 = vpop.f32.mrf.mxu0
        %v5901 = vadd.f32 %v5888, %v5900
        %v5902 = vpop.f32.mrf.mxu0
        %5903 = vdwg.mxu0
        %5904 = vmatpush.bf16.msra.mxu0 %v4503
        %5905 = vmatpush.bf16.msra.mxu0 %v4499
        %5906 = vmatpush.bf16.msra.mxu0 %v4495
        %5907 = vmatpush.bf16.msra.mxu0 %v4491
        %5908 = vmatpush.bf16.msra.mxu0 %v4487
        %5909 = vmatpush.bf16.msra.mxu0 %v4483
        %5910 = vmatpush.bf16.msra.mxu0 %v4479
        %5911 = vmatpush.bf16.msra.mxu0 %v4475
        %5912 = vmatmul.bf16.gmra.mxu0 %v1440
        %v5913 = vpop.f32.mrf.mxu0
        %v5914 = vadd.f32 %v5901, %v5913
        %v5915 = vpop.f32.mrf.mxu0
        %5916 = vdwg.mxu0
        %5917 = vmatpush.bf16.msra.mxu0 %v4535
        %5918 = vmatpush.bf16.msra.mxu0 %v4531
        %5919 = vmatpush.bf16.msra.mxu0 %v4527
        %5920 = vmatpush.bf16.msra.mxu0 %v4523
        %5921 = vmatpush.bf16.msra.mxu0 %v4519
        %5922 = vmatpush.bf16.msra.mxu0 %v4515
        %5923 = vmatpush.bf16.msra.mxu0 %v4511
        %5924 = vmatpush.bf16.msra.mxu0 %v4507
        %5925 = vmatmul.bf16.gmra.mxu0 %v1441
        %v5926 = vpop.f32.mrf.mxu0
        %v5927 = vadd.f32 %v5914, %v5926
        %v5928 = vpop.f32.mrf.mxu0
        %5929 = vdwg.mxu0
        %5930 = vmatpush.bf16.msra.mxu0 %v3800
        %5931 = vmatpush.bf16.msra.mxu0 %v3796
        %5932 = vmatpush.bf16.msra.mxu0 %v3792
        %5933 = vmatpush.bf16.msra.mxu0 %v3788
        %5934 = vmatpush.bf16.msra.mxu0 %v3784
        %5935 = vmatpush.bf16.msra.mxu0 %v3780
        %5936 = vmatpush.bf16.msra.mxu0 %v3776
        %5937 = vmatpush.bf16.msra.mxu0 %v3772
        %5938 = vmatmul.bf16.gmra.mxu0 %v1418
        %v5939 = vpop.f32.mrf.mxu0
        %v5940 = vadd.f32 0.0, %v5939
        %v5941 = vpop.f32.mrf.mxu0
        %5942 = vdwg.mxu0
        %5943 = vmatpush.bf16.msra.mxu0 %v3832
        %5944 = vmatpush.bf16.msra.mxu0 %v3828
        %5945 = vmatpush.bf16.msra.mxu0 %v3824
        %5946 = vmatpush.bf16.msra.mxu0 %v3820
        %5947 = vmatpush.bf16.msra.mxu0 %v3816
        %5948 = vmatpush.bf16.msra.mxu0 %v3812
        %5949 = vmatpush.bf16.msra.mxu0 %v3808
        %5950 = vmatpush.bf16.msra.mxu0 %v3804
        %5951 = vmatmul.bf16.gmra.mxu0 %v1419
        %v5952 = vpop.f32.mrf.mxu0
        %v5953 = vadd.f32 %v5940, %v5952
        %v5954 = vpop.f32.mrf.mxu0
        %5955 = vdwg.mxu0
        %5956 = vmatpush.bf16.msra.mxu0 %v3864
        %5957 = vmatpush.bf16.msra.mxu0 %v3860
        %5958 = vmatpush.bf16.msra.mxu0 %v3856
        %5959 = vmatpush.bf16.msra.mxu0 %v3852
        %5960 = vmatpush.bf16.msra.mxu0 %v3848
        %5961 = vmatpush.bf16.msra.mxu0 %v3844
        %5962 = vmatpush.bf16.msra.mxu0 %v3840
        %5963 = vmatpush.bf16.msra.mxu0 %v3836
        %5964 = vmatmul.bf16.gmra.mxu0 %v1420
        %v5965 = vpop.f32.mrf.mxu0
        %v5966 = vadd.f32 %v5953, %v5965
        %v5967 = vpop.f32.mrf.mxu0
        %5968 = vdwg.mxu0
        %5969 = vmatpush.bf16.msra.mxu0 %v3896
        %5970 = vmatpush.bf16.msra.mxu0 %v3892
        %5971 = vmatpush.bf16.msra.mxu0 %v3888
        %5972 = vmatpush.bf16.msra.mxu0 %v3884
        %5973 = vmatpush.bf16.msra.mxu0 %v3880
        %5974 = vmatpush.bf16.msra.mxu0 %v3876
        %5975 = vmatpush.bf16.msra.mxu0 %v3872
        %5976 = vmatpush.bf16.msra.mxu0 %v3868
        %5977 = vmatmul.bf16.gmra.mxu0 %v1421
        %v5978 = vpop.f32.mrf.mxu0
        %v5979 = vadd.f32 %v5966, %v5978
        %v5980 = vpop.f32.mrf.mxu0
        %5981 = vdwg.mxu0
        %5982 = vmatpush.bf16.msra.mxu0 %v3928
        %5983 = vmatpush.bf16.msra.mxu0 %v3924
        %5984 = vmatpush.bf16.msra.mxu0 %v3920
        %5985 = vmatpush.bf16.msra.mxu0 %v3916
        %5986 = vmatpush.bf16.msra.mxu0 %v3912
        %5987 = vmatpush.bf16.msra.mxu0 %v3908
        %5988 = vmatpush.bf16.msra.mxu0 %v3904
        %5989 = vmatpush.bf16.msra.mxu0 %v3900
        %5990 = vmatmul.bf16.gmra.mxu0 %v1422
        %v5991 = vpop.f32.mrf.mxu0
        %v5992 = vadd.f32 %v5979, %v5991
        %v5993 = vpop.f32.mrf.mxu0
        %5994 = vdwg.mxu0
        %5995 = vmatpush.bf16.msra.mxu0 %v3960
        %5996 = vmatpush.bf16.msra.mxu0 %v3956
        %5997 = vmatpush.bf16.msra.mxu0 %v3952
        %5998 = vmatpush.bf16.msra.mxu0 %v3948
        %5999 = vmatpush.bf16.msra.mxu0 %v3944
        %6000 = vmatpush.bf16.msra.mxu0 %v3940
        %6001 = vmatpush.bf16.msra.mxu0 %v3936
        %6002 = vmatpush.bf16.msra.mxu0 %v3932
        %6003 = vmatmul.bf16.gmra.mxu0 %v1423
        %v6004 = vpop.f32.mrf.mxu0
        %v6005 = vadd.f32 %v5992, %v6004
        %v6006 = vpop.f32.mrf.mxu0
        %6007 = vdwg.mxu0
        %6008 = vmatpush.bf16.msra.mxu0 %v3992
        %6009 = vmatpush.bf16.msra.mxu0 %v3988
        %6010 = vmatpush.bf16.msra.mxu0 %v3984
        %6011 = vmatpush.bf16.msra.mxu0 %v3980
        %6012 = vmatpush.bf16.msra.mxu0 %v3976
        %6013 = vmatpush.bf16.msra.mxu0 %v3972
        %6014 = vmatpush.bf16.msra.mxu0 %v3968
        %6015 = vmatpush.bf16.msra.mxu0 %v3964
        %6016 = vmatmul.bf16.gmra.mxu0 %v1424
        %v6017 = vpop.f32.mrf.mxu0
        %v6018 = vadd.f32 %v6005, %v6017
        %v6019 = vpop.f32.mrf.mxu0
        %6020 = vdwg.mxu0
        %6021 = vmatpush.bf16.msra.mxu0 %v4024
        %6022 = vmatpush.bf16.msra.mxu0 %v4020
        %6023 = vmatpush.bf16.msra.mxu0 %v4016
        %6024 = vmatpush.bf16.msra.mxu0 %v4012
        %6025 = vmatpush.bf16.msra.mxu0 %v4008
        %6026 = vmatpush.bf16.msra.mxu0 %v4004
        %6027 = vmatpush.bf16.msra.mxu0 %v4000
        %6028 = vmatpush.bf16.msra.mxu0 %v3996
        %6029 = vmatmul.bf16.gmra.mxu0 %v1425
        %v6030 = vpop.f32.mrf.mxu0
        %v6031 = vadd.f32 %v6018, %v6030
        %v6032 = vpop.f32.mrf.mxu0
        %6033 = vdwg.mxu0
        %6034 = vmatpush.bf16.msra.mxu0 %v4056
        %6035 = vmatpush.bf16.msra.mxu0 %v4052
        %6036 = vmatpush.bf16.msra.mxu0 %v4048
        %6037 = vmatpush.bf16.msra.mxu0 %v4044
        %6038 = vmatpush.bf16.msra.mxu0 %v4040
        %6039 = vmatpush.bf16.msra.mxu0 %v4036
        %6040 = vmatpush.bf16.msra.mxu0 %v4032
        %6041 = vmatpush.bf16.msra.mxu0 %v4028
        %6042 = vmatmul.bf16.gmra.mxu0 %v1426
        %v6043 = vpop.f32.mrf.mxu0
        %v6044 = vadd.f32 %v6031, %v6043
        %v6045 = vpop.f32.mrf.mxu0
        %6046 = vdwg.mxu0
        %6047 = vmatpush.bf16.msra.mxu0 %v4088
        %6048 = vmatpush.bf16.msra.mxu0 %v4084
        %6049 = vmatpush.bf16.msra.mxu0 %v4080
        %6050 = vmatpush.bf16.msra.mxu0 %v4076
        %6051 = vmatpush.bf16.msra.mxu0 %v4072
        %6052 = vmatpush.bf16.msra.mxu0 %v4068
        %6053 = vmatpush.bf16.msra.mxu0 %v4064
        %6054 = vmatpush.bf16.msra.mxu0 %v4060
        %6055 = vmatmul.bf16.gmra.mxu0 %v1427
        %v6056 = vpop.f32.mrf.mxu0
        %v6057 = vadd.f32 %v6044, %v6056
        %v6058 = vpop.f32.mrf.mxu0
        %6059 = vdwg.mxu0
        %6060 = vmatpush.bf16.msra.mxu0 %v4120
        %6061 = vmatpush.bf16.msra.mxu0 %v4116
        %6062 = vmatpush.bf16.msra.mxu0 %v4112
        %6063 = vmatpush.bf16.msra.mxu0 %v4108
        %6064 = vmatpush.bf16.msra.mxu0 %v4104
        %6065 = vmatpush.bf16.msra.mxu0 %v4100
        %6066 = vmatpush.bf16.msra.mxu0 %v4096
        %6067 = vmatpush.bf16.msra.mxu0 %v4092
        %6068 = vmatmul.bf16.gmra.mxu0 %v1428
        %v6069 = vpop.f32.mrf.mxu0
        %v6070 = vadd.f32 %v6057, %v6069
        %v6071 = vpop.f32.mrf.mxu0
        %6072 = vdwg.mxu0
        %6073 = vmatpush.bf16.msra.mxu0 %v4152
        %6074 = vmatpush.bf16.msra.mxu0 %v4148
        %6075 = vmatpush.bf16.msra.mxu0 %v4144
        %6076 = vmatpush.bf16.msra.mxu0 %v4140
        %6077 = vmatpush.bf16.msra.mxu0 %v4136
        %6078 = vmatpush.bf16.msra.mxu0 %v4132
        %6079 = vmatpush.bf16.msra.mxu0 %v4128
        %6080 = vmatpush.bf16.msra.mxu0 %v4124
        %6081 = vmatmul.bf16.gmra.mxu0 %v1429
        %v6082 = vpop.f32.mrf.mxu0
        %v6083 = vadd.f32 %v6070, %v6082
        %v6084 = vpop.f32.mrf.mxu0
        %6085 = vdwg.mxu0
        %6086 = vmatpush.bf16.msra.mxu0 %v4184
        %6087 = vmatpush.bf16.msra.mxu0 %v4180
        %6088 = vmatpush.bf16.msra.mxu0 %v4176
        %6089 = vmatpush.bf16.msra.mxu0 %v4172
        %6090 = vmatpush.bf16.msra.mxu0 %v4168
        %6091 = vmatpush.bf16.msra.mxu0 %v4164
        %6092 = vmatpush.bf16.msra.mxu0 %v4160
        %6093 = vmatpush.bf16.msra.mxu0 %v4156
        %6094 = vmatmul.bf16.gmra.mxu0 %v1430
        %v6095 = vpop.f32.mrf.mxu0
        %v6096 = vadd.f32 %v6083, %v6095
        %v6097 = vpop.f32.mrf.mxu0
        %6098 = vdwg.mxu0
        %6099 = vmatpush.bf16.msra.mxu0 %v4216
        %6100 = vmatpush.bf16.msra.mxu0 %v4212
        %6101 = vmatpush.bf16.msra.mxu0 %v4208
        %6102 = vmatpush.bf16.msra.mxu0 %v4204
        %6103 = vmatpush.bf16.msra.mxu0 %v4200
        %6104 = vmatpush.bf16.msra.mxu0 %v4196
        %6105 = vmatpush.bf16.msra.mxu0 %v4192
        %6106 = vmatpush.bf16.msra.mxu0 %v4188
        %6107 = vmatmul.bf16.gmra.mxu0 %v1431
        %v6108 = vpop.f32.mrf.mxu0
        %v6109 = vadd.f32 %v6096, %v6108
        %v6110 = vpop.f32.mrf.mxu0
        %6111 = vdwg.mxu0
        %6112 = vmatpush.bf16.msra.mxu0 %v4248
        %6113 = vmatpush.bf16.msra.mxu0 %v4244
        %6114 = vmatpush.bf16.msra.mxu0 %v4240
        %6115 = vmatpush.bf16.msra.mxu0 %v4236
        %6116 = vmatpush.bf16.msra.mxu0 %v4232
        %6117 = vmatpush.bf16.msra.mxu0 %v4228
        %6118 = vmatpush.bf16.msra.mxu0 %v4224
        %6119 = vmatpush.bf16.msra.mxu0 %v4220
        %6120 = vmatmul.bf16.gmra.mxu0 %v1432
        %v6121 = vpop.f32.mrf.mxu0
        %v6122 = vadd.f32 %v6109, %v6121
        %v6123 = vpop.f32.mrf.mxu0
        %6124 = vdwg.mxu0
        %6125 = vmatpush.bf16.msra.mxu0 %v4280
        %6126 = vmatpush.bf16.msra.mxu0 %v4276
        %6127 = vmatpush.bf16.msra.mxu0 %v4272
        %6128 = vmatpush.bf16.msra.mxu0 %v4268
        %6129 = vmatpush.bf16.msra.mxu0 %v4264
        %6130 = vmatpush.bf16.msra.mxu0 %v4260
        %6131 = vmatpush.bf16.msra.mxu0 %v4256
        %6132 = vmatpush.bf16.msra.mxu0 %v4252
        %6133 = vmatmul.bf16.gmra.mxu0 %v1433
        %v6134 = vpop.f32.mrf.mxu0
        %v6135 = vadd.f32 %v6122, %v6134
        %v6136 = vpop.f32.mrf.mxu0
        %6137 = vdwg.mxu0
        %6138 = vmatpush.bf16.msra.mxu0 %v4312
        %6139 = vmatpush.bf16.msra.mxu0 %v4308
        %6140 = vmatpush.bf16.msra.mxu0 %v4304
        %6141 = vmatpush.bf16.msra.mxu0 %v4300
        %6142 = vmatpush.bf16.msra.mxu0 %v4296
        %6143 = vmatpush.bf16.msra.mxu0 %v4292
        %6144 = vmatpush.bf16.msra.mxu0 %v4288
        %6145 = vmatpush.bf16.msra.mxu0 %v4284
        %6146 = vmatmul.bf16.gmra.mxu0 %v1434
        %v6147 = vpop.f32.mrf.mxu0
        %v6148 = vadd.f32 %v6135, %v6147
        %v6149 = vpop.f32.mrf.mxu0
        %6150 = vdwg.mxu0
        %6151 = vmatpush.bf16.msra.mxu0 %v4344
        %6152 = vmatpush.bf16.msra.mxu0 %v4340
        %6153 = vmatpush.bf16.msra.mxu0 %v4336
        %6154 = vmatpush.bf16.msra.mxu0 %v4332
        %6155 = vmatpush.bf16.msra.mxu0 %v4328
        %6156 = vmatpush.bf16.msra.mxu0 %v4324
        %6157 = vmatpush.bf16.msra.mxu0 %v4320
        %6158 = vmatpush.bf16.msra.mxu0 %v4316
        %6159 = vmatmul.bf16.gmra.mxu0 %v1435
        %v6160 = vpop.f32.mrf.mxu0
        %v6161 = vadd.f32 %v6148, %v6160
        %v6162 = vpop.f32.mrf.mxu0
        %6163 = vdwg.mxu0
        %6164 = vmatpush.bf16.msra.mxu0 %v4376
        %6165 = vmatpush.bf16.msra.mxu0 %v4372
        %6166 = vmatpush.bf16.msra.mxu0 %v4368
        %6167 = vmatpush.bf16.msra.mxu0 %v4364
        %6168 = vmatpush.bf16.msra.mxu0 %v4360
        %6169 = vmatpush.bf16.msra.mxu0 %v4356
        %6170 = vmatpush.bf16.msra.mxu0 %v4352
        %6171 = vmatpush.bf16.msra.mxu0 %v4348
        %6172 = vmatmul.bf16.gmra.mxu0 %v1436
        %v6173 = vpop.f32.mrf.mxu0
        %v6174 = vadd.f32 %v6161, %v6173
        %v6175 = vpop.f32.mrf.mxu0
        %6176 = vdwg.mxu0
        %6177 = vmatpush.bf16.msra.mxu0 %v4408
        %6178 = vmatpush.bf16.msra.mxu0 %v4404
        %6179 = vmatpush.bf16.msra.mxu0 %v4400
        %6180 = vmatpush.bf16.msra.mxu0 %v4396
        %6181 = vmatpush.bf16.msra.mxu0 %v4392
        %6182 = vmatpush.bf16.msra.mxu0 %v4388
        %6183 = vmatpush.bf16.msra.mxu0 %v4384
        %6184 = vmatpush.bf16.msra.mxu0 %v4380
        %6185 = vmatmul.bf16.gmra.mxu0 %v1437
        %v6186 = vpop.f32.mrf.mxu0
        %v6187 = vadd.f32 %v6174, %v6186
        %v6188 = vpop.f32.mrf.mxu0
        %6189 = vdwg.mxu0
        %6190 = vmatpush.bf16.msra.mxu0 %v4440
        %6191 = vmatpush.bf16.msra.mxu0 %v4436
        %6192 = vmatpush.bf16.msra.mxu0 %v4432
        %6193 = vmatpush.bf16.msra.mxu0 %v4428
        %6194 = vmatpush.bf16.msra.mxu0 %v4424
        %6195 = vmatpush.bf16.msra.mxu0 %v4420
        %6196 = vmatpush.bf16.msra.mxu0 %v4416
        %6197 = vmatpush.bf16.msra.mxu0 %v4412
        %6198 = vmatmul.bf16.gmra.mxu0 %v1438
        %v6199 = vpop.f32.mrf.mxu0
        %v6200 = vadd.f32 %v6187, %v6199
        %v6201 = vpop.f32.mrf.mxu0
        %6202 = vdwg.mxu0
        %6203 = vmatpush.bf16.msra.mxu0 %v4472
        %6204 = vmatpush.bf16.msra.mxu0 %v4468
        %6205 = vmatpush.bf16.msra.mxu0 %v4464
        %6206 = vmatpush.bf16.msra.mxu0 %v4460
        %6207 = vmatpush.bf16.msra.mxu0 %v4456
        %6208 = vmatpush.bf16.msra.mxu0 %v4452
        %6209 = vmatpush.bf16.msra.mxu0 %v4448
        %6210 = vmatpush.bf16.msra.mxu0 %v4444
        %6211 = vmatmul.bf16.gmra.mxu0 %v1439
        %v6212 = vpop.f32.mrf.mxu0
        %v6213 = vadd.f32 %v6200, %v6212
        %v6214 = vpop.f32.mrf.mxu0
        %6215 = vdwg.mxu0
        %6216 = vmatpush.bf16.msra.mxu0 %v4504
        %6217 = vmatpush.bf16.msra.mxu0 %v4500
        %6218 = vmatpush.bf16.msra.mxu0 %v4496
        %6219 = vmatpush.bf16.msra.mxu0 %v4492
        %6220 = vmatpush.bf16.msra.mxu0 %v4488
        %6221 = vmatpush.bf16.msra.mxu0 %v4484
        %6222 = vmatpush.bf16.msra.mxu0 %v4480
        %6223 = vmatpush.bf16.msra.mxu0 %v4476
        %6224 = vmatmul.bf16.gmra.mxu0 %v1440
        %v6225 = vpop.f32.mrf.mxu0
        %v6226 = vadd.f32 %v6213, %v6225
        %v6227 = vpop.f32.mrf.mxu0
        %6228 = vdwg.mxu0
        %6229 = vmatpush.bf16.msra.mxu0 %v4536
        %6230 = vmatpush.bf16.msra.mxu0 %v4532
        %6231 = vmatpush.bf16.msra.mxu0 %v4528
        %6232 = vmatpush.bf16.msra.mxu0 %v4524
        %6233 = vmatpush.bf16.msra.mxu0 %v4520
        %6234 = vmatpush.bf16.msra.mxu0 %v4516
        %6235 = vmatpush.bf16.msra.mxu0 %v4512
        %6236 = vmatpush.bf16.msra.mxu0 %v4508
        %6237 = vmatmul.bf16.gmra.mxu0 %v1441
        %v6238 = vpop.f32.mrf.mxu0
        %v6239 = vadd.f32 %v6226, %v6238
        %v6240 = vpop.f32.mrf.mxu0
        %6241 = vdwg.mxu0
        %6242 = vmatpush.bf16.msra.mxu0 %v3801
        %6243 = vmatpush.bf16.msra.mxu0 %v3797
        %6244 = vmatpush.bf16.msra.mxu0 %v3793
        %6245 = vmatpush.bf16.msra.mxu0 %v3789
        %6246 = vmatpush.bf16.msra.mxu0 %v3785
        %6247 = vmatpush.bf16.msra.mxu0 %v3781
        %6248 = vmatpush.bf16.msra.mxu0 %v3777
        %6249 = vmatpush.bf16.msra.mxu0 %v3773
        %6250 = vmatmul.bf16.gmra.mxu0 %v1418
        %v6251 = vpop.f32.mrf.mxu0
        %v6252 = vadd.f32 0.0, %v6251
        %v6253 = vpop.f32.mrf.mxu0
        %6254 = vdwg.mxu0
        %6255 = vmatpush.bf16.msra.mxu0 %v3833
        %6256 = vmatpush.bf16.msra.mxu0 %v3829
        %6257 = vmatpush.bf16.msra.mxu0 %v3825
        %6258 = vmatpush.bf16.msra.mxu0 %v3821
        %6259 = vmatpush.bf16.msra.mxu0 %v3817
        %6260 = vmatpush.bf16.msra.mxu0 %v3813
        %6261 = vmatpush.bf16.msra.mxu0 %v3809
        %6262 = vmatpush.bf16.msra.mxu0 %v3805
        %6263 = vmatmul.bf16.gmra.mxu0 %v1419
        %v6264 = vpop.f32.mrf.mxu0
        %v6265 = vadd.f32 %v6252, %v6264
        %v6266 = vpop.f32.mrf.mxu0
        %6267 = vdwg.mxu0
        %6268 = vmatpush.bf16.msra.mxu0 %v3865
        %6269 = vmatpush.bf16.msra.mxu0 %v3861
        %6270 = vmatpush.bf16.msra.mxu0 %v3857
        %6271 = vmatpush.bf16.msra.mxu0 %v3853
        %6272 = vmatpush.bf16.msra.mxu0 %v3849
        %6273 = vmatpush.bf16.msra.mxu0 %v3845
        %6274 = vmatpush.bf16.msra.mxu0 %v3841
        %6275 = vmatpush.bf16.msra.mxu0 %v3837
        %6276 = vmatmul.bf16.gmra.mxu0 %v1420
        %v6277 = vpop.f32.mrf.mxu0
        %v6278 = vadd.f32 %v6265, %v6277
        %v6279 = vpop.f32.mrf.mxu0
        %6280 = vdwg.mxu0
        %6281 = vmatpush.bf16.msra.mxu0 %v3897
        %6282 = vmatpush.bf16.msra.mxu0 %v3893
        %6283 = vmatpush.bf16.msra.mxu0 %v3889
        %6284 = vmatpush.bf16.msra.mxu0 %v3885
        %6285 = vmatpush.bf16.msra.mxu0 %v3881
        %6286 = vmatpush.bf16.msra.mxu0 %v3877
        %6287 = vmatpush.bf16.msra.mxu0 %v3873
        %6288 = vmatpush.bf16.msra.mxu0 %v3869
        %6289 = vmatmul.bf16.gmra.mxu0 %v1421
        %v6290 = vpop.f32.mrf.mxu0
        %v6291 = vadd.f32 %v6278, %v6290
        %v6292 = vpop.f32.mrf.mxu0
        %6293 = vdwg.mxu0
        %6294 = vmatpush.bf16.msra.mxu0 %v3929
        %6295 = vmatpush.bf16.msra.mxu0 %v3925
        %6296 = vmatpush.bf16.msra.mxu0 %v3921
        %6297 = vmatpush.bf16.msra.mxu0 %v3917
        %6298 = vmatpush.bf16.msra.mxu0 %v3913
        %6299 = vmatpush.bf16.msra.mxu0 %v3909
        %6300 = vmatpush.bf16.msra.mxu0 %v3905
        %6301 = vmatpush.bf16.msra.mxu0 %v3901
        %6302 = vmatmul.bf16.gmra.mxu0 %v1422
        %v6303 = vpop.f32.mrf.mxu0
        %v6304 = vadd.f32 %v6291, %v6303
        %v6305 = vpop.f32.mrf.mxu0
        %6306 = vdwg.mxu0
        %6307 = vmatpush.bf16.msra.mxu0 %v3961
        %6308 = vmatpush.bf16.msra.mxu0 %v3957
        %6309 = vmatpush.bf16.msra.mxu0 %v3953
        %6310 = vmatpush.bf16.msra.mxu0 %v3949
        %6311 = vmatpush.bf16.msra.mxu0 %v3945
        %6312 = vmatpush.bf16.msra.mxu0 %v3941
        %6313 = vmatpush.bf16.msra.mxu0 %v3937
        %6314 = vmatpush.bf16.msra.mxu0 %v3933
        %6315 = vmatmul.bf16.gmra.mxu0 %v1423
        %v6316 = vpop.f32.mrf.mxu0
        %v6317 = vadd.f32 %v6304, %v6316
        %v6318 = vpop.f32.mrf.mxu0
        %6319 = vdwg.mxu0
        %6320 = vmatpush.bf16.msra.mxu0 %v3993
        %6321 = vmatpush.bf16.msra.mxu0 %v3989
        %6322 = vmatpush.bf16.msra.mxu0 %v3985
        %6323 = vmatpush.bf16.msra.mxu0 %v3981
        %6324 = vmatpush.bf16.msra.mxu0 %v3977
        %6325 = vmatpush.bf16.msra.mxu0 %v3973
        %6326 = vmatpush.bf16.msra.mxu0 %v3969
        %6327 = vmatpush.bf16.msra.mxu0 %v3965
        %6328 = vmatmul.bf16.gmra.mxu0 %v1424
        %v6329 = vpop.f32.mrf.mxu0
        %v6330 = vadd.f32 %v6317, %v6329
        %v6331 = vpop.f32.mrf.mxu0
        %6332 = vdwg.mxu0
        %6333 = vmatpush.bf16.msra.mxu0 %v4025
        %6334 = vmatpush.bf16.msra.mxu0 %v4021
        %6335 = vmatpush.bf16.msra.mxu0 %v4017
        %6336 = vmatpush.bf16.msra.mxu0 %v4013
        %6337 = vmatpush.bf16.msra.mxu0 %v4009
        %6338 = vmatpush.bf16.msra.mxu0 %v4005
        %6339 = vmatpush.bf16.msra.mxu0 %v4001
        %6340 = vmatpush.bf16.msra.mxu0 %v3997
        %6341 = vmatmul.bf16.gmra.mxu0 %v1425
        %v6342 = vpop.f32.mrf.mxu0
        %v6343 = vadd.f32 %v6330, %v6342
        %v6344 = vpop.f32.mrf.mxu0
        %6345 = vdwg.mxu0
        %6346 = vmatpush.bf16.msra.mxu0 %v4057
        %6347 = vmatpush.bf16.msra.mxu0 %v4053
        %6348 = vmatpush.bf16.msra.mxu0 %v4049
        %6349 = vmatpush.bf16.msra.mxu0 %v4045
        %6350 = vmatpush.bf16.msra.mxu0 %v4041
        %6351 = vmatpush.bf16.msra.mxu0 %v4037
        %6352 = vmatpush.bf16.msra.mxu0 %v4033
        %6353 = vmatpush.bf16.msra.mxu0 %v4029
        %6354 = vmatmul.bf16.gmra.mxu0 %v1426
        %v6355 = vpop.f32.mrf.mxu0
        %v6356 = vadd.f32 %v6343, %v6355
        %v6357 = vpop.f32.mrf.mxu0
        %6358 = vdwg.mxu0
        %6359 = vmatpush.bf16.msra.mxu0 %v4089
        %6360 = vmatpush.bf16.msra.mxu0 %v4085
        %6361 = vmatpush.bf16.msra.mxu0 %v4081
        %6362 = vmatpush.bf16.msra.mxu0 %v4077
        %6363 = vmatpush.bf16.msra.mxu0 %v4073
        %6364 = vmatpush.bf16.msra.mxu0 %v4069
        %6365 = vmatpush.bf16.msra.mxu0 %v4065
        %6366 = vmatpush.bf16.msra.mxu0 %v4061
        %6367 = vmatmul.bf16.gmra.mxu0 %v1427
        %v6368 = vpop.f32.mrf.mxu0
        %v6369 = vadd.f32 %v6356, %v6368
        %v6370 = vpop.f32.mrf.mxu0
        %6371 = vdwg.mxu0
        %6372 = vmatpush.bf16.msra.mxu0 %v4121
        %6373 = vmatpush.bf16.msra.mxu0 %v4117
        %6374 = vmatpush.bf16.msra.mxu0 %v4113
        %6375 = vmatpush.bf16.msra.mxu0 %v4109
        %6376 = vmatpush.bf16.msra.mxu0 %v4105
        %6377 = vmatpush.bf16.msra.mxu0 %v4101
        %6378 = vmatpush.bf16.msra.mxu0 %v4097
        %6379 = vmatpush.bf16.msra.mxu0 %v4093
        %6380 = vmatmul.bf16.gmra.mxu0 %v1428
        %v6381 = vpop.f32.mrf.mxu0
        %v6382 = vadd.f32 %v6369, %v6381
        %v6383 = vpop.f32.mrf.mxu0
        %6384 = vdwg.mxu0
        %6385 = vmatpush.bf16.msra.mxu0 %v4153
        %6386 = vmatpush.bf16.msra.mxu0 %v4149
        %6387 = vmatpush.bf16.msra.mxu0 %v4145
        %6388 = vmatpush.bf16.msra.mxu0 %v4141
        %6389 = vmatpush.bf16.msra.mxu0 %v4137
        %6390 = vmatpush.bf16.msra.mxu0 %v4133
        %6391 = vmatpush.bf16.msra.mxu0 %v4129
        %6392 = vmatpush.bf16.msra.mxu0 %v4125
        %6393 = vmatmul.bf16.gmra.mxu0 %v1429
        %v6394 = vpop.f32.mrf.mxu0
        %v6395 = vadd.f32 %v6382, %v6394
        %v6396 = vpop.f32.mrf.mxu0
        %6397 = vdwg.mxu0
        %6398 = vmatpush.bf16.msra.mxu0 %v4185
        %6399 = vmatpush.bf16.msra.mxu0 %v4181
        %6400 = vmatpush.bf16.msra.mxu0 %v4177
        %6401 = vmatpush.bf16.msra.mxu0 %v4173
        %6402 = vmatpush.bf16.msra.mxu0 %v4169
        %6403 = vmatpush.bf16.msra.mxu0 %v4165
        %6404 = vmatpush.bf16.msra.mxu0 %v4161
        %6405 = vmatpush.bf16.msra.mxu0 %v4157
        %6406 = vmatmul.bf16.gmra.mxu0 %v1430
        %v6407 = vpop.f32.mrf.mxu0
        %v6408 = vadd.f32 %v6395, %v6407
        %v6409 = vpop.f32.mrf.mxu0
        %6410 = vdwg.mxu0
        %6411 = vmatpush.bf16.msra.mxu0 %v4217
        %6412 = vmatpush.bf16.msra.mxu0 %v4213
        %6413 = vmatpush.bf16.msra.mxu0 %v4209
        %6414 = vmatpush.bf16.msra.mxu0 %v4205
        %6415 = vmatpush.bf16.msra.mxu0 %v4201
        %6416 = vmatpush.bf16.msra.mxu0 %v4197
        %6417 = vmatpush.bf16.msra.mxu0 %v4193
        %6418 = vmatpush.bf16.msra.mxu0 %v4189
        %6419 = vmatmul.bf16.gmra.mxu0 %v1431
        %v6420 = vpop.f32.mrf.mxu0
        %v6421 = vadd.f32 %v6408, %v6420
        %v6422 = vpop.f32.mrf.mxu0
        %6423 = vdwg.mxu0
        %6424 = vmatpush.bf16.msra.mxu0 %v4249
        %6425 = vmatpush.bf16.msra.mxu0 %v4245
        %6426 = vmatpush.bf16.msra.mxu0 %v4241
        %6427 = vmatpush.bf16.msra.mxu0 %v4237
        %6428 = vmatpush.bf16.msra.mxu0 %v4233
        %6429 = vmatpush.bf16.msra.mxu0 %v4229
        %6430 = vmatpush.bf16.msra.mxu0 %v4225
        %6431 = vmatpush.bf16.msra.mxu0 %v4221
        %6432 = vmatmul.bf16.gmra.mxu0 %v1432
        %v6433 = vpop.f32.mrf.mxu0
        %v6434 = vadd.f32 %v6421, %v6433
        %v6435 = vpop.f32.mrf.mxu0
        %6436 = vdwg.mxu0
        %6437 = vmatpush.bf16.msra.mxu0 %v4281
        %6438 = vmatpush.bf16.msra.mxu0 %v4277
        %6439 = vmatpush.bf16.msra.mxu0 %v4273
        %6440 = vmatpush.bf16.msra.mxu0 %v4269
        %6441 = vmatpush.bf16.msra.mxu0 %v4265
        %6442 = vmatpush.bf16.msra.mxu0 %v4261
        %6443 = vmatpush.bf16.msra.mxu0 %v4257
        %6444 = vmatpush.bf16.msra.mxu0 %v4253
        %6445 = vmatmul.bf16.gmra.mxu0 %v1433
        %v6446 = vpop.f32.mrf.mxu0
        %v6447 = vadd.f32 %v6434, %v6446
        %v6448 = vpop.f32.mrf.mxu0
        %6449 = vdwg.mxu0
        %6450 = vmatpush.bf16.msra.mxu0 %v4313
        %6451 = vmatpush.bf16.msra.mxu0 %v4309
        %6452 = vmatpush.bf16.msra.mxu0 %v4305
        %6453 = vmatpush.bf16.msra.mxu0 %v4301
        %6454 = vmatpush.bf16.msra.mxu0 %v4297
        %6455 = vmatpush.bf16.msra.mxu0 %v4293
        %6456 = vmatpush.bf16.msra.mxu0 %v4289
        %6457 = vmatpush.bf16.msra.mxu0 %v4285
        %6458 = vmatmul.bf16.gmra.mxu0 %v1434
        %v6459 = vpop.f32.mrf.mxu0
        %v6460 = vadd.f32 %v6447, %v6459
        %v6461 = vpop.f32.mrf.mxu0
        %6462 = vdwg.mxu0
        %6463 = vmatpush.bf16.msra.mxu0 %v4345
        %6464 = vmatpush.bf16.msra.mxu0 %v4341
        %6465 = vmatpush.bf16.msra.mxu0 %v4337
        %6466 = vmatpush.bf16.msra.mxu0 %v4333
        %6467 = vmatpush.bf16.msra.mxu0 %v4329
        %6468 = vmatpush.bf16.msra.mxu0 %v4325
        %6469 = vmatpush.bf16.msra.mxu0 %v4321
        %6470 = vmatpush.bf16.msra.mxu0 %v4317
        %6471 = vmatmul.bf16.gmra.mxu0 %v1435
        %v6472 = vpop.f32.mrf.mxu0
        %v6473 = vadd.f32 %v6460, %v6472
        %v6474 = vpop.f32.mrf.mxu0
        %6475 = vdwg.mxu0
        %6476 = vmatpush.bf16.msra.mxu0 %v4377
        %6477 = vmatpush.bf16.msra.mxu0 %v4373
        %6478 = vmatpush.bf16.msra.mxu0 %v4369
        %6479 = vmatpush.bf16.msra.mxu0 %v4365
        %6480 = vmatpush.bf16.msra.mxu0 %v4361
        %6481 = vmatpush.bf16.msra.mxu0 %v4357
        %6482 = vmatpush.bf16.msra.mxu0 %v4353
        %6483 = vmatpush.bf16.msra.mxu0 %v4349
        %6484 = vmatmul.bf16.gmra.mxu0 %v1436
        %v6485 = vpop.f32.mrf.mxu0
        %v6486 = vadd.f32 %v6473, %v6485
        %v6487 = vpop.f32.mrf.mxu0
        %6488 = vdwg.mxu0
        %6489 = vmatpush.bf16.msra.mxu0 %v4409
        %6490 = vmatpush.bf16.msra.mxu0 %v4405
        %6491 = vmatpush.bf16.msra.mxu0 %v4401
        %6492 = vmatpush.bf16.msra.mxu0 %v4397
        %6493 = vmatpush.bf16.msra.mxu0 %v4393
        %6494 = vmatpush.bf16.msra.mxu0 %v4389
        %6495 = vmatpush.bf16.msra.mxu0 %v4385
        %6496 = vmatpush.bf16.msra.mxu0 %v4381
        %6497 = vmatmul.bf16.gmra.mxu0 %v1437
        %v6498 = vpop.f32.mrf.mxu0
        %v6499 = vadd.f32 %v6486, %v6498
        %v6500 = vpop.f32.mrf.mxu0
        %6501 = vdwg.mxu0
        %6502 = vmatpush.bf16.msra.mxu0 %v4441
        %6503 = vmatpush.bf16.msra.mxu0 %v4437
        %6504 = vmatpush.bf16.msra.mxu0 %v4433
        %6505 = vmatpush.bf16.msra.mxu0 %v4429
        %6506 = vmatpush.bf16.msra.mxu0 %v4425
        %6507 = vmatpush.bf16.msra.mxu0 %v4421
        %6508 = vmatpush.bf16.msra.mxu0 %v4417
        %6509 = vmatpush.bf16.msra.mxu0 %v4413
        %6510 = vmatmul.bf16.gmra.mxu0 %v1438
        %v6511 = vpop.f32.mrf.mxu0
        %v6512 = vadd.f32 %v6499, %v6511
        %v6513 = vpop.f32.mrf.mxu0
        %6514 = vdwg.mxu0
        %6515 = vmatpush.bf16.msra.mxu0 %v4473
        %6516 = vmatpush.bf16.msra.mxu0 %v4469
        %6517 = vmatpush.bf16.msra.mxu0 %v4465
        %6518 = vmatpush.bf16.msra.mxu0 %v4461
        %6519 = vmatpush.bf16.msra.mxu0 %v4457
        %6520 = vmatpush.bf16.msra.mxu0 %v4453
        %6521 = vmatpush.bf16.msra.mxu0 %v4449
        %6522 = vmatpush.bf16.msra.mxu0 %v4445
        %6523 = vmatmul.bf16.gmra.mxu0 %v1439
        %v6524 = vpop.f32.mrf.mxu0
        %v6525 = vadd.f32 %v6512, %v6524
        %v6526 = vpop.f32.mrf.mxu0
        %6527 = vdwg.mxu0
        %6528 = vmatpush.bf16.msra.mxu0 %v4505
        %6529 = vmatpush.bf16.msra.mxu0 %v4501
        %6530 = vmatpush.bf16.msra.mxu0 %v4497
        %6531 = vmatpush.bf16.msra.mxu0 %v4493
        %6532 = vmatpush.bf16.msra.mxu0 %v4489
        %6533 = vmatpush.bf16.msra.mxu0 %v4485
        %6534 = vmatpush.bf16.msra.mxu0 %v4481
        %6535 = vmatpush.bf16.msra.mxu0 %v4477
        %6536 = vmatmul.bf16.gmra.mxu0 %v1440
        %v6537 = vpop.f32.mrf.mxu0
        %v6538 = vadd.f32 %v6525, %v6537
        %v6539 = vpop.f32.mrf.mxu0
        %6540 = vdwg.mxu0
        %6541 = vmatpush.bf16.msra.mxu0 %v4537
        %6542 = vmatpush.bf16.msra.mxu0 %v4533
        %6543 = vmatpush.bf16.msra.mxu0 %v4529
        %6544 = vmatpush.bf16.msra.mxu0 %v4525
        %6545 = vmatpush.bf16.msra.mxu0 %v4521
        %6546 = vmatpush.bf16.msra.mxu0 %v4517
        %6547 = vmatpush.bf16.msra.mxu0 %v4513
        %6548 = vmatpush.bf16.msra.mxu0 %v4509
        %6549 = vmatmul.bf16.gmra.mxu0 %v1441
        %v6550 = vpop.f32.mrf.mxu0
        %v6551 = vadd.f32 %v6538, %v6550
        %v6552 = vpop.f32.mrf.mxu0
        %6553 = vdwg.mxu0
        %v6554 = vadd.f32 %v594, %v5615
        %v6555 = vadd.f32 %v595, %v5927
        %v6556 = vadd.f32 %v596, %v6239
        %v6557 = vadd.f32 %v597, %v6551
        %6558 = vst [vmem:[#allocation3] sm:$0xff] %v6554
        %6559 = vst [vmem:[#allocation3 + $0x8] sm:$0xff] %v6555
        %6560 = vst [vmem:[#allocation3 + $0x10] sm:$0xff] %v6556
        %6561 = vst [vmem:[#allocation3 + $0x18] sm:$0xff] %v6557
        %p6562 = scmp.eq.s32.totalorder %s27, 1
        // Predicated region
        $region97: #{network_forward.1} parent=55 // pred_check
          %p6563 = pneg %p6562
        $region98: #{network_forward.1} parent=55 // pred_check_branch
          %6565 = sbr.rel (%p6563) target = $region100
        $region99: #{network_forward.1} parent=55 // pred_region
          %v6566 = vld [vmem:[#allocation3] sm:$0xff]
          %v6567 = vld [vmem:[#allocation3 + $0x8] sm:$0xff]
          %v6568 = vld [vmem:[#allocation3 + $0x10] sm:$0xff]
          %v6569 = vld [vmem:[#allocation3 + $0x18] sm:$0xff]
          %v6570 = vld [vmem:[#allocation8] sm:$0xf]
          %v6572 = vperm.slane %v6570, 0
          %v6573 = vperm.slane %v6570, 1
          %v6574 = vperm.slane %v6570, 2
          %v6575 = vperm.slane %v6570, 3
          %v6580 = vadd.f32 %v6566, %v6572
          %v6581 = vadd.f32 %v6567, %v6573
          %v6582 = vadd.f32 %v6568, %v6574
          %v6583 = vadd.f32 %v6569, %v6575
          %v6584 = vmax.f32 %v6580, 0.0
          %v6585 = vmax.f32 %v6581, 0.0
          %v6586 = vmax.f32 %v6582, 0.0
          %v6587 = vmax.f32 %v6583, 0.0
          %v6588 = vpack.c.bf16 %v6584, %v6584
          %v6589 = vpack.c.bf16 %v6585, %v6585
          %v6590 = vpack.c.bf16 %v6586, %v6586
          %v6591 = vpack.c.bf16 %v6587, %v6587
          %v6592 = vld [vmem:[#allocation9] sm:$0xf]
          %v6593 = vld [vmem:[#allocation9 + $0x4] sm:$0xf]
          %v6594 = vld [vmem:[#allocation9 + $0x8] sm:$0xf]
          %v6595 = vld [vmem:[#allocation9 + $0xc] sm:$0xf]
          %v6596 = vld [vmem:[#allocation9 + $0x10] sm:$0xf]
          %v6597 = vld [vmem:[#allocation9 + $0x14] sm:$0xf]
          %v6598 = vld [vmem:[#allocation9 + $0x18] sm:$0xf]
          %v6599 = vld [vmem:[#allocation9 + $0x1c] sm:$0xf]
          %v6600 = vld [vmem:[#allocation9 + $0x20] sm:$0xf]
          %v6601 = vld [vmem:[#allocation9 + $0x24] sm:$0xf]
          %v6602 = vld [vmem:[#allocation9 + $0x28] sm:$0xf]
          %v6603 = vld [vmem:[#allocation9 + $0x2c] sm:$0xf]
          %v6604 = vld [vmem:[#allocation9 + $0x30] sm:$0xf]
          %v6605 = vld [vmem:[#allocation9 + $0x34] sm:$0xf]
          %v6606 = vld [vmem:[#allocation9 + $0x38] sm:$0xf]
          %v6607 = vld [vmem:[#allocation9 + $0x3c] sm:$0xf]
          %v6608 = vld [vmem:[#allocation9 + $0x40] sm:$0xf]
          %v6609 = vld [vmem:[#allocation9 + $0x44] sm:$0xf]
          %v6610 = vld [vmem:[#allocation9 + $0x48] sm:$0xf]
          %v6611 = vld [vmem:[#allocation9 + $0x4c] sm:$0xf]
          %v6612 = vld [vmem:[#allocation9 + $0x50] sm:$0xf]
          %v6613 = vld [vmem:[#allocation9 + $0x54] sm:$0xf]
          %v6614 = vld [vmem:[#allocation9 + $0x58] sm:$0xf]
          %v6615 = vld [vmem:[#allocation9 + $0x5c] sm:$0xf]
          %v6616 = vld [vmem:[#allocation9 + $0x60] sm:$0xf]
          %v6617 = vld [vmem:[#allocation9 + $0x64] sm:$0xf]
          %v6618 = vld [vmem:[#allocation9 + $0x68] sm:$0xf]
          %v6619 = vld [vmem:[#allocation9 + $0x6c] sm:$0xf]
          %v6620 = vld [vmem:[#allocation9 + $0x70] sm:$0xf]
          %v6621 = vld [vmem:[#allocation9 + $0x74] sm:$0xf]
          %v6622 = vld [vmem:[#allocation9 + $0x78] sm:$0xf]
          %v6623 = vld [vmem:[#allocation9 + $0x7c] sm:$0xf]
          %v6624 = vld [vmem:[#allocation9 + $0x80] sm:$0xf]
          %v6625 = vld [vmem:[#allocation9 + $0x84] sm:$0xf]
          %v6626 = vld [vmem:[#allocation9 + $0x88] sm:$0xf]
          %v6627 = vld [vmem:[#allocation9 + $0x8c] sm:$0xf]
          %v6628 = vld [vmem:[#allocation9 + $0x90] sm:$0xf]
          %v6629 = vld [vmem:[#allocation9 + $0x94] sm:$0xf]
          %v6630 = vld [vmem:[#allocation9 + $0x98] sm:$0xf]
          %v6631 = vld [vmem:[#allocation9 + $0x9c] sm:$0xf]
          %v6632 = vld [vmem:[#allocation9 + $0xa0] sm:$0xf]
          %v6633 = vld [vmem:[#allocation9 + $0xa4] sm:$0xf]
          %v6634 = vld [vmem:[#allocation9 + $0xa8] sm:$0xf]
          %v6635 = vld [vmem:[#allocation9 + $0xac] sm:$0xf]
          %v6636 = vld [vmem:[#allocation9 + $0xb0] sm:$0xf]
          %v6637 = vld [vmem:[#allocation9 + $0xb4] sm:$0xf]
          %v6638 = vld [vmem:[#allocation9 + $0xb8] sm:$0xf]
          %v6639 = vld [vmem:[#allocation9 + $0xbc] sm:$0xf]
          %v6640 = vld [vmem:[#allocation9 + $0xc0] sm:$0xf]
          %v6641 = vld [vmem:[#allocation9 + $0xc4] sm:$0xf]
          %v6642 = vld [vmem:[#allocation9 + $0xc8] sm:$0xf]
          %v6643 = vld [vmem:[#allocation9 + $0xcc] sm:$0xf]
          %v6644 = vld [vmem:[#allocation9 + $0xd0] sm:$0xf]
          %v6645 = vld [vmem:[#allocation9 + $0xd4] sm:$0xf]
          %v6646 = vld [vmem:[#allocation9 + $0xd8] sm:$0xf]
          %v6647 = vld [vmem:[#allocation9 + $0xdc] sm:$0xf]
          %v6648 = vld [vmem:[#allocation9 + $0xe0] sm:$0xf]
          %v6649 = vld [vmem:[#allocation9 + $0xe4] sm:$0xf]
          %v6650 = vld [vmem:[#allocation9 + $0xe8] sm:$0xf]
          %v6651 = vld [vmem:[#allocation9 + $0xec] sm:$0xf]
          %v6652 = vld [vmem:[#allocation9 + $0xf0] sm:$0xf]
          %v6653 = vld [vmem:[#allocation9 + $0xf4] sm:$0xf]
          %v6654 = vld [vmem:[#allocation9 + $0xf8] sm:$0xf]
          %v6655 = vld [vmem:[#allocation9 + $0xfc] sm:$0xf]
          %v6656 = vld [vmem:[#allocation11] sm:$0x1]
          %v6658 = vperm.slane %v6656, 0
          %v6724 = vunpack.c.l.b16 %v6592
          %v6725 = vunpack.c.l.b16 %v6593
          %v6726 = vunpack.c.l.b16 %v6594
          %v6727 = vunpack.c.l.b16 %v6595
          %v6728 = vunpack.c.l.b16 %v6596
          %v6729 = vunpack.c.l.b16 %v6597
          %v6730 = vunpack.c.l.b16 %v6598
          %v6731 = vunpack.c.l.b16 %v6599
          %v6732 = vunpack.c.l.b16 %v6600
          %v6733 = vunpack.c.l.b16 %v6601
          %v6734 = vunpack.c.l.b16 %v6602
          %v6735 = vunpack.c.l.b16 %v6603
          %v6736 = vunpack.c.l.b16 %v6604
          %v6737 = vunpack.c.l.b16 %v6605
          %v6738 = vunpack.c.l.b16 %v6606
          %v6739 = vunpack.c.l.b16 %v6607
          %v6740 = vunpack.c.l.b16 %v6608
          %v6741 = vunpack.c.l.b16 %v6609
          %v6742 = vunpack.c.l.b16 %v6610
          %v6743 = vunpack.c.l.b16 %v6611
          %v6744 = vunpack.c.l.b16 %v6612
          %v6745 = vunpack.c.l.b16 %v6613
          %v6746 = vunpack.c.l.b16 %v6614
          %v6747 = vunpack.c.l.b16 %v6615
          %v6748 = vunpack.c.l.b16 %v6616
          %v6749 = vunpack.c.l.b16 %v6617
          %v6750 = vunpack.c.l.b16 %v6618
          %v6751 = vunpack.c.l.b16 %v6619
          %v6752 = vunpack.c.l.b16 %v6620
          %v6753 = vunpack.c.l.b16 %v6621
          %v6754 = vunpack.c.l.b16 %v6622
          %v6755 = vunpack.c.l.b16 %v6623
          %v6756 = vunpack.c.l.b16 %v6624
          %v6757 = vunpack.c.l.b16 %v6625
          %v6758 = vunpack.c.l.b16 %v6626
          %v6759 = vunpack.c.l.b16 %v6627
          %v6760 = vunpack.c.l.b16 %v6628
          %v6761 = vunpack.c.l.b16 %v6629
          %v6762 = vunpack.c.l.b16 %v6630
          %v6763 = vunpack.c.l.b16 %v6631
          %v6764 = vunpack.c.l.b16 %v6632
          %v6765 = vunpack.c.l.b16 %v6633
          %v6766 = vunpack.c.l.b16 %v6634
          %v6767 = vunpack.c.l.b16 %v6635
          %v6768 = vunpack.c.l.b16 %v6636
          %v6769 = vunpack.c.l.b16 %v6637
          %v6770 = vunpack.c.l.b16 %v6638
          %v6771 = vunpack.c.l.b16 %v6639
          %v6772 = vunpack.c.l.b16 %v6640
          %v6773 = vunpack.c.l.b16 %v6641
          %v6774 = vunpack.c.l.b16 %v6642
          %v6775 = vunpack.c.l.b16 %v6643
          %v6776 = vunpack.c.l.b16 %v6644
          %v6777 = vunpack.c.l.b16 %v6645
          %v6778 = vunpack.c.l.b16 %v6646
          %v6779 = vunpack.c.l.b16 %v6647
          %v6780 = vunpack.c.l.b16 %v6648
          %v6781 = vunpack.c.l.b16 %v6649
          %v6782 = vunpack.c.l.b16 %v6650
          %v6783 = vunpack.c.l.b16 %v6651
          %v6784 = vunpack.c.l.b16 %v6652
          %v6785 = vunpack.c.l.b16 %v6653
          %v6786 = vunpack.c.l.b16 %v6654
          %v6787 = vunpack.c.l.b16 %v6655
          %v6788 = vpack.c.b16 %v6725, %v6724
          %v6789 = vpack.c.b16 %v6727, %v6726
          %v6790 = vpack.c.b16 %v6729, %v6728
          %v6791 = vpack.c.b16 %v6731, %v6730
          %v6792 = vpack.c.b16 %v6733, %v6732
          %v6793 = vpack.c.b16 %v6735, %v6734
          %v6794 = vpack.c.b16 %v6737, %v6736
          %v6795 = vpack.c.b16 %v6739, %v6738
          %v6796 = vpack.c.b16 %v6741, %v6740
          %v6797 = vpack.c.b16 %v6743, %v6742
          %v6798 = vpack.c.b16 %v6745, %v6744
          %v6799 = vpack.c.b16 %v6747, %v6746
          %v6800 = vpack.c.b16 %v6749, %v6748
          %v6801 = vpack.c.b16 %v6751, %v6750
          %v6802 = vpack.c.b16 %v6753, %v6752
          %v6803 = vpack.c.b16 %v6755, %v6754
          %v6804 = vpack.c.b16 %v6757, %v6756
          %v6805 = vpack.c.b16 %v6759, %v6758
          %v6806 = vpack.c.b16 %v6761, %v6760
          %v6807 = vpack.c.b16 %v6763, %v6762
          %v6808 = vpack.c.b16 %v6765, %v6764
          %v6809 = vpack.c.b16 %v6767, %v6766
          %v6810 = vpack.c.b16 %v6769, %v6768
          %v6811 = vpack.c.b16 %v6771, %v6770
          %v6812 = vpack.c.b16 %v6773, %v6772
          %v6813 = vpack.c.b16 %v6775, %v6774
          %v6814 = vpack.c.b16 %v6777, %v6776
          %v6815 = vpack.c.b16 %v6779, %v6778
          %v6816 = vpack.c.b16 %v6781, %v6780
          %v6817 = vpack.c.b16 %v6783, %v6782
          %v6818 = vpack.c.b16 %v6785, %v6784
          %v6819 = vpack.c.b16 %v6787, %v6786
          %6852 = vmatpush.bf16.msra.mxu0 %v6795
          %6853 = vmatpush.bf16.msra.mxu0 %v6794
          %6854 = vmatpush.bf16.msra.mxu0 %v6793
          %6855 = vmatpush.bf16.msra.mxu0 %v6792
          %6856 = vmatpush.bf16.msra.mxu0 %v6791
          %6857 = vmatpush.bf16.msra.mxu0 %v6790
          %6858 = vmatpush.bf16.msra.mxu0 %v6789
          %6859 = vmatpush.bf16.msra.mxu0 %v6788
          %6860 = vmatmul.bf16.gmra.mxu0 %v6588
          %v6861 = vpop.f32.mrf.mxu0
          %v6862 = vadd.f32 %v6658, %v6861
          %v6863 = vpop.f32.mrf.mxu0
          %6864 = vdwg.mxu0
          %6865 = vmatpush.bf16.msra.mxu0 %v6803
          %6866 = vmatpush.bf16.msra.mxu0 %v6802
          %6867 = vmatpush.bf16.msra.mxu0 %v6801
          %6868 = vmatpush.bf16.msra.mxu0 %v6800
          %6869 = vmatpush.bf16.msra.mxu0 %v6799
          %6870 = vmatpush.bf16.msra.mxu0 %v6798
          %6871 = vmatpush.bf16.msra.mxu0 %v6797
          %6872 = vmatpush.bf16.msra.mxu0 %v6796
          %6873 = vmatmul.bf16.gmra.mxu0 %v6589
          %v6874 = vpop.f32.mrf.mxu0
          %v6875 = vadd.f32 %v6862, %v6874
          %v6876 = vpop.f32.mrf.mxu0
          %6877 = vdwg.mxu0
          %6878 = vmatpush.bf16.msra.mxu0 %v6811
          %6879 = vmatpush.bf16.msra.mxu0 %v6810
          %6880 = vmatpush.bf16.msra.mxu0 %v6809
          %6881 = vmatpush.bf16.msra.mxu0 %v6808
          %6882 = vmatpush.bf16.msra.mxu0 %v6807
          %6883 = vmatpush.bf16.msra.mxu0 %v6806
          %6884 = vmatpush.bf16.msra.mxu0 %v6805
          %6885 = vmatpush.bf16.msra.mxu0 %v6804
          %6886 = vmatmul.bf16.gmra.mxu0 %v6590
          %v6887 = vpop.f32.mrf.mxu0
          %v6888 = vadd.f32 %v6875, %v6887
          %v6889 = vpop.f32.mrf.mxu0
          %6890 = vdwg.mxu0
          %6891 = vmatpush.bf16.msra.mxu0 %v6819
          %6892 = vmatpush.bf16.msra.mxu0 %v6818
          %6893 = vmatpush.bf16.msra.mxu0 %v6817
          %6894 = vmatpush.bf16.msra.mxu0 %v6816
          %6895 = vmatpush.bf16.msra.mxu0 %v6815
          %6896 = vmatpush.bf16.msra.mxu0 %v6814
          %6897 = vmatpush.bf16.msra.mxu0 %v6813
          %6898 = vmatpush.bf16.msra.mxu0 %v6812
          %6899 = vmatmul.bf16.gmra.mxu0 %v6591
          %v6900 = vpop.f32.mrf.mxu0
          %v6901 = vadd.f32 %v6888, %v6900
          %v6902 = vpop.f32.mrf.mxu0
          %6903 = vdwg.mxu0
          %v6904 = vmax.f32 %v6901, 0.0
          %v6905 = vpack.c.bf16 %v6904, %v6904
          %v6906 = vld [vmem:[#allocation12] sm:$0xf]
          %v6907 = vld [vmem:[#allocation12 + $0x4] sm:$0xf]
          %v6908 = vld [vmem:[#allocation12 + $0x8] sm:$0xf]
          %v6909 = vld [vmem:[#allocation12 + $0xc] sm:$0xf]
          %v6910 = vld [vmem:[#allocation12 + $0x10] sm:$0xf]
          %v6911 = vld [vmem:[#allocation12 + $0x14] sm:$0xf]
          %v6912 = vld [vmem:[#allocation12 + $0x18] sm:$0xf]
          %v6913 = vld [vmem:[#allocation12 + $0x1c] sm:$0xf]
          %v6914 = vld [vmem:[#allocation12 + $0x20] sm:$0xf]
          %v6915 = vld [vmem:[#allocation12 + $0x24] sm:$0xf]
          %v6916 = vld [vmem:[#allocation12 + $0x28] sm:$0xf]
          %v6917 = vld [vmem:[#allocation12 + $0x2c] sm:$0xf]
          %v6918 = vld [vmem:[#allocation12 + $0x30] sm:$0xf]
          %v6919 = vld [vmem:[#allocation12 + $0x34] sm:$0xf]
          %v6920 = vld [vmem:[#allocation12 + $0x38] sm:$0xf]
          %v6921 = vld [vmem:[#allocation12 + $0x3c] sm:$0xf]
          %v6922 = vld [vmem:[#allocation14] sm:$0x1]
          %v6924 = vperm.slane %v6922, 0
          %v6942 = vunpack.c.l.b16 %v6906
          %v6943 = vunpack.c.l.b16 %v6907
          %v6944 = vunpack.c.l.b16 %v6908
          %v6945 = vunpack.c.l.b16 %v6909
          %v6946 = vunpack.c.l.b16 %v6910
          %v6947 = vunpack.c.l.b16 %v6911
          %v6948 = vunpack.c.l.b16 %v6912
          %v6949 = vunpack.c.l.b16 %v6913
          %v6950 = vunpack.c.l.b16 %v6914
          %v6951 = vunpack.c.l.b16 %v6915
          %v6952 = vunpack.c.l.b16 %v6916
          %v6953 = vunpack.c.l.b16 %v6917
          %v6954 = vunpack.c.l.b16 %v6918
          %v6955 = vunpack.c.l.b16 %v6919
          %v6956 = vunpack.c.l.b16 %v6920
          %v6957 = vunpack.c.l.b16 %v6921
          %v6958 = vpack.c.b16 %v6943, %v6942
          %v6959 = vpack.c.b16 %v6945, %v6944
          %v6960 = vpack.c.b16 %v6947, %v6946
          %v6961 = vpack.c.b16 %v6949, %v6948
          %v6962 = vpack.c.b16 %v6951, %v6950
          %v6963 = vpack.c.b16 %v6953, %v6952
          %v6964 = vpack.c.b16 %v6955, %v6954
          %v6965 = vpack.c.b16 %v6957, %v6956
          %6974 = vmatpush.bf16.msra.mxu0 %v6965
          %6975 = vmatpush.bf16.msra.mxu0 %v6964
          %6976 = vmatpush.bf16.msra.mxu0 %v6963
          %6977 = vmatpush.bf16.msra.mxu0 %v6962
          %6978 = vmatpush.bf16.msra.mxu0 %v6961
          %6979 = vmatpush.bf16.msra.mxu0 %v6960
          %6980 = vmatpush.bf16.msra.mxu0 %v6959
          %6981 = vmatpush.bf16.msra.mxu0 %v6958
          %6982 = vmatmul.bf16.gmra.mxu0 %v6905
          %v6983 = vpop.f32.mrf.mxu0
          %v6984 = vadd.f32 %v6924, %v6983
          %v6985 = vpop.f32.mrf.mxu0
          %6986 = vdwg.mxu0
          %v6987 = vmax.f32 %v6984, 0.0
          %v6988 = vpack.c.bf16 %v6987, %v6987
          %v6989 = vld [vmem:[#allocation15] sm:$0xf]
          %v6990 = vld [vmem:[#allocation15 + $0x4] sm:$0xf]
          %v6991 = vld [vmem:[#allocation15 + $0x8] sm:$0xf]
          %v6992 = vld [vmem:[#allocation15 + $0xc] sm:$0xf]
          %v6993 = vld [vmem:[#allocation15 + $0x10] sm:$0xf]
          %v6994 = vld [vmem:[#allocation15 + $0x14] sm:$0xf]
          %v6995 = vld [vmem:[#allocation15 + $0x18] sm:$0xf]
          %v6996 = vld [vmem:[#allocation15 + $0x1c] sm:$0xf]
          %v6997 = vld [vmem:[#allocation15 + $0x20] sm:$0xf]
          %v6998 = vld [vmem:[#allocation15 + $0x24] sm:$0xf]
          %v6999 = vld [vmem:[#allocation15 + $0x28] sm:$0xf]
          %v7000 = vld [vmem:[#allocation15 + $0x2c] sm:$0xf]
          %v7001 = vld [vmem:[#allocation15 + $0x30] sm:$0xf]
          %v7002 = vld [vmem:[#allocation15 + $0x34] sm:$0xf]
          %v7003 = vld [vmem:[#allocation15 + $0x38] sm:$0xf]
          %v7004 = vld [vmem:[#allocation15 + $0x3c] sm:$0xf]
          %v7005 = vld [vmem:[#allocation17] sm:$0x1]
          %v7007 = vperm.slane %v7005, 0
          %v7025 = vunpack.c.l.b16 %v6989
          %v7026 = vunpack.c.l.b16 %v6990
          %v7027 = vunpack.c.l.b16 %v6991
          %v7028 = vunpack.c.l.b16 %v6992
          %v7029 = vunpack.c.l.b16 %v6993
          %v7030 = vunpack.c.l.b16 %v6994
          %v7031 = vunpack.c.l.b16 %v6995
          %v7032 = vunpack.c.l.b16 %v6996
          %v7033 = vunpack.c.l.b16 %v6997
          %v7034 = vunpack.c.l.b16 %v6998
          %v7035 = vunpack.c.l.b16 %v6999
          %v7036 = vunpack.c.l.b16 %v7000
          %v7037 = vunpack.c.l.b16 %v7001
          %v7038 = vunpack.c.l.b16 %v7002
          %v7039 = vunpack.c.l.b16 %v7003
          %v7040 = vunpack.c.l.b16 %v7004
          %v7041 = vpack.c.b16 %v7026, %v7025
          %v7042 = vpack.c.b16 %v7028, %v7027
          %v7043 = vpack.c.b16 %v7030, %v7029
          %v7044 = vpack.c.b16 %v7032, %v7031
          %v7045 = vpack.c.b16 %v7034, %v7033
          %v7046 = vpack.c.b16 %v7036, %v7035
          %v7047 = vpack.c.b16 %v7038, %v7037
          %v7048 = vpack.c.b16 %v7040, %v7039
          %7057 = vmatpush.bf16.msra.mxu0 %v7048
          %7058 = vmatpush.bf16.msra.mxu0 %v7047
          %7059 = vmatpush.bf16.msra.mxu0 %v7046
          %7060 = vmatpush.bf16.msra.mxu0 %v7045
          %7061 = vmatpush.bf16.msra.mxu0 %v7044
          %7062 = vmatpush.bf16.msra.mxu0 %v7043
          %7063 = vmatpush.bf16.msra.mxu0 %v7042
          %7064 = vmatpush.bf16.msra.mxu0 %v7041
          %7065 = vmatmul.bf16.gmra.mxu0 %v6988
          %v7066 = vpop.f32.mrf.mxu0
          %v7067 = vadd.f32 %v7007, %v7066
          %v7068 = vpop.f32.mrf.mxu0
          %7069 = vdwg.mxu0
          %7070 = vst [vmem:[%s9] sm:$0xff] %v7067
        $region100: #{network_forward.1} parent=55 // pred_fallthru
          _
        // Predicated region
        $region101: #{network_forward.1} parent=55 // pred_check
          %p7071 = pneg %p234
        $region102: #{network_forward.1} parent=55 // pred_check_branch
          %7073 = sbr.rel (%p7071) target = $region104
        $region103: #{network_forward.1} parent=55 // pred_region
          _
        $region104: #{network_forward.1} parent=55 // pred_fallthru
          _
        // Predicated region
        $region105: #{network_forward.1} parent=55 // pred_check
          %p7074 = pneg %p234
        $region106: #{network_forward.1} parent=55 // pred_check_branch
          %7076 = sbr.rel (%p7074) target = $region108
        $region107: #{network_forward.1} parent=55 // pred_region
          _
        $region108: #{network_forward.1} parent=55 // pred_fallthru
          _
      $region56: #{network_forward.1} parent=5 // pred_fallthru
        _
      %p7077 = scmp.le.s32.totalorder 2, %s22
      // Predicated region
      $region109: #{network_forward.1} parent=5 // pred_check
        %p7078 = pneg %p7077
      $region110: #{network_forward.1} parent=5 // pred_check_branch
        %7080 = sbr.rel (%p7078) target = $region112
      $region111: #{network_forward.1} parent=5 // pred_region
        %s7081 = ssub.s32 %s22, 2
      $region112: #{network_forward.1} parent=5 // pred_fallthru
        _
    $region6: #{network_forward.1} parent=1 // loop_footer
      %s26 = sadd.s32 1, %s22
    $region7: #{network_forward.1} parent=1 // loop_footer_branch
      %21 = sbr.rel target = $region3
    $region8: #{network_forward.1} parent=1 // loop_exit
      _
    %7082 = vsyncpa [#allocation5], 1
    %s7083 = scalar_lea.sflag [#allocation5], 1
    %7084 = vsyncpa %s7083, 1
    %7085 = vsyncpa [#allocation7], 1
    %s7086 = scalar_lea.sflag [#allocation7], 1
    %7087 = vsyncpa %s7086, 1
    %7088 = vsyncpa [#allocation10], 1
    %7089 = vsyncpa [#allocation13], 1
    %7090 = vsyncpa [#allocation16], 1

</llo_original>
